<compile_context>
chip_gen: v6e
topology: v6e:2x2x1
jax: 0.10.0
libtpu: 0.0.40
codegen_flags: <defaults>
</compile_context>

<pallas_src>
import functools

import numpy as np
import jax
import jax.numpy as jnp
from jax.experimental import pallas as pl
from jax.experimental.pallas import tpu as pltpu

BN_EPS = 1e-5

# Order of the ConvBnRelu layers inside the stacked BN gamma/beta arrays.
_BN_TOP, _BN_LAT1, _BN_LAT2, _BN_LAT3, _BN_SM1, _BN_SM2, _BN_SM3 = range(7)


# ----------------------------------------------------------------------------
# Fused Pallas kernel
# ----------------------------------------------------------------------------
def _fpn_head_kernel(
    # activations, batch merged on lanes: (Cin, N*H*W)
    c2_ref, c3_ref, c4_ref, c5_ref,
    # 1x1 conv weights (Cout, Cin)
    w_top_ref, w_lat1_ref, w_lat2_ref, w_lat3_ref,
    # 3x3 conv weights, tap-fused: (Cout, 9*Cin), column = (kh*3+kw)*Cin + ci
    w_sm1_ref, w_sm2_ref, w_sm3_ref, w_out_ref,
    # conv_out bias (Cout, 1)
    b_out_ref,
    # stacked BN affine params (7, Cout, 1)
    gamma_ref, beta_ref,
    # block-diagonal (over batch) transposed bilinear operators (N*HiWi, N*HoWo)
    u54_ref, u43_ref, u32_ref, u42_ref, u52_ref,
    # per-tap validity masks (9, N*H*W) for each conv level
    m4_ref, m3_ref, m2_ref,
    # output (Cout, N*H2*W2)
    o_ref,
    # scratch: shared zero-bordered im2col row buffer + fused-tap stack
    ext_ref, z_ref,
    *, lpad, spatial):
    (h2, w2), (h3, w3), (h4, w4), (h5, w5) = spatial
    f32 = jnp.float32

    # Zero the shared im2col buffer once.  Border lanes must read as (finite)
    # zeros — out-of-interior tap reads are killed by the masks but 0*NaN would
    # poison the result; every interior region is overwritten before its use.
    ext_ref[...] = jnp.zeros(ext_ref.shape, f32)

    def bn_relu(y, idx):
        # BatchNorm2d with batch stats (training mode, biased var) + ReLU.
        # One-pass statistics: var = E[y^2] - mean^2 (f32, clamped at 0).
        inv_cnt = 1.0 / y.shape[1]                         # lanes = N*H*W
        s1 = jnp.sum(y, axis=1, keepdims=True)
        s2 = jnp.sum(y * y, axis=1, keepdims=True)
        mean = s1 * inv_cnt
        var = jnp.maximum(s2 * inv_cnt - mean * mean, 0.0)
        scale = gamma_ref[idx] * jax.lax.rsqrt(var + BN_EPS)   # (Co, 1)
        shift = beta_ref[idx] - mean * scale
        return jnp.maximum(y * scale + shift, 0.0)

    def conv1x1_bn_relu(w_ref, x_ref, idx):
        # one GEMM for the whole batch: (Co, Ci) @ (Ci, N*HW)
        return bn_relu(jnp.dot(w_ref[...], x_ref[...],
                               preferred_element_type=f32), idx)

    def upsample(x, u_ref):
        # bilinear align_corners=True: (C, N*HiWi) @ blockdiag_N(opT)
        return jnp.dot(x, u_ref[...], preferred_element_type=f32)

    def conv3x3(branches, w_ref, mask_ref, w):
        # 3x3 / stride 1 / pad 1 conv, batch-merged and tap-fused.
        # `branches` is a list of channel groups (realizes conv_out's concat),
        # each (Cg, N*HW).  The 9 lane-shifted, mask-gated copies are stacked
        # as 9*Cin sublane rows of z_ref, then contracted in ONE MXU GEMM
        # (Cout, 9*Cin) x (9*Cin, N*HW).
        nhw = branches[0].shape[1]
        rows = 0
        for x in branches:                     # stack groups row-wise (concat)
            cg = x.shape[0]
            ext_ref[rows:rows + cg, lpad:lpad + nhw] = x
            rows += cg
        masks = mask_ref[...]                              # (9, nhw), hoisted
        for t in range(9):
            dh, dw = t // 3 - 1, t % 3 - 1
            s = dh * w + dw                                # static lane shift
            sl = ext_ref[0:rows, lpad + s:lpad + s + nhw]
            if t != 4:                         # center tap needs no masking
                sl = sl * masks[t:t + 1, :]
            z_ref[t * rows:(t + 1) * rows, 0:nhw] = sl
        return jnp.dot(w_ref[...], z_ref[0:9 * rows, 0:nhw],
                       preferred_element_type=f32)

    # ---- FPN top-down pathway (all batch-merged: (C, N*HW)) -----------------
    p5 = conv1x1_bn_relu(w_top_ref, c5_ref, _BN_TOP)                 # toplayer
    c4l = conv1x1_bn_relu(w_lat1_ref, c4_ref, _BN_LAT1)              # latlayer1
    p4 = upsample(p5, u54_ref) + c4l                                 # _upsample_add
    p4 = bn_relu(conv3x3([p4], w_sm1_ref, m4_ref, w4), _BN_SM1)      # smooth1

    c3l = conv1x1_bn_relu(w_lat2_ref, c3_ref, _BN_LAT2)              # latlayer2
    p3 = upsample(p4, u43_ref) + c3l
    p3 = bn_relu(conv3x3([p3], w_sm2_ref, m3_ref, w3), _BN_SM2)      # smooth2

    c2l = conv1x1_bn_relu(w_lat3_ref, c2_ref, _BN_LAT3)              # latlayer3
    p2 = upsample(p3, u32_ref) + c2l
    p2 = bn_relu(conv3x3([p2], w_sm3_ref, m2_ref, w2), _BN_SM3)      # smooth3

    # ---- final fuse: pure upsamples + (concat -> conv_out + bias) -----------
    p3u = upsample(p3, u32_ref)
    p4u = upsample(p4, u42_ref)
    p5u = upsample(p5, u52_ref)
    out = conv3x3([p2, p3u, p4u, p5u], w_out_ref, m2_ref, w2)
    o_ref[...] = out + b_out_ref[...]


# ----------------------------------------------------------------------------
# Host-side helpers (static precomputation + layout plumbing only)
# ----------------------------------------------------------------------------
def _full_spec(shape):
    zeros = (0,) * len(shape)
    return pl.BlockSpec(shape, lambda i, _z=zeros: _z)


def _interp_matrix(out_size, in_size):
    """1-D bilinear resize taps, PyTorch align_corners=True."""
    m = np.zeros((out_size, in_size), np.float32)
    for o in range(out_size):
        src = 0.0 if out_size == 1 else o * (in_size - 1) / (out_size - 1)
        i0 = min(int(src), in_size - 1)
        i1 = min(i0 + 1, in_size - 1)
        f = src - i0
        m[o, i0] += 1.0 - f
        m[o, i1] += f
    return m


def _upsample_op_bd(ho, wo, hi, wi, n):
    """Block-diagonal (over batch) transposed bilinear operator.

    Shape (N*HiWi, N*HoWo): out = x_(C, N*HiWi) @ op.
    """
    op_t = np.kron(_interp_matrix(ho, hi), _interp_matrix(wo, wi)).T
    return jnp.asarray(np.kron(np.eye(n, dtype=np.float32),
                               op_t.astype(np.float32)))


def _tap_masks(h, w, n):
    """(9, N*h*w) validity masks for the 3x3 taps.

    Row t = (dh+1)*3 + (dw+1); 1.0 where source pixel (r+dh, c+dw) is inside
    the image.  Also kills cross-sample bleed of the lane-shifted reads (the
    batch dimension is concatenated along lanes).
    """
    hw = h * w
    r = np.arange(hw) // w
    c = np.arange(hw) % w
    rows = []
    for dh in (-1, 0, 1):
        for dw in (-1, 0, 1):
            rows.append(((r + dh >= 0) & (r + dh < h)
                         & (c + dw >= 0) & (c + dw < w)).astype(np.float32))
    return jnp.asarray(np.tile(np.stack(rows), (1, n)))


def fpn_head_forward(params, x_nchw):
    """FPN_Head forward. x_nchw = (c2, c3, c4, c5) in NCHW; returns NCHW."""
    c2, c3, c4, c5 = [jnp.asarray(t, jnp.float32) for t in x_nchw]
    n = c2.shape[0]
    (h2, w2), (h3, w3), (h4, w4), (h5, w5) = [
        tuple(t.shape[2:]) for t in (c2, c3, c4, c5)]
    inner = params["w_top"].shape[0]
    # f32 sublane tile is 8: keeps the row-offset scratch writes aligned.
    assert inner % 8 == 0, "inner_channels must be a multiple of 8"

    def to_cn(t):  # (N, C, H, W) -> (C, N*H*W): layout plumbing outside kernel.
        b, c, h, w = t.shape
        return jnp.transpose(t, (1, 0, 2, 3)).reshape(c, b * h * w)

    # left/right zero borders of the shared im2col buffer: >= w+1, lane-aligned.
    lpad = ((max(w2, w3, w4) + 1 + 127) // 128) * 128
    ext_len = lpad + n * h2 * w2 + lpad

    args = [
        to_cn(c2), to_cn(c3), to_cn(c4), to_cn(c5),
        params["w_top"], params["w_lat1"], params["w_lat2"], params["w_lat3"],
        params["w_sm1"], params["w_sm2"], params["w_sm3"], params["w_out"],
        params["b_out"], params["gamma"], params["beta"],
        _upsample_op_bd(h4, w4, h5, w5, n),     # p5 -> p4 size
        _upsample_op_bd(h3, w3, h4, w4, n),     # p4 -> p3 size
        _upsample_op_bd(h2, w2, h3, w3, n),     # p3 -> p2 size
        _upsample_op_bd(h2, w2, h4, w4, n),     # p4 -> p2 size
        _upsample_op_bd(h2, w2, h5, w5, n),     # p5 -> p2 size
        _tap_masks(h4, w4, n), _tap_masks(h3, w3, n), _tap_masks(h2, w2, n),
    ]

    out = pl.pallas_call(
        functools.partial(
            _fpn_head_kernel, lpad=lpad,
            spatial=((h2, w2), (h3, w3), (h4, w4), (h5, w5))),
        grid=(1,),
        in_specs=[_full_spec(a.shape) for a in args],
        out_specs=_full_spec((inner, n * h2 * w2)),
        out_shape=jax.ShapeDtypeStruct((inner, n * h2 * w2), jnp.float32),
        scratch_shapes=[
            # shared zero-bordered im2col row buffer (all levels, all branches)
            pltpu.VMEM((4 * inner, ext_len), jnp.float32),
            # fused-tap stack: 9 * (4*inner) rows x N*H2*W2 lanes
            pltpu.VMEM((9 * 4 * inner, n * h2 * w2), jnp.float32),
        ],
    )(*args)
    return jnp.transpose(out.reshape(inner, n, h2, w2), (1, 0, 2, 3))


# ----------------------------------------------------------------------------
# Parameters (deterministic synthetic init mirroring the PyTorch __init__)
# ----------------------------------------------------------------------------
def init_fpn_head(key, in_channels, inner):
    keys = jax.random.split(key, 9)

    def conv_w(k, cout, cin, ksize):
        fan_in = cin * ksize * ksize
        w = jax.random.normal(k, (cout, cin, ksize, ksize), jnp.float32)
        return w * float(np.sqrt(2.0 / fan_in))          # kaiming_normal_

    def mat1x1(w):        # (Co, Ci, 1, 1) -> (Co, Ci)
        return w.reshape(w.shape[0], w.shape[1])

    def mat3x3(w):        # (Co, Ci, 3, 3) -> (Co, 9*Ci), col = (kh*3+kw)*Ci+ci
        co, ci = w.shape[0], w.shape[1]
        return jnp.transpose(w, (0, 2, 3, 1)).reshape(co, 9 * ci)

    w_out = conv_w(keys[7], inner, inner * 4, 3)
    fan_in_out = inner * 4 * 9
    b_out = (jax.random.uniform(keys[8], (inner, 1), jnp.float32, -1.0, 1.0)
             * float(1.0 / np.sqrt(fan_in_out)))
    # NOTE: conv biases of the ConvBnRelu blocks are omitted on purpose — BN's
    # batch-mean subtraction cancels them exactly, so they cannot affect the
    # forward output.  conv_out has no BN, so its bias is kept.
    return dict(
        w_top=mat1x1(conv_w(keys[0], inner, in_channels[-1], 1)),
        w_lat1=mat1x1(conv_w(keys[1], inner, in_channels[-2], 1)),
        w_lat2=mat1x1(conv_w(keys[2], inner, in_channels[-3], 1)),
        w_lat3=mat1x1(conv_w(keys[3], inner, in_channels[-4], 1)),
        w_sm1=mat3x3(conv_w(keys[4], inner, inner, 3)),
        w_sm2=mat3x3(conv_w(keys[5], inner, inner, 3)),
        w_sm3=mat3x3(conv_w(keys[6], inner, inner, 3)),
        w_out=mat3x3(w_out),
        b_out=b_out,
        gamma=jnp.ones((7, inner, 1), jnp.float32),       # BN weight = 1.0
        beta=jnp.full((7, inner, 1), 1e-4, jnp.float32),  # BN bias   = 0.0001
    )


# ----------------------------------------------------------------------------
if __name__ == "__main__":
    key = jax.random.PRNGKey(0)
    k_p, k2, k3, k4, k5 = jax.random.split(key, 5)

    # Small FPN pyramid: in_channels = [4, 8, 16, 32], inner_channels = 8.
    in_channels = [4, 8, 16, 32]
    inner_channels = 8
    batch = 2

    c2 = jax.random.normal(k2, (batch, in_channels[0], 16, 16), jnp.float32)
    c3 = jax.random.normal(k3, (batch, in_channels[1], 8, 8), jnp.float32)
    c4 = jax.random.normal(k4, (batch, in_channels[2], 4, 4), jnp.float32)
    c5 = jax.random.normal(k5, (batch, in_channels[3], 2, 2), jnp.float32)

    params = init_fpn_head(k_p, in_channels, inner_channels)

    out = fpn_head_forward(params, (c2, c3, c4, c5))
    out = jax.block_until_ready(out)
    assert out.shape == (batch, inner_channels, 16, 16), out.shape
    assert bool(jnp.isfinite(out).all())
    print("KERNEL_OK")
</pallas_src>

<mosaic_0001>
module attributes {stable_mosaic.version = 11 : i64} {
  func.func @_fpn_head_kernel(%arg0: i32, %arg1: memref<4x512xf32, #tpu.memory_space<vmem>>, %arg2: memref<8x128xf32, #tpu.memory_space<vmem>>, %arg3: memref<16x32xf32, #tpu.memory_space<vmem>>, %arg4: memref<32x8xf32, #tpu.memory_space<vmem>>, %arg5: memref<8x32xf32, #tpu.memory_space<vmem>>, %arg6: memref<8x16xf32, #tpu.memory_space<vmem>>, %arg7: memref<8x8xf32, #tpu.memory_space<vmem>>, %arg8: memref<8x4xf32, #tpu.memory_space<vmem>>, %arg9: memref<8x72xf32, #tpu.memory_space<vmem>>, %arg10: memref<8x72xf32, #tpu.memory_space<vmem>>, %arg11: memref<8x72xf32, #tpu.memory_space<vmem>>, %arg12: memref<8x288xf32, #tpu.memory_space<vmem>>, %arg13: memref<8x1xf32, #tpu.memory_space<vmem>>, %arg14: memref<7x8x1xf32, #tpu.memory_space<vmem>>, %arg15: memref<7x8x1xf32, #tpu.memory_space<vmem>>, %arg16: memref<8x32xf32, #tpu.memory_space<vmem>>, %arg17: memref<32x128xf32, #tpu.memory_space<vmem>>, %arg18: memref<128x512xf32, #tpu.memory_space<vmem>>, %arg19: memref<32x512xf32, #tpu.memory_space<vmem>>, %arg20: memref<8x512xf32, #tpu.memory_space<vmem>>, %arg21: memref<9x32xf32, #tpu.memory_space<vmem>>, %arg22: memref<9x128xf32, #tpu.memory_space<vmem>>, %arg23: memref<9x512xf32, #tpu.memory_space<vmem>>, %arg24: memref<8x512xf32, #tpu.memory_space<vmem>>, %arg25: memref<32x768xf32, #tpu.memory_space<vmem>>, %arg26: memref<288x512xf32, #tpu.memory_space<vmem>>) attributes {dimension_semantics = [#tpu.dimension_semantics<arbitrary>], iteration_bounds = array<i64: 1>, scalar_prefetch = 0 : i64, scratch_operands = 2 : i64, tpu.core_type = #tpu.core_type<tc>, window_params = [{pipeline_mode = #tpu.pipeline_mode<synchronous>, transform_indices = @transform_0, window_bounds = array<i64: 4, 512>}, {pipeline_mode = #tpu.pipeline_mode<synchronous>, transform_indices = @transform_1, window_bounds = array<i64: 8, 128>}, {pipeline_mode = #tpu.pipeline_mode<synchronous>, transform_indices = @transform_2, window_bounds = array<i64: 16, 32>}, {pipeline_mode = #tpu.pipeline_mode<synchronous>, transform_indices = @transform_3, window_bounds = array<i64: 32, 8>}, {pipeline_mode = #tpu.pipeline_mode<synchronous>, transform_indices = @transform_4, window_bounds = array<i64: 8, 32>}, {pipeline_mode = #tpu.pipeline_mode<synchronous>, transform_indices = @transform_5, window_bounds = array<i64: 8, 16>}, {pipeline_mode = #tpu.pipeline_mode<synchronous>, transform_indices = @transform_6, window_bounds = array<i64: 8, 8>}, {pipeline_mode = #tpu.pipeline_mode<synchronous>, transform_indices = @transform_7, window_bounds = array<i64: 8, 4>}, {pipeline_mode = #tpu.pipeline_mode<synchronous>, transform_indices = @transform_8, window_bounds = array<i64: 8, 72>}, {pipeline_mode = #tpu.pipeline_mode<synchronous>, transform_indices = @transform_9, window_bounds = array<i64: 8, 72>}, {pipeline_mode = #tpu.pipeline_mode<synchronous>, transform_indices = @transform_10, window_bounds = array<i64: 8, 72>}, {pipeline_mode = #tpu.pipeline_mode<synchronous>, transform_indices = @transform_11, window_bounds = array<i64: 8, 288>}, {pipeline_mode = #tpu.pipeline_mode<synchronous>, transform_indices = @transform_12, window_bounds = array<i64: 8, 1>}, {pipeline_mode = #tpu.pipeline_mode<synchronous>, transform_indices = @transform_13, window_bounds = array<i64: 7, 8, 1>}, {pipeline_mode = #tpu.pipeline_mode<synchronous>, transform_indices = @transform_14, window_bounds = array<i64: 7, 8, 1>}, {pipeline_mode = #tpu.pipeline_mode<synchronous>, transform_indices = @transform_15, window_bounds = array<i64: 8, 32>}, {pipeline_mode = #tpu.pipeline_mode<synchronous>, transform_indices = @transform_16, window_bounds = array<i64: 32, 128>}, {pipeline_mode = #tpu.pipeline_mode<synchronous>, transform_indices = @transform_17, window_bounds = array<i64: 128, 512>}, {pipeline_mode = #tpu.pipeline_mode<synchronous>, transform_indices = @transform_18, window_bounds = array<i64: 32, 512>}, {pipeline_mode = #tpu.pipeline_mode<synchronous>, transform_indices = @transform_19, window_bounds = array<i64: 8, 512>}, {pipeline_mode = #tpu.pipeline_mode<synchronous>, transform_indices = @transform_20, window_bounds = array<i64: 9, 32>}, {pipeline_mode = #tpu.pipeline_mode<synchronous>, transform_indices = @transform_21, window_bounds = array<i64: 9, 128>}, {pipeline_mode = #tpu.pipeline_mode<synchronous>, transform_indices = @transform_22, window_bounds = array<i64: 9, 512>}, {pipeline_mode = #tpu.pipeline_mode<synchronous>, transform_indices = @transform_23, window_bounds = array<i64: 8, 512>}]} {
    %cst = arith.constant 0.000000e+00 : f32
    %0 = vector.broadcast %cst : f32 to vector<32x768xf32>
    %c0 = arith.constant 0 : index
    %c0_0 = arith.constant 0 : index
    %1 = vector.load %arg25[%c0, %c0_0] : memref<32x768xf32, #tpu.memory_space<vmem>>, vector<32x768xf32>
    tpu.vector_store %arg25[%c0, %c0_0], %0 {strides = array<i32>} : memref<32x768xf32, #tpu.memory_space<vmem>>, vector<32x768xf32>,
    %c0_1 = arith.constant 0 : index
    %c0_2 = arith.constant 0 : index
    %2 = vector.load %arg5[%c0_1, %c0_2] : memref<8x32xf32, #tpu.memory_space<vmem>>, vector<8x32xf32>
    %c0_3 = arith.constant 0 : index
    %c0_4 = arith.constant 0 : index
    %3 = vector.load %arg4[%c0_3, %c0_4] : memref<32x8xf32, #tpu.memory_space<vmem>>, vector<32x8xf32>
    %cst_5 = arith.constant dense<0.000000e+00> : vector<8x8xf32>
    %4 = tpu.matmul %2, %3, %cst_5 {dimension_numbers = #tpu.dot_dimension_numbers<[1], [0], [0], [1], [0, 0, 1, 1], [], []>} : vector<8x32xf32>, vector<32x8xf32>, vector<8x8xf32> -> vector<8x8xf32>
    %cst_6 = arith.constant dense<0.000000e+00> : vector<8xf32>
    %5 = vector.multi_reduction <add>, %4, %cst_6 [1] : vector<8x8xf32> to vector<8xf32>
    %6 = vector.shape_cast %5 : vector<8xf32> to vector<8x1xf32>
    %7 = arith.mulf %4, %4 : vector<8x8xf32>
    %cst_7 = arith.constant dense<0.000000e+00> : vector<8xf32>
    %8 = vector.multi_reduction <add>, %7, %cst_7 [1] : vector<8x8xf32> to vector<8xf32>
    %9 = vector.shape_cast %8 : vector<8xf32> to vector<8x1xf32>
    %cst_8 = arith.constant 1.250000e-01 : f32
    %10 = vector.broadcast %cst_8 : f32 to vector<8x1xf32>
    %11 = arith.mulf %6, %10 : vector<8x1xf32>
    %cst_9 = arith.constant 1.250000e-01 : f32
    %12 = vector.broadcast %cst_9 : f32 to vector<8x1xf32>
    %13 = arith.mulf %9, %12 : vector<8x1xf32>
    %14 = arith.mulf %11, %11 : vector<8x1xf32>
    %15 = arith.subf %13, %14 : vector<8x1xf32>
    %cst_10 = arith.constant 0.000000e+00 : f32
    %16 = vector.broadcast %cst_10 : f32 to vector<8x1xf32>
    %17 = arith.maximumf %15, %16 : vector<8x1xf32>
    %c0_11 = arith.constant 0 : index
    %c0_12 = arith.constant 0 : index
    %c0_13 = arith.constant 0 : index
    %18 = vector.load %arg14[%c0_11, %c0_12, %c0_13] : memref<7x8x1xf32, #tpu.memory_space<vmem>>, vector<1x8x1xf32>
    %19 = vector.shape_cast %18 : vector<1x8x1xf32> to vector<8x1xf32>
    %cst_14 = arith.constant 9.99999974E-6 : f32
    %20 = vector.broadcast %cst_14 : f32 to vector<8x1xf32>
    %21 = arith.addf %17, %20 : vector<8x1xf32>
    %22 = math.rsqrt %21 : vector<8x1xf32>
    %23 = arith.mulf %19, %22 : vector<8x1xf32>
    %c0_15 = arith.constant 0 : index
    %c0_16 = arith.constant 0 : index
    %c0_17 = arith.constant 0 : index
    %24 = vector.load %arg15[%c0_15, %c0_16, %c0_17] : memref<7x8x1xf32, #tpu.memory_space<vmem>>, vector<1x8x1xf32>
    %25 = vector.shape_cast %24 : vector<1x8x1xf32> to vector<8x1xf32>
    %26 = arith.mulf %11, %23 : vector<8x1xf32>
    %27 = arith.subf %25, %26 : vector<8x1xf32>
    %28 = vector.broadcast %23 : vector<8x1xf32> to vector<8x8xf32>
    %29 = arith.mulf %4, %28 : vector<8x8xf32>
    %30 = vector.broadcast %27 : vector<8x1xf32> to vector<8x8xf32>
    %31 = arith.addf %29, %30 : vector<8x8xf32>
    %cst_18 = arith.constant 0.000000e+00 : f32
    %32 = vector.broadcast %cst_18 : f32 to vector<8x8xf32>
    %33 = arith.maximumf %31, %32 : vector<8x8xf32>
    %c0_19 = arith.constant 0 : index
    %c0_20 = arith.constant 0 : index
    %34 = vector.load %arg6[%c0_19, %c0_20] : memref<8x16xf32, #tpu.memory_space<vmem>>, vector<8x16xf32>
    %c0_21 = arith.constant 0 : index
    %c0_22 = arith.constant 0 : index
    %35 = vector.load %arg3[%c0_21, %c0_22] : memref<16x32xf32, #tpu.memory_space<vmem>>, vector<16x32xf32>
    %cst_23 = arith.constant dense<0.000000e+00> : vector<8x32xf32>
    %36 = tpu.matmul %34, %35, %cst_23 {dimension_numbers = #tpu.dot_dimension_numbers<[1], [0], [0], [1], [0, 0, 1, 1], [], []>} : vector<8x16xf32>, vector<16x32xf32>, vector<8x32xf32> -> vector<8x32xf32>
    %cst_24 = arith.constant dense<0.000000e+00> : vector<8xf32>
    %37 = vector.multi_reduction <add>, %36, %cst_24 [1] : vector<8x32xf32> to vector<8xf32>
    %38 = vector.shape_cast %37 : vector<8xf32> to vector<8x1xf32>
    %39 = arith.mulf %36, %36 : vector<8x32xf32>
    %cst_25 = arith.constant dense<0.000000e+00> : vector<8xf32>
    %40 = vector.multi_reduction <add>, %39, %cst_25 [1] : vector<8x32xf32> to vector<8xf32>
    %41 = vector.shape_cast %40 : vector<8xf32> to vector<8x1xf32>
    %cst_26 = arith.constant 3.125000e-02 : f32
    %42 = vector.broadcast %cst_26 : f32 to vector<8x1xf32>
    %43 = arith.mulf %38, %42 : vector<8x1xf32>
    %cst_27 = arith.constant 3.125000e-02 : f32
    %44 = vector.broadcast %cst_27 : f32 to vector<8x1xf32>
    %45 = arith.mulf %41, %44 : vector<8x1xf32>
    %46 = arith.mulf %43, %43 : vector<8x1xf32>
    %47 = arith.subf %45, %46 : vector<8x1xf32>
    %cst_28 = arith.constant 0.000000e+00 : f32
    %48 = vector.broadcast %cst_28 : f32 to vector<8x1xf32>
    %49 = arith.maximumf %47, %48 : vector<8x1xf32>
    %c1 = arith.constant 1 : index
    %c0_29 = arith.constant 0 : index
    %c0_30 = arith.constant 0 : index
    %50 = vector.load %arg14[%c1, %c0_29, %c0_30] : memref<7x8x1xf32, #tpu.memory_space<vmem>>, vector<1x8x1xf32>
    %51 = vector.shape_cast %50 : vector<1x8x1xf32> to vector<8x1xf32>
    %cst_31 = arith.constant 9.99999974E-6 : f32
    %52 = vector.broadcast %cst_31 : f32 to vector<8x1xf32>
    %53 = arith.addf %49, %52 : vector<8x1xf32>
    %54 = math.rsqrt %53 : vector<8x1xf32>
    %55 = arith.mulf %51, %54 : vector<8x1xf32>
    %c1_32 = arith.constant 1 : index
    %c0_33 = arith.constant 0 : index
    %c0_34 = arith.constant 0 : index
    %56 = vector.load %arg15[%c1_32, %c0_33, %c0_34] : memref<7x8x1xf32, #tpu.memory_space<vmem>>, vector<1x8x1xf32>
    %57 = vector.shape_cast %56 : vector<1x8x1xf32> to vector<8x1xf32>
    %58 = arith.mulf %43, %55 : vector<8x1xf32>
    %59 = arith.subf %57, %58 : vector<8x1xf32>
    %60 = vector.broadcast %55 : vector<8x1xf32> to vector<8x32xf32>
    %61 = arith.mulf %36, %60 : vector<8x32xf32>
    %62 = vector.broadcast %59 : vector<8x1xf32> to vector<8x32xf32>
    %63 = arith.addf %61, %62 : vector<8x32xf32>
    %cst_35 = arith.constant 0.000000e+00 : f32
    %64 = vector.broadcast %cst_35 : f32 to vector<8x32xf32>
    %65 = arith.maximumf %63, %64 : vector<8x32xf32>
    %c0_36 = arith.constant 0 : index
    %c0_37 = arith.constant 0 : index
    %66 = vector.load %arg16[%c0_36, %c0_37] : memref<8x32xf32, #tpu.memory_space<vmem>>, vector<8x32xf32>
    %cst_38 = arith.constant dense<0.000000e+00> : vector<8x32xf32>
    %67 = tpu.matmul %33, %66, %cst_38 {dimension_numbers = #tpu.dot_dimension_numbers<[1], [0], [0], [1], [0, 0, 1, 1], [], []>} : vector<8x8xf32>, vector<8x32xf32>, vector<8x32xf32> -> vector<8x32xf32>
    %68 = arith.addf %67, %65 : vector<8x32xf32>
    %c0_39 = arith.constant 0 : index
    %c128 = arith.constant 128 : index
    %69 = vector.load %arg25[%c0_39, %c128] : memref<32x768xf32, #tpu.memory_space<vmem>>, vector<8x32xf32>
    tpu.vector_store %arg25[%c0_39, %c128], %68 {strides = array<i32>} : memref<32x768xf32, #tpu.memory_space<vmem>>, vector<8x32xf32>,
    %c0_40 = arith.constant 0 : index
    %c0_41 = arith.constant 0 : index
    %70 = vector.load %arg21[%c0_40, %c0_41] : memref<9x32xf32, #tpu.memory_space<vmem>>, vector<9x32xf32>
    %c0_42 = arith.constant 0 : index
    %c123 = arith.constant 123 : index
    %71 = vector.load %arg25[%c0_42, %c123] : memref<32x768xf32, #tpu.memory_space<vmem>>, vector<8x32xf32>
    %72 = vector.extract_strided_slice %70 {offsets = [0, 0], sizes = [1, 32], strides = [1, 1]} : vector<9x32xf32> to vector<1x32xf32>
    %73 = vector.broadcast %72 : vector<1x32xf32> to vector<8x32xf32>
    %74 = arith.mulf %71, %73 : vector<8x32xf32>
    %c0_43 = arith.constant 0 : index
    %c0_44 = arith.constant 0 : index
    %75 = vector.load %arg26[%c0_43, %c0_44] : memref<288x512xf32, #tpu.memory_space<vmem>>, vector<8x32xf32>
    tpu.vector_store %arg26[%c0_43, %c0_44], %74 {strides = array<i32>} : memref<288x512xf32, #tpu.memory_space<vmem>>, vector<8x32xf32>,
    %c0_45 = arith.constant 0 : index
    %c124 = arith.constant 124 : index
    %76 = vector.load %arg25[%c0_45, %c124] : memref<32x768xf32, #tpu.memory_space<vmem>>, vector<8x32xf32>
    %77 = vector.extract_strided_slice %70 {offsets = [1, 0], sizes = [1, 32], strides = [1, 1]} : vector<9x32xf32> to vector<1x32xf32>
    %78 = vector.broadcast %77 : vector<1x32xf32> to vector<8x32xf32>
    %79 = arith.mulf %76, %78 : vector<8x32xf32>
    %c8 = arith.constant 8 : index
    %c0_46 = arith.constant 0 : index
    %80 = vector.load %arg26[%c8, %c0_46] : memref<288x512xf32, #tpu.memory_space<vmem>>, vector<8x32xf32>
    tpu.vector_store %arg26[%c8, %c0_46], %79 {strides = array<i32>} : memref<288x512xf32, #tpu.memory_space<vmem>>, vector<8x32xf32>,
    %c0_47 = arith.constant 0 : index
    %c125 = arith.constant 125 : index
    %81 = vector.load %arg25[%c0_47, %c125] : memref<32x768xf32, #tpu.memory_space<vmem>>, vector<8x32xf32>
    %82 = vector.extract_strided_slice %70 {offsets = [2, 0], sizes = [1, 32], strides = [1, 1]} : vector<9x32xf32> to vector<1x32xf32>
    %83 = vector.broadcast %82 : vector<1x32xf32> to vector<8x32xf32>
    %84 = arith.mulf %81, %83 : vector<8x32xf32>
    %c16 = arith.constant 16 : index
    %c0_48 = arith.constant 0 : index
    %85 = vector.load %arg26[%c16, %c0_48] : memref<288x512xf32, #tpu.memory_space<vmem>>, vector<8x32xf32>
    tpu.vector_store %arg26[%c16, %c0_48], %84 {strides = array<i32>} : memref<288x512xf32, #tpu.memory_space<vmem>>, vector<8x32xf32>,
    %c0_49 = arith.constant 0 : index
    %c127 = arith.constant 127 : index
    %86 = vector.load %arg25[%c0_49, %c127] : memref<32x768xf32, #tpu.memory_space<vmem>>, vector<8x32xf32>
    %87 = vector.extract_strided_slice %70 {offsets = [3, 0], sizes = [1, 32], strides = [1, 1]} : vector<9x32xf32> to vector<1x32xf32>
    %88 = vector.broadcast %87 : vector<1x32xf32> to vector<8x32xf32>
    %89 = arith.mulf %86, %88 : vector<8x32xf32>
    %c24 = arith.constant 24 : index
    %c0_50 = arith.constant 0 : index
    %90 = vector.load %arg26[%c24, %c0_50] : memref<288x512xf32, #tpu.memory_space<vmem>>, vector<8x32xf32>
    tpu.vector_store %arg26[%c24, %c0_50], %89 {strides = array<i32>} : memref<288x512xf32, #tpu.memory_space<vmem>>, vector<8x32xf32>,
    %c0_51 = arith.constant 0 : index
    %c128_52 = arith.constant 128 : index
    %91 = vector.load %arg25[%c0_51, %c128_52] : memref<32x768xf32, #tpu.memory_space<vmem>>, vector<8x32xf32>
    %c32 = arith.constant 32 : index
    %c0_53 = arith.constant 0 : index
    %92 = vector.load %arg26[%c32, %c0_53] : memref<288x512xf32, #tpu.memory_space<vmem>>, vector<8x32xf32>
    tpu.vector_store %arg26[%c32, %c0_53], %91 {strides = array<i32>} : memref<288x512xf32, #tpu.memory_space<vmem>>, vector<8x32xf32>,
    %c0_54 = arith.constant 0 : index
    %c129 = arith.constant 129 : index
    %93 = vector.load %arg25[%c0_54, %c129] : memref<32x768xf32, #tpu.memory_space<vmem>>, vector<8x32xf32>
    %94 = vector.extract_strided_slice %70 {offsets = [5, 0], sizes = [1, 32], strides = [1, 1]} : vector<9x32xf32> to vector<1x32xf32>
    %95 = vector.broadcast %94 : vector<1x32xf32> to vector<8x32xf32>
    %96 = arith.mulf %93, %95 : vector<8x32xf32>
    %c40 = arith.constant 40 : index
    %c0_55 = arith.constant 0 : index
    %97 = vector.load %arg26[%c40, %c0_55] : memref<288x512xf32, #tpu.memory_space<vmem>>, vector<8x32xf32>
    tpu.vector_store %arg26[%c40, %c0_55], %96 {strides = array<i32>} : memref<288x512xf32, #tpu.memory_space<vmem>>, vector<8x32xf32>,
    %c0_56 = arith.constant 0 : index
    %c131 = arith.constant 131 : index
    %98 = vector.load %arg25[%c0_56, %c131] : memref<32x768xf32, #tpu.memory_space<vmem>>, vector<8x32xf32>
    %99 = vector.extract_strided_slice %70 {offsets = [6, 0], sizes = [1, 32], strides = [1, 1]} : vector<9x32xf32> to vector<1x32xf32>
    %100 = vector.broadcast %99 : vector<1x32xf32> to vector<8x32xf32>
    %101 = arith.mulf %98, %100 : vector<8x32xf32>
    %c48 = arith.constant 48 : index
    %c0_57 = arith.constant 0 : index
    %102 = vector.load %arg26[%c48, %c0_57] : memref<288x512xf32, #tpu.memory_space<vmem>>, vector<8x32xf32>
    tpu.vector_store %arg26[%c48, %c0_57], %101 {strides = array<i32>} : memref<288x512xf32, #tpu.memory_space<vmem>>, vector<8x32xf32>,
    %c0_58 = arith.constant 0 : index
    %c132 = arith.constant 132 : index
    %103 = vector.load %arg25[%c0_58, %c132] : memref<32x768xf32, #tpu.memory_space<vmem>>, vector<8x32xf32>
    %104 = vector.extract_strided_slice %70 {offsets = [7, 0], sizes = [1, 32], strides = [1, 1]} : vector<9x32xf32> to vector<1x32xf32>
    %105 = vector.broadcast %104 : vector<1x32xf32> to vector<8x32xf32>
    %106 = arith.mulf %103, %105 : vector<8x32xf32>
    %c56 = arith.constant 56 : index
    %c0_59 = arith.constant 0 : index
    %107 = vector.load %arg26[%c56, %c0_59] : memref<288x512xf32, #tpu.memory_space<vmem>>, vector<8x32xf32>
    tpu.vector_store %arg26[%c56, %c0_59], %106 {strides = array<i32>} : memref<288x512xf32, #tpu.memory_space<vmem>>, vector<8x32xf32>,
    %c0_60 = arith.constant 0 : index
    %c133 = arith.constant 133 : index
    %108 = vector.load %arg25[%c0_60, %c133] : memref<32x768xf32, #tpu.memory_space<vmem>>, vector<8x32xf32>
    %109 = vector.extract_strided_slice %70 {offsets = [8, 0], sizes = [1, 32], strides = [1, 1]} : vector<9x32xf32> to vector<1x32xf32>
    %110 = vector.broadcast %109 : vector<1x32xf32> to vector<8x32xf32>
    %111 = arith.mulf %108, %110 : vector<8x32xf32>
    %c64 = arith.constant 64 : index
    %c0_61 = arith.constant 0 : index
    %112 = vector.load %arg26[%c64, %c0_61] : memref<288x512xf32, #tpu.memory_space<vmem>>, vector<8x32xf32>
    tpu.vector_store %arg26[%c64, %c0_61], %111 {strides = array<i32>} : memref<288x512xf32, #tpu.memory_space<vmem>>, vector<8x32xf32>,
    %c0_62 = arith.constant 0 : index
    %c0_63 = arith.constant 0 : index
    %113 = vector.load %arg9[%c0_62, %c0_63] : memref<8x72xf32, #tpu.memory_space<vmem>>, vector<8x72xf32>
    %c0_64 = arith.constant 0 : index
    %c0_65 = arith.constant 0 : index
    %114 = vector.load %arg26[%c0_64, %c0_65] : memref<288x512xf32, #tpu.memory_space<vmem>>, vector<72x32xf32>
    %cst_66 = arith.constant dense<0.000000e+00> : vector<8x32xf32>
    %115 = tpu.matmul %113, %114, %cst_66 {dimension_numbers = #tpu.dot_dimension_numbers<[1], [0], [0], [1], [0, 0, 1, 1], [], []>} : vector<8x72xf32>, vector<72x32xf32>, vector<8x32xf32> -> vector<8x32xf32>
    %cst_67 = arith.constant dense<0.000000e+00> : vector<8xf32>
    %116 = vector.multi_reduction <add>, %115, %cst_67 [1] : vector<8x32xf32> to vector<8xf32>
    %117 = vector.shape_cast %116 : vector<8xf32> to vector<8x1xf32>
    %118 = arith.mulf %115, %115 : vector<8x32xf32>
    %cst_68 = arith.constant dense<0.000000e+00> : vector<8xf32>
    %119 = vector.multi_reduction <add>, %118, %cst_68 [1] : vector<8x32xf32> to vector<8xf32>
    %120 = vector.shape_cast %119 : vector<8xf32> to vector<8x1xf32>
    %cst_69 = arith.constant 3.125000e-02 : f32
    %121 = vector.broadcast %cst_69 : f32 to vector<8x1xf32>
    %122 = arith.mulf %117, %121 : vector<8x1xf32>
    %cst_70 = arith.constant 3.125000e-02 : f32
    %123 = vector.broadcast %cst_70 : f32 to vector<8x1xf32>
    %124 = arith.mulf %120, %123 : vector<8x1xf32>
    %125 = arith.mulf %122, %122 : vector<8x1xf32>
    %126 = arith.subf %124, %125 : vector<8x1xf32>
    %cst_71 = arith.constant 0.000000e+00 : f32
    %127 = vector.broadcast %cst_71 : f32 to vector<8x1xf32>
    %128 = arith.maximumf %126, %127 : vector<8x1xf32>
    %c4 = arith.constant 4 : index
    %c0_72 = arith.constant 0 : index
    %c0_73 = arith.constant 0 : index
    %129 = vector.load %arg14[%c4, %c0_72, %c0_73] : memref<7x8x1xf32, #tpu.memory_space<vmem>>, vector<1x8x1xf32>
    %130 = vector.shape_cast %129 : vector<1x8x1xf32> to vector<8x1xf32>
    %cst_74 = arith.constant 9.99999974E-6 : f32
    %131 = vector.broadcast %cst_74 : f32 to vector<8x1xf32>
    %132 = arith.addf %128, %131 : vector<8x1xf32>
    %133 = math.rsqrt %132 : vector<8x1xf32>
    %134 = arith.mulf %130, %133 : vector<8x1xf32>
    %c4_75 = arith.constant 4 : index
    %c0_76 = arith.constant 0 : index
    %c0_77 = arith.constant 0 : index
    %135 = vector.load %arg15[%c4_75, %c0_76, %c0_77] : memref<7x8x1xf32, #tpu.memory_space<vmem>>, vector<1x8x1xf32>
    %136 = vector.shape_cast %135 : vector<1x8x1xf32> to vector<8x1xf32>
    %137 = arith.mulf %122, %134 : vector<8x1xf32>
    %138 = arith.subf %136, %137 : vector<8x1xf32>
    %139 = vector.broadcast %134 : vector<8x1xf32> to vector<8x32xf32>
    %140 = arith.mulf %115, %139 : vector<8x32xf32>
    %141 = vector.broadcast %138 : vector<8x1xf32> to vector<8x32xf32>
    %142 = arith.addf %140, %141 : vector<8x32xf32>
    %cst_78 = arith.constant 0.000000e+00 : f32
    %143 = vector.broadcast %cst_78 : f32 to vector<8x32xf32>
    %144 = arith.maximumf %142, %143 : vector<8x32xf32>
    %c0_79 = arith.constant 0 : index
    %c0_80 = arith.constant 0 : index
    %145 = vector.load %arg7[%c0_79, %c0_80] : memref<8x8xf32, #tpu.memory_space<vmem>>, vector<8x8xf32>
    %c0_81 = arith.constant 0 : index
    %c0_82 = arith.constant 0 : index
    %146 = vector.load %arg2[%c0_81, %c0_82] : memref<8x128xf32, #tpu.memory_space<vmem>>, vector<8x128xf32>
    %cst_83 = arith.constant dense<0.000000e+00> : vector<8x128xf32>
    %147 = tpu.matmul %145, %146, %cst_83 {dimension_numbers = #tpu.dot_dimension_numbers<[1], [0], [0], [1], [0, 0, 1, 1], [], []>} : vector<8x8xf32>, vector<8x128xf32>, vector<8x128xf32> -> vector<8x128xf32>
    %cst_84 = arith.constant dense<0.000000e+00> : vector<8xf32>
    %148 = vector.multi_reduction <add>, %147, %cst_84 [1] : vector<8x128xf32> to vector<8xf32>
    %149 = vector.shape_cast %148 : vector<8xf32> to vector<8x1xf32>
    %150 = arith.mulf %147, %147 : vector<8x128xf32>
    %cst_85 = arith.constant dense<0.000000e+00> : vector<8xf32>
    %151 = vector.multi_reduction <add>, %150, %cst_85 [1] : vector<8x128xf32> to vector<8xf32>
    %152 = vector.shape_cast %151 : vector<8xf32> to vector<8x1xf32>
    %cst_86 = arith.constant 7.812500e-03 : f32
    %153 = vector.broadcast %cst_86 : f32 to vector<8x1xf32>
    %154 = arith.mulf %149, %153 : vector<8x1xf32>
    %cst_87 = arith.constant 7.812500e-03 : f32
    %155 = vector.broadcast %cst_87 : f32 to vector<8x1xf32>
    %156 = arith.mulf %152, %155 : vector<8x1xf32>
    %157 = arith.mulf %154, %154 : vector<8x1xf32>
    %158 = arith.subf %156, %157 : vector<8x1xf32>
    %cst_88 = arith.constant 0.000000e+00 : f32
    %159 = vector.broadcast %cst_88 : f32 to vector<8x1xf32>
    %160 = arith.maximumf %158, %159 : vector<8x1xf32>
    %c2 = arith.constant 2 : index
    %c0_89 = arith.constant 0 : index
    %c0_90 = arith.constant 0 : index
    %161 = vector.load %arg14[%c2, %c0_89, %c0_90] : memref<7x8x1xf32, #tpu.memory_space<vmem>>, vector<1x8x1xf32>
    %162 = vector.shape_cast %161 : vector<1x8x1xf32> to vector<8x1xf32>
    %cst_91 = arith.constant 9.99999974E-6 : f32
    %163 = vector.broadcast %cst_91 : f32 to vector<8x1xf32>
    %164 = arith.addf %160, %163 : vector<8x1xf32>
    %165 = math.rsqrt %164 : vector<8x1xf32>
    %166 = arith.mulf %162, %165 : vector<8x1xf32>
    %c2_92 = arith.constant 2 : index
    %c0_93 = arith.constant 0 : index
    %c0_94 = arith.constant 0 : index
    %167 = vector.load %arg15[%c2_92, %c0_93, %c0_94] : memref<7x8x1xf32, #tpu.memory_space<vmem>>, vector<1x8x1xf32>
    %168 = vector.shape_cast %167 : vector<1x8x1xf32> to vector<8x1xf32>
    %169 = arith.mulf %154, %166 : vector<8x1xf32>
    %170 = arith.subf %168, %169 : vector<8x1xf32>
    %171 = vector.broadcast %166 : vector<8x1xf32> to vector<8x128xf32>
    %172 = arith.mulf %147, %171 : vector<8x128xf32>
    %173 = vector.broadcast %170 : vector<8x1xf32> to vector<8x128xf32>
    %174 = arith.addf %172, %173 : vector<8x128xf32>
    %cst_95 = arith.constant 0.000000e+00 : f32
    %175 = vector.broadcast %cst_95 : f32 to vector<8x128xf32>
    %176 = arith.maximumf %174, %175 : vector<8x128xf32>
    %c0_96 = arith.constant 0 : index
    %c0_97 = arith.constant 0 : index
    %177 = vector.load %arg17[%c0_96, %c0_97] : memref<32x128xf32, #tpu.memory_space<vmem>>, vector<32x128xf32>
    %cst_98 = arith.constant dense<0.000000e+00> : vector<8x128xf32>
    %178 = tpu.matmul %144, %177, %cst_98 {dimension_numbers = #tpu.dot_dimension_numbers<[1], [0], [0], [1], [0, 0, 1, 1], [], []>} : vector<8x32xf32>, vector<32x128xf32>, vector<8x128xf32> -> vector<8x128xf32>
    %179 = arith.addf %178, %176 : vector<8x128xf32>
    %c0_99 = arith.constant 0 : index
    %c128_100 = arith.constant 128 : index
    %180 = vector.load %arg25[%c0_99, %c128_100] : memref<32x768xf32, #tpu.memory_space<vmem>>, vector<8x128xf32>
    tpu.vector_store %arg25[%c0_99, %c128_100], %179 {strides = array<i32>} : memref<32x768xf32, #tpu.memory_space<vmem>>, vector<8x128xf32>,
    %c0_101 = arith.constant 0 : index
    %c0_102 = arith.constant 0 : index
    %181 = vector.load %arg22[%c0_101, %c0_102] : memref<9x128xf32, #tpu.memory_space<vmem>>, vector<9x128xf32>
    %c0_103 = arith.constant 0 : index
    %c119 = arith.constant 119 : index
    %182 = vector.load %arg25[%c0_103, %c119] : memref<32x768xf32, #tpu.memory_space<vmem>>, vector<8x128xf32>
    %183 = vector.extract_strided_slice %181 {offsets = [0, 0], sizes = [1, 128], strides = [1, 1]} : vector<9x128xf32> to vector<1x128xf32>
    %184 = vector.broadcast %183 : vector<1x128xf32> to vector<8x128xf32>
    %185 = arith.mulf %182, %184 : vector<8x128xf32>
    %c0_104 = arith.constant 0 : index
    %c0_105 = arith.constant 0 : index
    %186 = vector.load %arg26[%c0_104, %c0_105] : memref<288x512xf32, #tpu.memory_space<vmem>>, vector<8x128xf32>
    tpu.vector_store %arg26[%c0_104, %c0_105], %185 {strides = array<i32>} : memref<288x512xf32, #tpu.memory_space<vmem>>, vector<8x128xf32>,
    %c0_106 = arith.constant 0 : index
    %c120 = arith.constant 120 : index
    %187 = vector.load %arg25[%c0_106, %c120] : memref<32x768xf32, #tpu.memory_space<vmem>>, vector<8x128xf32>
    %188 = vector.extract_strided_slice %181 {offsets = [1, 0], sizes = [1, 128], strides = [1, 1]} : vector<9x128xf32> to vector<1x128xf32>
    %189 = vector.broadcast %188 : vector<1x128xf32> to vector<8x128xf32>
    %190 = arith.mulf %187, %189 : vector<8x128xf32>
    %c8_107 = arith.constant 8 : index
    %c0_108 = arith.constant 0 : index
    %191 = vector.load %arg26[%c8_107, %c0_108] : memref<288x512xf32, #tpu.memory_space<vmem>>, vector<8x128xf32>
    tpu.vector_store %arg26[%c8_107, %c0_108], %190 {strides = array<i32>} : memref<288x512xf32, #tpu.memory_space<vmem>>, vector<8x128xf32>,
    %c0_109 = arith.constant 0 : index
    %c121 = arith.constant 121 : index
    %192 = vector.load %arg25[%c0_109, %c121] : memref<32x768xf32, #tpu.memory_space<vmem>>, vector<8x128xf32>
    %193 = vector.extract_strided_slice %181 {offsets = [2, 0], sizes = [1, 128], strides = [1, 1]} : vector<9x128xf32> to vector<1x128xf32>
    %194 = vector.broadcast %193 : vector<1x128xf32> to vector<8x128xf32>
    %195 = arith.mulf %192, %194 : vector<8x128xf32>
    %c16_110 = arith.constant 16 : index
    %c0_111 = arith.constant 0 : index
    %196 = vector.load %arg26[%c16_110, %c0_111] : memref<288x512xf32, #tpu.memory_space<vmem>>, vector<8x128xf32>
    tpu.vector_store %arg26[%c16_110, %c0_111], %195 {strides = array<i32>} : memref<288x512xf32, #tpu.memory_space<vmem>>, vector<8x128xf32>,
    %c0_112 = arith.constant 0 : index
    %c127_113 = arith.constant 127 : index
    %197 = vector.load %arg25[%c0_112, %c127_113] : memref<32x768xf32, #tpu.memory_space<vmem>>, vector<8x128xf32>
    %198 = vector.extract_strided_slice %181 {offsets = [3, 0], sizes = [1, 128], strides = [1, 1]} : vector<9x128xf32> to vector<1x128xf32>
    %199 = vector.broadcast %198 : vector<1x128xf32> to vector<8x128xf32>
    %200 = arith.mulf %197, %199 : vector<8x128xf32>
    %c24_114 = arith.constant 24 : index
    %c0_115 = arith.constant 0 : index
    %201 = vector.load %arg26[%c24_114, %c0_115] : memref<288x512xf32, #tpu.memory_space<vmem>>, vector<8x128xf32>
    tpu.vector_store %arg26[%c24_114, %c0_115], %200 {strides = array<i32>} : memref<288x512xf32, #tpu.memory_space<vmem>>, vector<8x128xf32>,
    %c0_116 = arith.constant 0 : index
    %c128_117 = arith.constant 128 : index
    %202 = vector.load %arg25[%c0_116, %c128_117] : memref<32x768xf32, #tpu.memory_space<vmem>>, vector<8x128xf32>
    %c32_118 = arith.constant 32 : index
    %c0_119 = arith.constant 0 : index
    %203 = vector.load %arg26[%c32_118, %c0_119] : memref<288x512xf32, #tpu.memory_space<vmem>>, vector<8x128xf32>
    tpu.vector_store %arg26[%c32_118, %c0_119], %202 {strides = array<i32>} : memref<288x512xf32, #tpu.memory_space<vmem>>, vector<8x128xf32>,
    %c0_120 = arith.constant 0 : index
    %c129_121 = arith.constant 129 : index
    %204 = vector.load %arg25[%c0_120, %c129_121] : memref<32x768xf32, #tpu.memory_space<vmem>>, vector<8x128xf32>
    %205 = vector.extract_strided_slice %181 {offsets = [5, 0], sizes = [1, 128], strides = [1, 1]} : vector<9x128xf32> to vector<1x128xf32>
    %206 = vector.broadcast %205 : vector<1x128xf32> to vector<8x128xf32>
    %207 = arith.mulf %204, %206 : vector<8x128xf32>
    %c40_122 = arith.constant 40 : index
    %c0_123 = arith.constant 0 : index
    %208 = vector.load %arg26[%c40_122, %c0_123] : memref<288x512xf32, #tpu.memory_space<vmem>>, vector<8x128xf32>
    tpu.vector_store %arg26[%c40_122, %c0_123], %207 {strides = array<i32>} : memref<288x512xf32, #tpu.memory_space<vmem>>, vector<8x128xf32>,
    %c0_124 = arith.constant 0 : index
    %c135 = arith.constant 135 : index
    %209 = vector.load %arg25[%c0_124, %c135] : memref<32x768xf32, #tpu.memory_space<vmem>>, vector<8x128xf32>
    %210 = vector.extract_strided_slice %181 {offsets = [6, 0], sizes = [1, 128], strides = [1, 1]} : vector<9x128xf32> to vector<1x128xf32>
    %211 = vector.broadcast %210 : vector<1x128xf32> to vector<8x128xf32>
    %212 = arith.mulf %209, %211 : vector<8x128xf32>
    %c48_125 = arith.constant 48 : index
    %c0_126 = arith.constant 0 : index
    %213 = vector.load %arg26[%c48_125, %c0_126] : memref<288x512xf32, #tpu.memory_space<vmem>>, vector<8x128xf32>
    tpu.vector_store %arg26[%c48_125, %c0_126], %212 {strides = array<i32>} : memref<288x512xf32, #tpu.memory_space<vmem>>, vector<8x128xf32>,
    %c0_127 = arith.constant 0 : index
    %c136 = arith.constant 136 : index
    %214 = vector.load %arg25[%c0_127, %c136] : memref<32x768xf32, #tpu.memory_space<vmem>>, vector<8x128xf32>
    %215 = vector.extract_strided_slice %181 {offsets = [7, 0], sizes = [1, 128], strides = [1, 1]} : vector<9x128xf32> to vector<1x128xf32>
    %216 = vector.broadcast %215 : vector<1x128xf32> to vector<8x128xf32>
    %217 = arith.mulf %214, %216 : vector<8x128xf32>
    %c56_128 = arith.constant 56 : index
    %c0_129 = arith.constant 0 : index
    %218 = vector.load %arg26[%c56_128, %c0_129] : memref<288x512xf32, #tpu.memory_space<vmem>>, vector<8x128xf32>
    tpu.vector_store %arg26[%c56_128, %c0_129], %217 {strides = array<i32>} : memref<288x512xf32, #tpu.memory_space<vmem>>, vector<8x128xf32>,
    %c0_130 = arith.constant 0 : index
    %c137 = arith.constant 137 : index
    %219 = vector.load %arg25[%c0_130, %c137] : memref<32x768xf32, #tpu.memory_space<vmem>>, vector<8x128xf32>
    %220 = vector.extract_strided_slice %181 {offsets = [8, 0], sizes = [1, 128], strides = [1, 1]} : vector<9x128xf32> to vector<1x128xf32>
    %221 = vector.broadcast %220 : vector<1x128xf32> to vector<8x128xf32>
    %222 = arith.mulf %219, %221 : vector<8x128xf32>
    %c64_131 = arith.constant 64 : index
    %c0_132 = arith.constant 0 : index
    %223 = vector.load %arg26[%c64_131, %c0_132] : memref<288x512xf32, #tpu.memory_space<vmem>>, vector<8x128xf32>
    tpu.vector_store %arg26[%c64_131, %c0_132], %222 {strides = array<i32>} : memref<288x512xf32, #tpu.memory_space<vmem>>, vector<8x128xf32>,
    %c0_133 = arith.constant 0 : index
    %c0_134 = arith.constant 0 : index
    %224 = vector.load %arg10[%c0_133, %c0_134] : memref<8x72xf32, #tpu.memory_space<vmem>>, vector<8x72xf32>
    %c0_135 = arith.constant 0 : index
    %c0_136 = arith.constant 0 : index
    %225 = vector.load %arg26[%c0_135, %c0_136] : memref<288x512xf32, #tpu.memory_space<vmem>>, vector<72x128xf32>
    %cst_137 = arith.constant dense<0.000000e+00> : vector<8x128xf32>
    %226 = tpu.matmul %224, %225, %cst_137 {dimension_numbers = #tpu.dot_dimension_numbers<[1], [0], [0], [1], [0, 0, 1, 1], [], []>} : vector<8x72xf32>, vector<72x128xf32>, vector<8x128xf32> -> vector<8x128xf32>
    %cst_138 = arith.constant dense<0.000000e+00> : vector<8xf32>
    %227 = vector.multi_reduction <add>, %226, %cst_138 [1] : vector<8x128xf32> to vector<8xf32>
    %228 = vector.shape_cast %227 : vector<8xf32> to vector<8x1xf32>
    %229 = arith.mulf %226, %226 : vector<8x128xf32>
    %cst_139 = arith.constant dense<0.000000e+00> : vector<8xf32>
    %230 = vector.multi_reduction <add>, %229, %cst_139 [1] : vector<8x128xf32> to vector<8xf32>
    %231 = vector.shape_cast %230 : vector<8xf32> to vector<8x1xf32>
    %cst_140 = arith.constant 7.812500e-03 : f32
    %232 = vector.broadcast %cst_140 : f32 to vector<8x1xf32>
    %233 = arith.mulf %228, %232 : vector<8x1xf32>
    %cst_141 = arith.constant 7.812500e-03 : f32
    %234 = vector.broadcast %cst_141 : f32 to vector<8x1xf32>
    %235 = arith.mulf %231, %234 : vector<8x1xf32>
    %236 = arith.mulf %233, %233 : vector<8x1xf32>
    %237 = arith.subf %235, %236 : vector<8x1xf32>
    %cst_142 = arith.constant 0.000000e+00 : f32
    %238 = vector.broadcast %cst_142 : f32 to vector<8x1xf32>
    %239 = arith.maximumf %237, %238 : vector<8x1xf32>
    %c5 = arith.constant 5 : index
    %c0_143 = arith.constant 0 : index
    %c0_144 = arith.constant 0 : index
    %240 = vector.load %arg14[%c5, %c0_143, %c0_144] : memref<7x8x1xf32, #tpu.memory_space<vmem>>, vector<1x8x1xf32>
    %241 = vector.shape_cast %240 : vector<1x8x1xf32> to vector<8x1xf32>
    %cst_145 = arith.constant 9.99999974E-6 : f32
    %242 = vector.broadcast %cst_145 : f32 to vector<8x1xf32>
    %243 = arith.addf %239, %242 : vector<8x1xf32>
    %244 = math.rsqrt %243 : vector<8x1xf32>
    %245 = arith.mulf %241, %244 : vector<8x1xf32>
    %c5_146 = arith.constant 5 : index
    %c0_147 = arith.constant 0 : index
    %c0_148 = arith.constant 0 : index
    %246 = vector.load %arg15[%c5_146, %c0_147, %c0_148] : memref<7x8x1xf32, #tpu.memory_space<vmem>>, vector<1x8x1xf32>
    %247 = vector.shape_cast %246 : vector<1x8x1xf32> to vector<8x1xf32>
    %248 = arith.mulf %233, %245 : vector<8x1xf32>
    %249 = arith.subf %247, %248 : vector<8x1xf32>
    %250 = vector.broadcast %245 : vector<8x1xf32> to vector<8x128xf32>
    %251 = arith.mulf %226, %250 : vector<8x128xf32>
    %252 = vector.broadcast %249 : vector<8x1xf32> to vector<8x128xf32>
    %253 = arith.addf %251, %252 : vector<8x128xf32>
    %cst_149 = arith.constant 0.000000e+00 : f32
    %254 = vector.broadcast %cst_149 : f32 to vector<8x128xf32>
    %255 = arith.maximumf %253, %254 : vector<8x128xf32>
    %c0_150 = arith.constant 0 : index
    %c0_151 = arith.constant 0 : index
    %256 = vector.load %arg8[%c0_150, %c0_151] : memref<8x4xf32, #tpu.memory_space<vmem>>, vector<8x4xf32>
    %c0_152 = arith.constant 0 : index
    %c0_153 = arith.constant 0 : index
    %257 = vector.load %arg1[%c0_152, %c0_153] : memref<4x512xf32, #tpu.memory_space<vmem>>, vector<4x512xf32>
    %cst_154 = arith.constant dense<0.000000e+00> : vector<8x512xf32>
    %258 = tpu.matmul %256, %257, %cst_154 {dimension_numbers = #tpu.dot_dimension_numbers<[1], [0], [0], [1], [0, 0, 1, 1], [], []>} : vector<8x4xf32>, vector<4x512xf32>, vector<8x512xf32> -> vector<8x512xf32>
    %cst_155 = arith.constant dense<0.000000e+00> : vector<8xf32>
    %259 = vector.multi_reduction <add>, %258, %cst_155 [1] : vector<8x512xf32> to vector<8xf32>
    %260 = vector.shape_cast %259 : vector<8xf32> to vector<8x1xf32>
    %261 = arith.mulf %258, %258 : vector<8x512xf32>
    %cst_156 = arith.constant dense<0.000000e+00> : vector<8xf32>
    %262 = vector.multi_reduction <add>, %261, %cst_156 [1] : vector<8x512xf32> to vector<8xf32>
    %263 = vector.shape_cast %262 : vector<8xf32> to vector<8x1xf32>
    %cst_157 = arith.constant 0.001953125 : f32
    %264 = vector.broadcast %cst_157 : f32 to vector<8x1xf32>
    %265 = arith.mulf %260, %264 : vector<8x1xf32>
    %cst_158 = arith.constant 0.001953125 : f32
    %266 = vector.broadcast %cst_158 : f32 to vector<8x1xf32>
    %267 = arith.mulf %263, %266 : vector<8x1xf32>
    %268 = arith.mulf %265, %265 : vector<8x1xf32>
    %269 = arith.subf %267, %268 : vector<8x1xf32>
    %cst_159 = arith.constant 0.000000e+00 : f32
    %270 = vector.broadcast %cst_159 : f32 to vector<8x1xf32>
    %271 = arith.maximumf %269, %270 : vector<8x1xf32>
    %c3 = arith.constant 3 : index
    %c0_160 = arith.constant 0 : index
    %c0_161 = arith.constant 0 : index
    %272 = vector.load %arg14[%c3, %c0_160, %c0_161] : memref<7x8x1xf32, #tpu.memory_space<vmem>>, vector<1x8x1xf32>
    %273 = vector.shape_cast %272 : vector<1x8x1xf32> to vector<8x1xf32>
    %cst_162 = arith.constant 9.99999974E-6 : f32
    %274 = vector.broadcast %cst_162 : f32 to vector<8x1xf32>
    %275 = arith.addf %271, %274 : vector<8x1xf32>
    %276 = math.rsqrt %275 : vector<8x1xf32>
    %277 = arith.mulf %273, %276 : vector<8x1xf32>
    %c3_163 = arith.constant 3 : index
    %c0_164 = arith.constant 0 : index
    %c0_165 = arith.constant 0 : index
    %278 = vector.load %arg15[%c3_163, %c0_164, %c0_165] : memref<7x8x1xf32, #tpu.memory_space<vmem>>, vector<1x8x1xf32>
    %279 = vector.shape_cast %278 : vector<1x8x1xf32> to vector<8x1xf32>
    %280 = arith.mulf %265, %277 : vector<8x1xf32>
    %281 = arith.subf %279, %280 : vector<8x1xf32>
    %282 = vector.broadcast %277 : vector<8x1xf32> to vector<8x512xf32>
    %283 = arith.mulf %258, %282 : vector<8x512xf32>
    %284 = vector.broadcast %281 : vector<8x1xf32> to vector<8x512xf32>
    %285 = arith.addf %283, %284 : vector<8x512xf32>
    %cst_166 = arith.constant 0.000000e+00 : f32
    %286 = vector.broadcast %cst_166 : f32 to vector<8x512xf32>
    %287 = arith.maximumf %285, %286 : vector<8x512xf32>
    %c0_167 = arith.constant 0 : index
    %c0_168 = arith.constant 0 : index
    %288 = vector.load %arg18[%c0_167, %c0_168] : memref<128x512xf32, #tpu.memory_space<vmem>>, vector<128x512xf32>
    %cst_169 = arith.constant dense<0.000000e+00> : vector<8x512xf32>
    %289 = tpu.matmul %255, %288, %cst_169 {dimension_numbers = #tpu.dot_dimension_numbers<[1], [0], [0], [1], [0, 0, 1, 1], [], []>} : vector<8x128xf32>, vector<128x512xf32>, vector<8x512xf32> -> vector<8x512xf32>
    %290 = arith.addf %289, %287 : vector<8x512xf32>
    %c0_170 = arith.constant 0 : index
    %c128_171 = arith.constant 128 : index
    %291 = vector.load %arg25[%c0_170, %c128_171] : memref<32x768xf32, #tpu.memory_space<vmem>>, vector<8x512xf32>
    tpu.vector_store %arg25[%c0_170, %c128_171], %290 {strides = array<i32>} : memref<32x768xf32, #tpu.memory_space<vmem>>, vector<8x512xf32>,
    %c0_172 = arith.constant 0 : index
    %c0_173 = arith.constant 0 : index
    %292 = vector.load %arg23[%c0_172, %c0_173] : memref<9x512xf32, #tpu.memory_space<vmem>>, vector<9x512xf32>
    %c0_174 = arith.constant 0 : index
    %c111 = arith.constant 111 : index
    %293 = vector.load %arg25[%c0_174, %c111] : memref<32x768xf32, #tpu.memory_space<vmem>>, vector<8x512xf32>
    %294 = vector.extract_strided_slice %292 {offsets = [0, 0], sizes = [1, 512], strides = [1, 1]} : vector<9x512xf32> to vector<1x512xf32>
    %295 = vector.broadcast %294 : vector<1x512xf32> to vector<8x512xf32>
    %296 = arith.mulf %293, %295 : vector<8x512xf32>
    %c0_175 = arith.constant 0 : index
    %c0_176 = arith.constant 0 : index
    %297 = vector.load %arg26[%c0_175, %c0_176] : memref<288x512xf32, #tpu.memory_space<vmem>>, vector<8x512xf32>
    tpu.vector_store %arg26[%c0_175, %c0_176], %296 {strides = array<i32>} : memref<288x512xf32, #tpu.memory_space<vmem>>, vector<8x512xf32>,
    %c0_177 = arith.constant 0 : index
    %c112 = arith.constant 112 : index
    %298 = vector.load %arg25[%c0_177, %c112] : memref<32x768xf32, #tpu.memory_space<vmem>>, vector<8x512xf32>
    %299 = vector.extract_strided_slice %292 {offsets = [1, 0], sizes = [1, 512], strides = [1, 1]} : vector<9x512xf32> to vector<1x512xf32>
    %300 = vector.broadcast %299 : vector<1x512xf32> to vector<8x512xf32>
    %301 = arith.mulf %298, %300 : vector<8x512xf32>
    %c8_178 = arith.constant 8 : index
    %c0_179 = arith.constant 0 : index
    %302 = vector.load %arg26[%c8_178, %c0_179] : memref<288x512xf32, #tpu.memory_space<vmem>>, vector<8x512xf32>
    tpu.vector_store %arg26[%c8_178, %c0_179], %301 {strides = array<i32>} : memref<288x512xf32, #tpu.memory_space<vmem>>, vector<8x512xf32>,
    %c0_180 = arith.constant 0 : index
    %c113 = arith.constant 113 : index
    %303 = vector.load %arg25[%c0_180, %c113] : memref<32x768xf32, #tpu.memory_space<vmem>>, vector<8x512xf32>
    %304 = vector.extract_strided_slice %292 {offsets = [2, 0], sizes = [1, 512], strides = [1, 1]} : vector<9x512xf32> to vector<1x512xf32>
    %305 = vector.broadcast %304 : vector<1x512xf32> to vector<8x512xf32>
    %306 = arith.mulf %303, %305 : vector<8x512xf32>
    %c16_181 = arith.constant 16 : index
    %c0_182 = arith.constant 0 : index
    %307 = vector.load %arg26[%c16_181, %c0_182] : memref<288x512xf32, #tpu.memory_space<vmem>>, vector<8x512xf32>
    tpu.vector_store %arg26[%c16_181, %c0_182], %306 {strides = array<i32>} : memref<288x512xf32, #tpu.memory_space<vmem>>, vector<8x512xf32>,
    %c0_183 = arith.constant 0 : index
    %c127_184 = arith.constant 127 : index
    %308 = vector.load %arg25[%c0_183, %c127_184] : memref<32x768xf32, #tpu.memory_space<vmem>>, vector<8x512xf32>
    %309 = vector.extract_strided_slice %292 {offsets = [3, 0], sizes = [1, 512], strides = [1, 1]} : vector<9x512xf32> to vector<1x512xf32>
    %310 = vector.broadcast %309 : vector<1x512xf32> to vector<8x512xf32>
    %311 = arith.mulf %308, %310 : vector<8x512xf32>
    %c24_185 = arith.constant 24 : index
    %c0_186 = arith.constant 0 : index
    %312 = vector.load %arg26[%c24_185, %c0_186] : memref<288x512xf32, #tpu.memory_space<vmem>>, vector<8x512xf32>
    tpu.vector_store %arg26[%c24_185, %c0_186], %311 {strides = array<i32>} : memref<288x512xf32, #tpu.memory_space<vmem>>, vector<8x512xf32>,
    %c0_187 = arith.constant 0 : index
    %c128_188 = arith.constant 128 : index
    %313 = vector.load %arg25[%c0_187, %c128_188] : memref<32x768xf32, #tpu.memory_space<vmem>>, vector<8x512xf32>
    %c32_189 = arith.constant 32 : index
    %c0_190 = arith.constant 0 : index
    %314 = vector.load %arg26[%c32_189, %c0_190] : memref<288x512xf32, #tpu.memory_space<vmem>>, vector<8x512xf32>
    tpu.vector_store %arg26[%c32_189, %c0_190], %313 {strides = array<i32>} : memref<288x512xf32, #tpu.memory_space<vmem>>, vector<8x512xf32>,
    %c0_191 = arith.constant 0 : index
    %c129_192 = arith.constant 129 : index
    %315 = vector.load %arg25[%c0_191, %c129_192] : memref<32x768xf32, #tpu.memory_space<vmem>>, vector<8x512xf32>
    %316 = vector.extract_strided_slice %292 {offsets = [5, 0], sizes = [1, 512], strides = [1, 1]} : vector<9x512xf32> to vector<1x512xf32>
    %317 = vector.broadcast %316 : vector<1x512xf32> to vector<8x512xf32>
    %318 = arith.mulf %315, %317 : vector<8x512xf32>
    %c40_193 = arith.constant 40 : index
    %c0_194 = arith.constant 0 : index
    %319 = vector.load %arg26[%c40_193, %c0_194] : memref<288x512xf32, #tpu.memory_space<vmem>>, vector<8x512xf32>
    tpu.vector_store %arg26[%c40_193, %c0_194], %318 {strides = array<i32>} : memref<288x512xf32, #tpu.memory_space<vmem>>, vector<8x512xf32>,
    %c0_195 = arith.constant 0 : index
    %c143 = arith.constant 143 : index
    %320 = vector.load %arg25[%c0_195, %c143] : memref<32x768xf32, #tpu.memory_space<vmem>>, vector<8x512xf32>
    %321 = vector.extract_strided_slice %292 {offsets = [6, 0], sizes = [1, 512], strides = [1, 1]} : vector<9x512xf32> to vector<1x512xf32>
    %322 = vector.broadcast %321 : vector<1x512xf32> to vector<8x512xf32>
    %323 = arith.mulf %320, %322 : vector<8x512xf32>
    %c48_196 = arith.constant 48 : index
    %c0_197 = arith.constant 0 : index
    %324 = vector.load %arg26[%c48_196, %c0_197] : memref<288x512xf32, #tpu.memory_space<vmem>>, vector<8x512xf32>
    tpu.vector_store %arg26[%c48_196, %c0_197], %323 {strides = array<i32>} : memref<288x512xf32, #tpu.memory_space<vmem>>, vector<8x512xf32>,
    %c0_198 = arith.constant 0 : index
    %c144 = arith.constant 144 : index
    %325 = vector.load %arg25[%c0_198, %c144] : memref<32x768xf32, #tpu.memory_space<vmem>>, vector<8x512xf32>
    %326 = vector.extract_strided_slice %292 {offsets = [7, 0], sizes = [1, 512], strides = [1, 1]} : vector<9x512xf32> to vector<1x512xf32>
    %327 = vector.broadcast %326 : vector<1x512xf32> to vector<8x512xf32>
    %328 = arith.mulf %325, %327 : vector<8x512xf32>
    %c56_199 = arith.constant 56 : index
    %c0_200 = arith.constant 0 : index
    %329 = vector.load %arg26[%c56_199, %c0_200] : memref<288x512xf32, #tpu.memory_space<vmem>>, vector<8x512xf32>
    tpu.vector_store %arg26[%c56_199, %c0_200], %328 {strides = array<i32>} : memref<288x512xf32, #tpu.memory_space<vmem>>, vector<8x512xf32>,
    %c0_201 = arith.constant 0 : index
    %c145 = arith.constant 145 : index
    %330 = vector.load %arg25[%c0_201, %c145] : memref<32x768xf32, #tpu.memory_space<vmem>>, vector<8x512xf32>
    %331 = vector.extract_strided_slice %292 {offsets = [8, 0], sizes = [1, 512], strides = [1, 1]} : vector<9x512xf32> to vector<1x512xf32>
    %332 = vector.broadcast %331 : vector<1x512xf32> to vector<8x512xf32>
    %333 = arith.mulf %330, %332 : vector<8x512xf32>
    %c64_202 = arith.constant 64 : index
    %c0_203 = arith.constant 0 : index
    %334 = vector.load %arg26[%c64_202, %c0_203] : memref<288x512xf32, #tpu.memory_space<vmem>>, vector<8x512xf32>
    tpu.vector_store %arg26[%c64_202, %c0_203], %333 {strides = array<i32>} : memref<288x512xf32, #tpu.memory_space<vmem>>, vector<8x512xf32>,
    %c0_204 = arith.constant 0 : index
    %c0_205 = arith.constant 0 : index
    %335 = vector.load %arg11[%c0_204, %c0_205] : memref<8x72xf32, #tpu.memory_space<vmem>>, vector<8x72xf32>
    %c0_206 = arith.constant 0 : index
    %c0_207 = arith.constant 0 : index
    %336 = vector.load %arg26[%c0_206, %c0_207] : memref<288x512xf32, #tpu.memory_space<vmem>>, vector<72x512xf32>
    %cst_208 = arith.constant dense<0.000000e+00> : vector<8x512xf32>
    %337 = tpu.matmul %335, %336, %cst_208 {dimension_numbers = #tpu.dot_dimension_numbers<[1], [0], [0], [1], [0, 0, 1, 1], [], []>} : vector<8x72xf32>, vector<72x512xf32>, vector<8x512xf32> -> vector<8x512xf32>
    %cst_209 = arith.constant dense<0.000000e+00> : vector<8xf32>
    %338 = vector.multi_reduction <add>, %337, %cst_209 [1] : vector<8x512xf32> to vector<8xf32>
    %339 = vector.shape_cast %338 : vector<8xf32> to vector<8x1xf32>
    %340 = arith.mulf %337, %337 : vector<8x512xf32>
    %cst_210 = arith.constant dense<0.000000e+00> : vector<8xf32>
    %341 = vector.multi_reduction <add>, %340, %cst_210 [1] : vector<8x512xf32> to vector<8xf32>
    %342 = vector.shape_cast %341 : vector<8xf32> to vector<8x1xf32>
    %cst_211 = arith.constant 0.001953125 : f32
    %343 = vector.broadcast %cst_211 : f32 to vector<8x1xf32>
    %344 = arith.mulf %339, %343 : vector<8x1xf32>
    %cst_212 = arith.constant 0.001953125 : f32
    %345 = vector.broadcast %cst_212 : f32 to vector<8x1xf32>
    %346 = arith.mulf %342, %345 : vector<8x1xf32>
    %347 = arith.mulf %344, %344 : vector<8x1xf32>
    %348 = arith.subf %346, %347 : vector<8x1xf32>
    %cst_213 = arith.constant 0.000000e+00 : f32
    %349 = vector.broadcast %cst_213 : f32 to vector<8x1xf32>
    %350 = arith.maximumf %348, %349 : vector<8x1xf32>
    %c6 = arith.constant 6 : index
    %c0_214 = arith.constant 0 : index
    %c0_215 = arith.constant 0 : index
    %351 = vector.load %arg14[%c6, %c0_214, %c0_215] : memref<7x8x1xf32, #tpu.memory_space<vmem>>, vector<1x8x1xf32>
    %352 = vector.shape_cast %351 : vector<1x8x1xf32> to vector<8x1xf32>
    %cst_216 = arith.constant 9.99999974E-6 : f32
    %353 = vector.broadcast %cst_216 : f32 to vector<8x1xf32>
    %354 = arith.addf %350, %353 : vector<8x1xf32>
    %355 = math.rsqrt %354 : vector<8x1xf32>
    %356 = arith.mulf %352, %355 : vector<8x1xf32>
    %c6_217 = arith.constant 6 : index
    %c0_218 = arith.constant 0 : index
    %c0_219 = arith.constant 0 : index
    %357 = vector.load %arg15[%c6_217, %c0_218, %c0_219] : memref<7x8x1xf32, #tpu.memory_space<vmem>>, vector<1x8x1xf32>
    %358 = vector.shape_cast %357 : vector<1x8x1xf32> to vector<8x1xf32>
    %359 = arith.mulf %344, %356 : vector<8x1xf32>
    %360 = arith.subf %358, %359 : vector<8x1xf32>
    %361 = vector.broadcast %356 : vector<8x1xf32> to vector<8x512xf32>
    %362 = arith.mulf %337, %361 : vector<8x512xf32>
    %363 = vector.broadcast %360 : vector<8x1xf32> to vector<8x512xf32>
    %364 = arith.addf %362, %363 : vector<8x512xf32>
    %cst_220 = arith.constant 0.000000e+00 : f32
    %365 = vector.broadcast %cst_220 : f32 to vector<8x512xf32>
    %366 = arith.maximumf %364, %365 : vector<8x512xf32>
    %c0_221 = arith.constant 0 : index
    %c0_222 = arith.constant 0 : index
    %367 = vector.load %arg18[%c0_221, %c0_222] : memref<128x512xf32, #tpu.memory_space<vmem>>, vector<128x512xf32>
    %cst_223 = arith.constant dense<0.000000e+00> : vector<8x512xf32>
    %368 = tpu.matmul %255, %367, %cst_223 {dimension_numbers = #tpu.dot_dimension_numbers<[1], [0], [0], [1], [0, 0, 1, 1], [], []>} : vector<8x128xf32>, vector<128x512xf32>, vector<8x512xf32> -> vector<8x512xf32>
    %c0_224 = arith.constant 0 : index
    %c0_225 = arith.constant 0 : index
    %369 = vector.load %arg19[%c0_224, %c0_225] : memref<32x512xf32, #tpu.memory_space<vmem>>, vector<32x512xf32>
    %cst_226 = arith.constant dense<0.000000e+00> : vector<8x512xf32>
    %370 = tpu.matmul %144, %369, %cst_226 {dimension_numbers = #tpu.dot_dimension_numbers<[1], [0], [0], [1], [0, 0, 1, 1], [], []>} : vector<8x32xf32>, vector<32x512xf32>, vector<8x512xf32> -> vector<8x512xf32>
    %c0_227 = arith.constant 0 : index
    %c0_228 = arith.constant 0 : index
    %371 = vector.load %arg20[%c0_227, %c0_228] : memref<8x512xf32, #tpu.memory_space<vmem>>, vector<8x512xf32>
    %cst_229 = arith.constant dense<0.000000e+00> : vector<8x512xf32>
    %372 = tpu.matmul %33, %371, %cst_229 {dimension_numbers = #tpu.dot_dimension_numbers<[1], [0], [0], [1], [0, 0, 1, 1], [], []>} : vector<8x8xf32>, vector<8x512xf32>, vector<8x512xf32> -> vector<8x512xf32>
    %c0_230 = arith.constant 0 : index
    %c128_231 = arith.constant 128 : index
    %373 = vector.load %arg25[%c0_230, %c128_231] : memref<32x768xf32, #tpu.memory_space<vmem>>, vector<8x512xf32>
    tpu.vector_store %arg25[%c0_230, %c128_231], %366 {strides = array<i32>} : memref<32x768xf32, #tpu.memory_space<vmem>>, vector<8x512xf32>,
    %c8_232 = arith.constant 8 : index
    %c128_233 = arith.constant 128 : index
    %374 = vector.load %arg25[%c8_232, %c128_233] : memref<32x768xf32, #tpu.memory_space<vmem>>, vector<8x512xf32>
    tpu.vector_store %arg25[%c8_232, %c128_233], %368 {strides = array<i32>} : memref<32x768xf32, #tpu.memory_space<vmem>>, vector<8x512xf32>,
    %c16_234 = arith.constant 16 : index
    %c128_235 = arith.constant 128 : index
    %375 = vector.load %arg25[%c16_234, %c128_235] : memref<32x768xf32, #tpu.memory_space<vmem>>, vector<8x512xf32>
    tpu.vector_store %arg25[%c16_234, %c128_235], %370 {strides = array<i32>} : memref<32x768xf32, #tpu.memory_space<vmem>>, vector<8x512xf32>,
    %c24_236 = arith.constant 24 : index
    %c128_237 = arith.constant 128 : index
    %376 = vector.load %arg25[%c24_236, %c128_237] : memref<32x768xf32, #tpu.memory_space<vmem>>, vector<8x512xf32>
    tpu.vector_store %arg25[%c24_236, %c128_237], %372 {strides = array<i32>} : memref<32x768xf32, #tpu.memory_space<vmem>>, vector<8x512xf32>,
    %c0_238 = arith.constant 0 : index
    %c0_239 = arith.constant 0 : index
    %377 = vector.load %arg23[%c0_238, %c0_239] : memref<9x512xf32, #tpu.memory_space<vmem>>, vector<9x512xf32>
    %c0_240 = arith.constant 0 : index
    %c111_241 = arith.constant 111 : index
    %378 = vector.load %arg25[%c0_240, %c111_241] : memref<32x768xf32, #tpu.memory_space<vmem>>, vector<32x512xf32>
    %379 = vector.extract_strided_slice %377 {offsets = [0, 0], sizes = [1, 512], strides = [1, 1]} : vector<9x512xf32> to vector<1x512xf32>
    %380 = vector.broadcast %379 : vector<1x512xf32> to vector<32x512xf32>
    %381 = arith.mulf %378, %380 : vector<32x512xf32>
    %c0_242 = arith.constant 0 : index
    %c0_243 = arith.constant 0 : index
    %382 = vector.load %arg26[%c0_242, %c0_243] : memref<288x512xf32, #tpu.memory_space<vmem>>, vector<32x512xf32>
    tpu.vector_store %arg26[%c0_242, %c0_243], %381 {strides = array<i32>} : memref<288x512xf32, #tpu.memory_space<vmem>>, vector<32x512xf32>,
    %c0_244 = arith.constant 0 : index
    %c112_245 = arith.constant 112 : index
    %383 = vector.load %arg25[%c0_244, %c112_245] : memref<32x768xf32, #tpu.memory_space<vmem>>, vector<32x512xf32>
    %384 = vector.extract_strided_slice %377 {offsets = [1, 0], sizes = [1, 512], strides = [1, 1]} : vector<9x512xf32> to vector<1x512xf32>
    %385 = vector.broadcast %384 : vector<1x512xf32> to vector<32x512xf32>
    %386 = arith.mulf %383, %385 : vector<32x512xf32>
    %c32_246 = arith.constant 32 : index
    %c0_247 = arith.constant 0 : index
    %387 = vector.load %arg26[%c32_246, %c0_247] : memref<288x512xf32, #tpu.memory_space<vmem>>, vector<32x512xf32>
    tpu.vector_store %arg26[%c32_246, %c0_247], %386 {strides = array<i32>} : memref<288x512xf32, #tpu.memory_space<vmem>>, vector<32x512xf32>,
    %c0_248 = arith.constant 0 : index
    %c113_249 = arith.constant 113 : index
    %388 = vector.load %arg25[%c0_248, %c113_249] : memref<32x768xf32, #tpu.memory_space<vmem>>, vector<32x512xf32>
    %389 = vector.extract_strided_slice %377 {offsets = [2, 0], sizes = [1, 512], strides = [1, 1]} : vector<9x512xf32> to vector<1x512xf32>
    %390 = vector.broadcast %389 : vector<1x512xf32> to vector<32x512xf32>
    %391 = arith.mulf %388, %390 : vector<32x512xf32>
    %c64_250 = arith.constant 64 : index
    %c0_251 = arith.constant 0 : index
    %392 = vector.load %arg26[%c64_250, %c0_251] : memref<288x512xf32, #tpu.memory_space<vmem>>, vector<32x512xf32>
    tpu.vector_store %arg26[%c64_250, %c0_251], %391 {strides = array<i32>} : memref<288x512xf32, #tpu.memory_space<vmem>>, vector<32x512xf32>,
    %c0_252 = arith.constant 0 : index
    %c127_253 = arith.constant 127 : index
    %393 = vector.load %arg25[%c0_252, %c127_253] : memref<32x768xf32, #tpu.memory_space<vmem>>, vector<32x512xf32>
    %394 = vector.extract_strided_slice %377 {offsets = [3, 0], sizes = [1, 512], strides = [1, 1]} : vector<9x512xf32> to vector<1x512xf32>
    %395 = vector.broadcast %394 : vector<1x512xf32> to vector<32x512xf32>
    %396 = arith.mulf %393, %395 : vector<32x512xf32>
    %c96 = arith.constant 96 : index
    %c0_254 = arith.constant 0 : index
    %397 = vector.load %arg26[%c96, %c0_254] : memref<288x512xf32, #tpu.memory_space<vmem>>, vector<32x512xf32>
    tpu.vector_store %arg26[%c96, %c0_254], %396 {strides = array<i32>} : memref<288x512xf32, #tpu.memory_space<vmem>>, vector<32x512xf32>,
    %c0_255 = arith.constant 0 : index
    %c128_256 = arith.constant 128 : index
    %398 = vector.load %arg25[%c0_255, %c128_256] : memref<32x768xf32, #tpu.memory_space<vmem>>, vector<32x512xf32>
    %c128_257 = arith.constant 128 : index
    %c0_258 = arith.constant 0 : index
    %399 = vector.load %arg26[%c128_257, %c0_258] : memref<288x512xf32, #tpu.memory_space<vmem>>, vector<32x512xf32>
    tpu.vector_store %arg26[%c128_257, %c0_258], %398 {strides = array<i32>} : memref<288x512xf32, #tpu.memory_space<vmem>>, vector<32x512xf32>,
    %c0_259 = arith.constant 0 : index
    %c129_260 = arith.constant 129 : index
    %400 = vector.load %arg25[%c0_259, %c129_260] : memref<32x768xf32, #tpu.memory_space<vmem>>, vector<32x512xf32>
    %401 = vector.extract_strided_slice %377 {offsets = [5, 0], sizes = [1, 512], strides = [1, 1]} : vector<9x512xf32> to vector<1x512xf32>
    %402 = vector.broadcast %401 : vector<1x512xf32> to vector<32x512xf32>
    %403 = arith.mulf %400, %402 : vector<32x512xf32>
    %c160 = arith.constant 160 : index
    %c0_261 = arith.constant 0 : index
    %404 = vector.load %arg26[%c160, %c0_261] : memref<288x512xf32, #tpu.memory_space<vmem>>, vector<32x512xf32>
    tpu.vector_store %arg26[%c160, %c0_261], %403 {strides = array<i32>} : memref<288x512xf32, #tpu.memory_space<vmem>>, vector<32x512xf32>,
    %c0_262 = arith.constant 0 : index
    %c143_263 = arith.constant 143 : index
    %405 = vector.load %arg25[%c0_262, %c143_263] : memref<32x768xf32, #tpu.memory_space<vmem>>, vector<32x512xf32>
    %406 = vector.extract_strided_slice %377 {offsets = [6, 0], sizes = [1, 512], strides = [1, 1]} : vector<9x512xf32> to vector<1x512xf32>
    %407 = vector.broadcast %406 : vector<1x512xf32> to vector<32x512xf32>
    %408 = arith.mulf %405, %407 : vector<32x512xf32>
    %c192 = arith.constant 192 : index
    %c0_264 = arith.constant 0 : index
    %409 = vector.load %arg26[%c192, %c0_264] : memref<288x512xf32, #tpu.memory_space<vmem>>, vector<32x512xf32>
    tpu.vector_store %arg26[%c192, %c0_264], %408 {strides = array<i32>} : memref<288x512xf32, #tpu.memory_space<vmem>>, vector<32x512xf32>,
    %c0_265 = arith.constant 0 : index
    %c144_266 = arith.constant 144 : index
    %410 = vector.load %arg25[%c0_265, %c144_266] : memref<32x768xf32, #tpu.memory_space<vmem>>, vector<32x512xf32>
    %411 = vector.extract_strided_slice %377 {offsets = [7, 0], sizes = [1, 512], strides = [1, 1]} : vector<9x512xf32> to vector<1x512xf32>
    %412 = vector.broadcast %411 : vector<1x512xf32> to vector<32x512xf32>
    %413 = arith.mulf %410, %412 : vector<32x512xf32>
    %c224 = arith.constant 224 : index
    %c0_267 = arith.constant 0 : index
    %414 = vector.load %arg26[%c224, %c0_267] : memref<288x512xf32, #tpu.memory_space<vmem>>, vector<32x512xf32>
    tpu.vector_store %arg26[%c224, %c0_267], %413 {strides = array<i32>} : memref<288x512xf32, #tpu.memory_space<vmem>>, vector<32x512xf32>,
    %c0_268 = arith.constant 0 : index
    %c145_269 = arith.constant 145 : index
    %415 = vector.load %arg25[%c0_268, %c145_269] : memref<32x768xf32, #tpu.memory_space<vmem>>, vector<32x512xf32>
    %416 = vector.extract_strided_slice %377 {offsets = [8, 0], sizes = [1, 512], strides = [1, 1]} : vector<9x512xf32> to vector<1x512xf32>
    %417 = vector.broadcast %416 : vector<1x512xf32> to vector<32x512xf32>
    %418 = arith.mulf %415, %417 : vector<32x512xf32>
    %c256 = arith.constant 256 : index
    %c0_270 = arith.constant 0 : index
    %419 = vector.load %arg26[%c256, %c0_270] : memref<288x512xf32, #tpu.memory_space<vmem>>, vector<32x512xf32>
    tpu.vector_store %arg26[%c256, %c0_270], %418 {strides = array<i32>} : memref<288x512xf32, #tpu.memory_space<vmem>>, vector<32x512xf32>,
    %c0_271 = arith.constant 0 : index
    %c0_272 = arith.constant 0 : index
    %420 = vector.load %arg12[%c0_271, %c0_272] : memref<8x288xf32, #tpu.memory_space<vmem>>, vector<8x288xf32>
    %c0_273 = arith.constant 0 : index
    %c0_274 = arith.constant 0 : index
    %421 = vector.load %arg26[%c0_273, %c0_274] : memref<288x512xf32, #tpu.memory_space<vmem>>, vector<288x512xf32>
    %cst_275 = arith.constant dense<0.000000e+00> : vector<8x512xf32>
    %422 = tpu.matmul %420, %421, %cst_275 {dimension_numbers = #tpu.dot_dimension_numbers<[1], [0], [0], [1], [0, 0, 1, 1], [], []>} : vector<8x288xf32>, vector<288x512xf32>, vector<8x512xf32> -> vector<8x512xf32>
    %c0_276 = arith.constant 0 : index
    %c0_277 = arith.constant 0 : index
    %423 = vector.load %arg13[%c0_276, %c0_277] : memref<8x1xf32, #tpu.memory_space<vmem>>, vector<8x1xf32>
    %424 = vector.broadcast %423 : vector<8x1xf32> to vector<8x512xf32>
    %425 = arith.addf %422, %424 : vector<8x512xf32>
    %c0_278 = arith.constant 0 : index
    %c0_279 = arith.constant 0 : index
    %426 = vector.load %arg24[%c0_278, %c0_279] : memref<8x512xf32, #tpu.memory_space<vmem>>, vector<8x512xf32>
    tpu.vector_store %arg24[%c0_278, %c0_279], %425 {strides = array<i32>} : memref<8x512xf32, #tpu.memory_space<vmem>>, vector<8x512xf32>,
    return
  }
  func.func @transform_0(%arg0: i32) -> (i32, i32) {
    %c0_i32 = arith.constant 0 : i32
    %c0_i32_0 = arith.constant 0 : i32
    %c0_i32_1 = arith.constant 0 : i32
    return %c0_i32, %c0_i32_0 : i32, i32
  }
  func.func @transform_1(%arg0: i32) -> (i32, i32) {
    %c0_i32 = arith.constant 0 : i32
    %c0_i32_0 = arith.constant 0 : i32
    %c0_i32_1 = arith.constant 0 : i32
    return %c0_i32, %c0_i32_0 : i32, i32
  }
  func.func @transform_2(%arg0: i32) -> (i32, i32) {
    %c0_i32 = arith.constant 0 : i32
    %c0_i32_0 = arith.constant 0 : i32
    %c0_i32_1 = arith.constant 0 : i32
    return %c0_i32, %c0_i32_0 : i32, i32
  }
  func.func @transform_3(%arg0: i32) -> (i32, i32) {
    %c0_i32 = arith.constant 0 : i32
    %c0_i32_0 = arith.constant 0 : i32
    %c0_i32_1 = arith.constant 0 : i32
    return %c0_i32, %c0_i32_0 : i32, i32
  }
  func.func @transform_4(%arg0: i32) -> (i32, i32) {
    %c0_i32 = arith.constant 0 : i32
    %c0_i32_0 = arith.constant 0 : i32
    %c0_i32_1 = arith.constant 0 : i32
    return %c0_i32, %c0_i32_0 : i32, i32
  }
  func.func @transform_5(%arg0: i32) -> (i32, i32) {
    %c0_i32 = arith.constant 0 : i32
    %c0_i32_0 = arith.constant 0 : i32
    %c0_i32_1 = arith.constant 0 : i32
    return %c0_i32, %c0_i32_0 : i32, i32
  }
  func.func @transform_6(%arg0: i32) -> (i32, i32) {
    %c0_i32 = arith.constant 0 : i32
    %c0_i32_0 = arith.constant 0 : i32
    %c0_i32_1 = arith.constant 0 : i32
    return %c0_i32, %c0_i32_0 : i32, i32
  }
  func.func @transform_7(%arg0: i32) -> (i32, i32) {
    %c0_i32 = arith.constant 0 : i32
    %c0_i32_0 = arith.constant 0 : i32
    %c0_i32_1 = arith.constant 0 : i32
    return %c0_i32, %c0_i32_0 : i32, i32
  }
  func.func @transform_8(%arg0: i32) -> (i32, i32) {
    %c0_i32 = arith.constant 0 : i32
    %c0_i32_0 = arith.constant 0 : i32
    %c0_i32_1 = arith.constant 0 : i32
    return %c0_i32, %c0_i32_0 : i32, i32
  }
  func.func @transform_9(%arg0: i32) -> (i32, i32) {
    %c0_i32 = arith.constant 0 : i32
    %c0_i32_0 = arith.constant 0 : i32
    %c0_i32_1 = arith.constant 0 : i32
    return %c0_i32, %c0_i32_0 : i32, i32
  }
  func.func @transform_10(%arg0: i32) -> (i32, i32) {
    %c0_i32 = arith.constant 0 : i32
    %c0_i32_0 = arith.constant 0 : i32
    %c0_i32_1 = arith.constant 0 : i32
    return %c0_i32, %c0_i32_0 : i32, i32
  }
  func.func @transform_11(%arg0: i32) -> (i32, i32) {
    %c0_i32 = arith.constant 0 : i32
    %c0_i32_0 = arith.constant 0 : i32
    %c0_i32_1 = arith.constant 0 : i32
    return %c0_i32, %c0_i32_0 : i32, i32
  }
  func.func @transform_12(%arg0: i32) -> (i32, i32) {
    %c0_i32 = arith.constant 0 : i32
    %c0_i32_0 = arith.constant 0 : i32
    %c0_i32_1 = arith.constant 0 : i32
    return %c0_i32, %c0_i32_0 : i32, i32
  }
  func.func @transform_13(%arg0: i32) -> (i32, i32, i32) {
    %c0_i32 = arith.constant 0 : i32
    %c0_i32_0 = arith.constant 0 : i32
    %c0_i32_1 = arith.constant 0 : i32
    %c0_i32_2 = arith.constant 0 : i32
    return %c0_i32, %c0_i32_0, %c0_i32_1 : i32, i32, i32
  }
  func.func @transform_14(%arg0: i32) -> (i32, i32, i32) {
    %c0_i32 = arith.constant 0 : i32
    %c0_i32_0 = arith.constant 0 : i32
    %c0_i32_1 = arith.constant 0 : i32
    %c0_i32_2 = arith.constant 0 : i32
    return %c0_i32, %c0_i32_0, %c0_i32_1 : i32, i32, i32
  }
  func.func @transform_15(%arg0: i32) -> (i32, i32) {
    %c0_i32 = arith.constant 0 : i32
    %c0_i32_0 = arith.constant 0 : i32
    %c0_i32_1 = arith.constant 0 : i32
    return %c0_i32, %c0_i32_0 : i32, i32
  }
  func.func @transform_16(%arg0: i32) -> (i32, i32) {
    %c0_i32 = arith.constant 0 : i32
    %c0_i32_0 = arith.constant 0 : i32
    %c0_i32_1 = arith.constant 0 : i32
    return %c0_i32, %c0_i32_0 : i32, i32
  }
  func.func @transform_17(%arg0: i32) -> (i32, i32) {
    %c0_i32 = arith.constant 0 : i32
    %c0_i32_0 = arith.constant 0 : i32
    %c0_i32_1 = arith.constant 0 : i32
    return %c0_i32, %c0_i32_0 : i32, i32
  }
  func.func @transform_18(%arg0: i32) -> (i32, i32) {
    %c0_i32 = arith.constant 0 : i32
    %c0_i32_0 = arith.constant 0 : i32
    %c0_i32_1 = arith.constant 0 : i32
    return %c0_i32, %c0_i32_0 : i32, i32
  }
  func.func @transform_19(%arg0: i32) -> (i32, i32) {
    %c0_i32 = arith.constant 0 : i32
    %c0_i32_0 = arith.constant 0 : i32
    %c0_i32_1 = arith.constant 0 : i32
    return %c0_i32, %c0_i32_0 : i32, i32
  }
  func.func @transform_20(%arg0: i32) -> (i32, i32) {
    %c0_i32 = arith.constant 0 : i32
    %c0_i32_0 = arith.constant 0 : i32
    %c0_i32_1 = arith.constant 0 : i32
    return %c0_i32, %c0_i32_0 : i32, i32
  }
  func.func @transform_21(%arg0: i32) -> (i32, i32) {
    %c0_i32 = arith.constant 0 : i32
    %c0_i32_0 = arith.constant 0 : i32
    %c0_i32_1 = arith.constant 0 : i32
    return %c0_i32, %c0_i32_0 : i32, i32
  }
  func.func @transform_22(%arg0: i32) -> (i32, i32) {
    %c0_i32 = arith.constant 0 : i32
    %c0_i32_0 = arith.constant 0 : i32
    %c0_i32_1 = arith.constant 0 : i32
    return %c0_i32, %c0_i32_0 : i32, i32
  }
  func.func @transform_23(%arg0: i32) -> (i32, i32) {
    %c0_i32 = arith.constant 0 : i32
    %c0_i32_0 = arith.constant 0 : i32
    %c0_i32_1 = arith.constant 0 : i32
    return %c0_i32, %c0_i32_0 : i32, i32
  }
}

</mosaic_0001>

<llo_original>
// kernel: tpu_custom_call.1
$region0: #{tpu_custom_call.1}
  #allocation0 [shape = 'u32[]', space=smem, size = 0x4, offset = 0x4, fixed_abs, tag = 'smem constant byte address 0x4 - core index']
  #allocation1 [shape = 'u32[144,128]{1,0:T(1,128)}', space=vmem, size = 0x12000, scoped, tag = 'internal scratch']
  #allocation2 [shape = 'f32[32,768]{1,0:T(8,128)}', space=vmem, size = 0x18000, scoped, tag = 'scratch operand']
  #allocation3 [shape = 'f32[288,512]{1,0:T(8,128)}', space=vmem, size = 0x90000, scoped, tag = 'scratch operand']
  %s0 = inlined_call_operand.hbm [shape: f32[4,512], index: 0, kind: input, shape index: {}]
  %s1 = inlined_call_operand.hbm [shape: f32[8,128], index: 1, kind: input, shape index: {}]
  %s2 = inlined_call_operand.hbm [shape: f32[16,32], index: 2, kind: input, shape index: {}]
  %s3 = inlined_call_operand.vmem [shape: f32[32,8], index: 3, kind: input, shape index: {}]
  %s4 = inlined_call_operand.hbm [shape: f32[8,32], index: 4, kind: input, shape index: {}]
  %s5 = inlined_call_operand.hbm [shape: f32[8,16], index: 5, kind: input, shape index: {}]
  %s6 = inlined_call_operand.hbm [shape: f32[8,8], index: 6, kind: input, shape index: {}]
  %s7 = inlined_call_operand.vmem [shape: f32[8,4], index: 7, kind: input, shape index: {}]
  %s8 = inlined_call_operand.hbm [shape: f32[8,72], index: 8, kind: input, shape index: {}]
  %s9 = inlined_call_operand.hbm [shape: f32[8,72], index: 9, kind: input, shape index: {}]
  %s10 = inlined_call_operand.hbm [shape: f32[8,72], index: 10, kind: input, shape index: {}]
  %s11 = inlined_call_operand.vmem [shape: f32[8,288], index: 11, kind: input, shape index: {}]
  %s12 = inlined_call_operand.vmem [shape: f32[8,1], index: 12, kind: input, shape index: {}]
  %s13 = inlined_call_operand.vmem [shape: f32[7,8,1], index: 13, kind: input, shape index: {}]
  %s14 = inlined_call_operand.vmem [shape: f32[7,8,1], index: 14, kind: input, shape index: {}]
  %s15 = inlined_call_operand.hbm [shape: f32[8,32], index: 15, kind: input, shape index: {}]
  %s16 = inlined_call_operand.hbm [shape: f32[32,128], index: 16, kind: input, shape index: {}]
  %s17 = inlined_call_operand.hbm [shape: f32[128,512], index: 17, kind: input, shape index: {}]
  %s18 = inlined_call_operand.vmem [shape: f32[32,512], index: 18, kind: input, shape index: {}]
  %s19 = inlined_call_operand.hbm [shape: f32[8,512], index: 19, kind: input, shape index: {}]
  %s20 = inlined_call_operand.hbm [shape: f32[9,32], index: 20, kind: input, shape index: {}]
  %s21 = inlined_call_operand.hbm [shape: f32[9,128], index: 21, kind: input, shape index: {}]
  %s22 = inlined_call_operand.vmem [shape: f32[9,512], index: 22, kind: input, shape index: {}]
  %s23 = inlined_call_operand.hbm [shape: f32[8,512], index: 23, kind: output, shape index: {}]
  %s24 = sld [smem:[#allocation0]]
  $region162: #{tpu_custom_call.1} parent=0
    _
  %s26 = ssub.s32 1, %s24
  %s27 = scalar_select 0, %s26, %s24
  $region1: #{tpu_custom_call.1} parent=0
    #allocation4 [shape = 'u8[8192]{0}', space=vmem, size = 0x2000, scoped, tag = 'input window, operand 0, single buffered']
    #allocation5 [shape = 's32[1]{0}', space=sflag, size = 0x4, scoped, tag = 'scoped memory for tpu_custom_call.1']
    #allocation6 [shape = 's32[1]{0}', space=sflag, size = 0x4, scoped, tag = 'scoped memory for tpu_custom_call.1']
    #allocation7 [shape = 'u8[4096]{0}', space=vmem, size = 0x1000, scoped, tag = 'input window, operand 1, single buffered']
    #allocation8 [shape = 's32[1]{0}', space=sflag, size = 0x4, scoped, tag = 'scoped memory for tpu_custom_call.1']
    #allocation9 [shape = 'u8[8192]{0}', space=vmem, size = 0x2000, scoped, tag = 'input window, operand 2, single buffered']
    #allocation10 [shape = 'u8[4096]{0}', space=vmem, size = 0x1000, scoped, tag = 'input window, operand 4, single buffered']
    #allocation11 [shape = 's32[1]{0}', space=sflag, size = 0x4, scoped, tag = 'scoped memory for tpu_custom_call.1']
    #allocation12 [shape = 'u8[4096]{0}', space=vmem, size = 0x1000, scoped, tag = 'input window, operand 5, single buffered']
    #allocation13 [shape = 'u8[4096]{0}', space=vmem, size = 0x1000, scoped, tag = 'input window, operand 6, single buffered']
    #allocation14 [shape = 's32[1]{0}', space=sflag, size = 0x4, scoped, tag = 'scoped memory for tpu_custom_call.1']
    #allocation15 [shape = 'u8[4096]{0}', space=vmem, size = 0x1000, scoped, tag = 'input window, operand 8, single buffered']
    #allocation16 [shape = 'u8[4096]{0}', space=vmem, size = 0x1000, scoped, tag = 'input window, operand 9, single buffered']
    #allocation17 [shape = 's32[1]{0}', space=sflag, size = 0x4, scoped, tag = 'scoped memory for tpu_custom_call.1']
    #allocation18 [shape = 'u8[4096]{0}', space=vmem, size = 0x1000, scoped, tag = 'input window, operand 10, single buffered']
    #allocation19 [shape = 'u8[4096]{0}', space=vmem, size = 0x1000, scoped, tag = 'input window, operand 15, single buffered']
    #allocation20 [shape = 's32[1]{0}', space=sflag, size = 0x4, scoped, tag = 'scoped memory for tpu_custom_call.1']
    #allocation21 [shape = 'u8[16384]{0}', space=vmem, size = 0x4000, scoped, tag = 'input window, operand 16, single buffered']
    #allocation22 [shape = 'u8[262144]{0}', space=vmem, size = 0x40000, scoped, tag = 'input window, operand 17, single buffered']
    #allocation23 [shape = 's32[1]{0}', space=sflag, size = 0x4, scoped, tag = 'scoped memory for tpu_custom_call.1']
    #allocation24 [shape = 'u8[16384]{0}', space=vmem, size = 0x4000, scoped, tag = 'input window, operand 19, single buffered']
    #allocation25 [shape = 'u8[8192]{0}', space=vmem, size = 0x2000, scoped, tag = 'input window, operand 20, single buffered']
    #allocation26 [shape = 's32[1]{0}', space=sflag, size = 0x4, scoped, tag = 'scoped memory for tpu_custom_call.1']
    #allocation27 [shape = 'u8[8192]{0}', space=vmem, size = 0x2000, scoped, tag = 'input window, operand 21, single buffered']
    #allocation28 [shape = 'u8[16384]{0}', space=vmem, size = 0x4000, scoped, tag = 'output window, operand 0, single buffered']
    %28 = vsyncpa [#allocation5], 0
    %29 = vsyncpa [#allocation8], 0
    %30 = vsyncpa [#allocation11], 0
    %31 = vsyncpa [#allocation14], 0
    %32 = vsyncpa [#allocation17], 0
    %33 = vsyncpa [#allocation20], 0
    %34 = vsyncpa [#allocation23], 0
    %35 = vsyncpa [#allocation26], 0
    %36 = vsyncpa [#allocation6], 0
    // Predicated region
    $region2: #{tpu_custom_call.1} parent=1 // pred_check
      _
    $region3: #{tpu_custom_call.1} parent=1 // pred_check_branch
      %38 = sbr.rel (0) target = $region5
    $region4: #{tpu_custom_call.1} parent=1 // pred_region
      %s40 = ssub.s32 256, 256
      %41 = vsyncadd [#allocation5], %s40
      %s43 = sshll.u32 [#allocation4], 4
      %s44 = int_to_ptr.vmem [resolvable:$true] %s43
      %46 = dma.hbm_to_vmem [thread:$0]  %s0, 256, %s44, [#allocation5]
    $region5: #{tpu_custom_call.1} parent=1 // pred_fallthru
      _
    // Predicated region
    $region6: #{tpu_custom_call.1} parent=1 // pred_check
      _
    $region7: #{tpu_custom_call.1} parent=1 // pred_check_branch
      %48 = sbr.rel (0) target = $region9
    $region8: #{tpu_custom_call.1} parent=1 // pred_region
      %s50 = ssub.s32 128, 128
      %51 = vsyncadd [#allocation8], %s50
      %s53 = sshll.u32 [#allocation7], 4
      %s54 = int_to_ptr.vmem [resolvable:$true] %s53
      %56 = dma.hbm_to_vmem [thread:$0]  %s1, 128, %s54, [#allocation8]
    $region9: #{tpu_custom_call.1} parent=1 // pred_fallthru
      _
    // Predicated region
    $region10: #{tpu_custom_call.1} parent=1 // pred_check
      _
    $region11: #{tpu_custom_call.1} parent=1 // pred_check_branch
      %58 = sbr.rel (0) target = $region13
    $region12: #{tpu_custom_call.1} parent=1 // pred_region
      %s60 = ssub.s32 256, 256
      %61 = vsyncadd [#allocation8], %s60
      %s62 = sshll.u32 [#allocation9], 4
      %s63 = int_to_ptr.vmem [resolvable:$true] %s62
      %68 = dma.hbm_to_vmem [thread:$0]  %s2, 256, %s63, [#allocation8], 128, 128, 8
    $region13: #{tpu_custom_call.1} parent=1 // pred_fallthru
      _
    // Predicated region
    $region14: #{tpu_custom_call.1} parent=1 // pred_check
      _
    $region15: #{tpu_custom_call.1} parent=1 // pred_check_branch
      %70 = sbr.rel (0) target = $region17
    $region16: #{tpu_custom_call.1} parent=1 // pred_region
      _
    $region17: #{tpu_custom_call.1} parent=1 // pred_fallthru
      _
    // Predicated region
    $region18: #{tpu_custom_call.1} parent=1 // pred_check
      _
    $region19: #{tpu_custom_call.1} parent=1 // pred_check_branch
      %72 = sbr.rel (0) target = $region21
    $region20: #{tpu_custom_call.1} parent=1 // pred_region
      %s74 = ssub.s32 128, 128
      %75 = vsyncadd [#allocation11], %s74
      %s77 = sshll.u32 [#allocation10], 4
      %s78 = int_to_ptr.vmem [resolvable:$true] %s77
      %80 = dma.hbm_to_vmem [thread:$0]  %s4, 128, %s78, [#allocation11]
    $region21: #{tpu_custom_call.1} parent=1 // pred_fallthru
      _
    // Predicated region
    $region22: #{tpu_custom_call.1} parent=1 // pred_check
      _
    $region23: #{tpu_custom_call.1} parent=1 // pred_check_branch
      %82 = sbr.rel (0) target = $region25
    $region24: #{tpu_custom_call.1} parent=1 // pred_region
      %s84 = ssub.s32 128, 128
      %85 = vsyncadd [#allocation11], %s84
      %s87 = sshll.u32 [#allocation12], 4
      %s88 = int_to_ptr.vmem [resolvable:$true] %s87
      %90 = dma.hbm_to_vmem [thread:$0]  %s5, 128, %s88, [#allocation11]
    $region25: #{tpu_custom_call.1} parent=1 // pred_fallthru
      _
    // Predicated region
    $region26: #{tpu_custom_call.1} parent=1 // pred_check
      _
    $region27: #{tpu_custom_call.1} parent=1 // pred_check_branch
      %92 = sbr.rel (0) target = $region29
    $region28: #{tpu_custom_call.1} parent=1 // pred_region
      %s94 = ssub.s32 128, 128
      %95 = vsyncadd [#allocation14], %s94
      %s97 = sshll.u32 [#allocation13], 4
      %s98 = int_to_ptr.vmem [resolvable:$true] %s97
      %100 = dma.hbm_to_vmem [thread:$0]  %s6, 128, %s98, [#allocation14]
    $region29: #{tpu_custom_call.1} parent=1 // pred_fallthru
      _
    // Predicated region
    $region30: #{tpu_custom_call.1} parent=1 // pred_check
      _
    $region31: #{tpu_custom_call.1} parent=1 // pred_check_branch
      %102 = sbr.rel (0) target = $region33
    $region32: #{tpu_custom_call.1} parent=1 // pred_region
      _
    $region33: #{tpu_custom_call.1} parent=1 // pred_fallthru
      _
    // Predicated region
    $region34: #{tpu_custom_call.1} parent=1 // pred_check
      _
    $region35: #{tpu_custom_call.1} parent=1 // pred_check_branch
      %104 = sbr.rel (0) target = $region37
    $region36: #{tpu_custom_call.1} parent=1 // pred_region
      %s106 = ssub.s32 128, 128
      %107 = vsyncadd [#allocation14], %s106
      %s109 = sshll.u32 [#allocation15], 4
      %s110 = int_to_ptr.vmem [resolvable:$true] %s109
      %112 = dma.hbm_to_vmem [thread:$0]  %s8, 128, %s110, [#allocation14]
    $region37: #{tpu_custom_call.1} parent=1 // pred_fallthru
      _
    // Predicated region
    $region38: #{tpu_custom_call.1} parent=1 // pred_check
      _
    $region39: #{tpu_custom_call.1} parent=1 // pred_check_branch
      %114 = sbr.rel (0) target = $region41
    $region40: #{tpu_custom_call.1} parent=1 // pred_region
      %s116 = ssub.s32 128, 128
      %117 = vsyncadd [#allocation17], %s116
      %s119 = sshll.u32 [#allocation16], 4
      %s120 = int_to_ptr.vmem [resolvable:$true] %s119
      %122 = dma.hbm_to_vmem [thread:$0]  %s9, 128, %s120, [#allocation17]
    $region41: #{tpu_custom_call.1} parent=1 // pred_fallthru
      _
    // Predicated region
    $region42: #{tpu_custom_call.1} parent=1 // pred_check
      _
    $region43: #{tpu_custom_call.1} parent=1 // pred_check_branch
      %124 = sbr.rel (0) target = $region45
    $region44: #{tpu_custom_call.1} parent=1 // pred_region
      %s126 = ssub.s32 128, 128
      %127 = vsyncadd [#allocation17], %s126
      %s129 = sshll.u32 [#allocation18], 4
      %s130 = int_to_ptr.vmem [resolvable:$true] %s129
      %132 = dma.hbm_to_vmem [thread:$0]  %s10, 128, %s130, [#allocation17]
    $region45: #{tpu_custom_call.1} parent=1 // pred_fallthru
      _
    // Predicated region
    $region46: #{tpu_custom_call.1} parent=1 // pred_check
      _
    $region47: #{tpu_custom_call.1} parent=1 // pred_check_branch
      %134 = sbr.rel (0) target = $region49
    $region48: #{tpu_custom_call.1} parent=1 // pred_region
      _
    $region49: #{tpu_custom_call.1} parent=1 // pred_fallthru
      _
    // Predicated region
    $region50: #{tpu_custom_call.1} parent=1 // pred_check
      _
    $region51: #{tpu_custom_call.1} parent=1 // pred_check_branch
      %136 = sbr.rel (0) target = $region53
    $region52: #{tpu_custom_call.1} parent=1 // pred_region
      _
    $region53: #{tpu_custom_call.1} parent=1 // pred_fallthru
      _
    // Predicated region
    $region54: #{tpu_custom_call.1} parent=1 // pred_check
      _
    $region55: #{tpu_custom_call.1} parent=1 // pred_check_branch
      %138 = sbr.rel (0) target = $region57
    $region56: #{tpu_custom_call.1} parent=1 // pred_region
      _
    $region57: #{tpu_custom_call.1} parent=1 // pred_fallthru
      _
    // Predicated region
    $region58: #{tpu_custom_call.1} parent=1 // pred_check
      _
    $region59: #{tpu_custom_call.1} parent=1 // pred_check_branch
      %140 = sbr.rel (0) target = $region61
    $region60: #{tpu_custom_call.1} parent=1 // pred_region
      _
    $region61: #{tpu_custom_call.1} parent=1 // pred_fallthru
      _
    // Predicated region
    $region62: #{tpu_custom_call.1} parent=1 // pred_check
      _
    $region63: #{tpu_custom_call.1} parent=1 // pred_check_branch
      %142 = sbr.rel (0) target = $region65
    $region64: #{tpu_custom_call.1} parent=1 // pred_region
      %s144 = ssub.s32 128, 128
      %145 = vsyncadd [#allocation20], %s144
      %s147 = sshll.u32 [#allocation19], 4
      %s148 = int_to_ptr.vmem [resolvable:$true] %s147
      %150 = dma.hbm_to_vmem [thread:$0]  %s15, 128, %s148, [#allocation20]
    $region65: #{tpu_custom_call.1} parent=1 // pred_fallthru
      _
    // Predicated region
    $region66: #{tpu_custom_call.1} parent=1 // pred_check
      _
    $region67: #{tpu_custom_call.1} parent=1 // pred_check_branch
      %152 = sbr.rel (0) target = $region69
    $region68: #{tpu_custom_call.1} parent=1 // pred_region
      %s154 = ssub.s32 512, 512
      %155 = vsyncadd [#allocation20], %s154
      %s156 = sshll.u32 [#allocation21], 4
      %s157 = int_to_ptr.vmem [resolvable:$true] %s156
      %162 = dma.hbm_to_vmem [thread:$0]  %s16, 512, %s157, [#allocation20], 128, 128, 8
    $region69: #{tpu_custom_call.1} parent=1 // pred_fallthru
      _
    // Predicated region
    $region70: #{tpu_custom_call.1} parent=1 // pred_check
      _
    $region71: #{tpu_custom_call.1} parent=1 // pred_check_branch
      %164 = sbr.rel (0) target = $region73
    $region72: #{tpu_custom_call.1} parent=1 // pred_region
      %s166 = ssub.s32 8192, 8192
      %167 = vsyncadd [#allocation23], %s166
      %s168 = sshll.u32 [#allocation22], 4
      %s169 = int_to_ptr.vmem [resolvable:$true] %s168
      %174 = dma.hbm_to_vmem [thread:$0]  %s17, 8192, %s169, [#allocation23], 512, 512, 32
    $region73: #{tpu_custom_call.1} parent=1 // pred_fallthru
      _
    // Predicated region
    $region74: #{tpu_custom_call.1} parent=1 // pred_check
      _
    $region75: #{tpu_custom_call.1} parent=1 // pred_check_branch
      %176 = sbr.rel (0) target = $region77
    $region76: #{tpu_custom_call.1} parent=1 // pred_region
      _
    $region77: #{tpu_custom_call.1} parent=1 // pred_fallthru
      _
    // Predicated region
    $region78: #{tpu_custom_call.1} parent=1 // pred_check
      _
    $region79: #{tpu_custom_call.1} parent=1 // pred_check_branch
      %178 = sbr.rel (0) target = $region81
    $region80: #{tpu_custom_call.1} parent=1 // pred_region
      %s180 = ssub.s32 512, 512
      %181 = vsyncadd [#allocation23], %s180
      %s183 = sshll.u32 [#allocation24], 4
      %s184 = int_to_ptr.vmem [resolvable:$true] %s183
      %186 = dma.hbm_to_vmem [thread:$0]  %s19, 512, %s184, [#allocation23]
    $region81: #{tpu_custom_call.1} parent=1 // pred_fallthru
      _
    // Predicated region
    $region82: #{tpu_custom_call.1} parent=1 // pred_check
      _
    $region83: #{tpu_custom_call.1} parent=1 // pred_check_branch
      %188 = sbr.rel (0) target = $region85
    $region84: #{tpu_custom_call.1} parent=1 // pred_region
      %s190 = ssub.s32 256, 256
      %191 = vsyncadd [#allocation26], %s190
      %s192 = sshll.u32 [#allocation25], 4
      %s193 = int_to_ptr.vmem [resolvable:$true] %s192
      %198 = dma.hbm_to_vmem [thread:$0]  %s20, 256, %s193, [#allocation26], 128, 128, 8
    $region85: #{tpu_custom_call.1} parent=1 // pred_fallthru
      _
    // Predicated region
    $region86: #{tpu_custom_call.1} parent=1 // pred_check
      _
    $region87: #{tpu_custom_call.1} parent=1 // pred_check_branch
      %200 = sbr.rel (0) target = $region89
    $region88: #{tpu_custom_call.1} parent=1 // pred_region
      %s202 = ssub.s32 256, 256
      %203 = vsyncadd [#allocation26], %s202
      %s204 = sshll.u32 [#allocation27], 4
      %s205 = int_to_ptr.vmem [resolvable:$true] %s204
      %210 = dma.hbm_to_vmem [thread:$0]  %s21, 256, %s205, [#allocation26], 128, 128, 8
    $region89: #{tpu_custom_call.1} parent=1 // pred_fallthru
      _
    // Predicated region
    $region90: #{tpu_custom_call.1} parent=1 // pred_check
      _
    $region91: #{tpu_custom_call.1} parent=1 // pred_check_branch
      %212 = sbr.rel (0) target = $region93
    $region92: #{tpu_custom_call.1} parent=1 // pred_region
      _
    $region93: #{tpu_custom_call.1} parent=1 // pred_fallthru
      _
    // Predicated region
    $region94: #{tpu_custom_call.1} parent=1 // pred_check
      _
    $region95: #{tpu_custom_call.1} parent=1 // pred_check_branch
      %214 = sbr.rel (0) target = $region97
    $region96: #{tpu_custom_call.1} parent=1 // pred_region
      %215 = dma.done [#allocation5], 256
    $region97: #{tpu_custom_call.1} parent=1 // pred_fallthru
      _
    // Predicated region
    $region98: #{tpu_custom_call.1} parent=1 // pred_check
      _
    $region99: #{tpu_custom_call.1} parent=1 // pred_check_branch
      %217 = sbr.rel (0) target = $region101
    $region100: #{tpu_custom_call.1} parent=1 // pred_region
      %218 = dma.done [#allocation8], 128
    $region101: #{tpu_custom_call.1} parent=1 // pred_fallthru
      _
    // Predicated region
    $region102: #{tpu_custom_call.1} parent=1 // pred_check
      _
    $region103: #{tpu_custom_call.1} parent=1 // pred_check_branch
      %220 = sbr.rel (0) target = $region105
    $region104: #{tpu_custom_call.1} parent=1 // pred_region
      %221 = dma.done [#allocation8], 256
    $region105: #{tpu_custom_call.1} parent=1 // pred_fallthru
      _
    // Predicated region
    $region106: #{tpu_custom_call.1} parent=1 // pred_check
      _
    $region107: #{tpu_custom_call.1} parent=1 // pred_check_branch
      %223 = sbr.rel (0) target = $region109
    $region108: #{tpu_custom_call.1} parent=1 // pred_region
      %224 = dma.done [#allocation11], 128
    $region109: #{tpu_custom_call.1} parent=1 // pred_fallthru
      _
    // Predicated region
    $region110: #{tpu_custom_call.1} parent=1 // pred_check
      _
    $region111: #{tpu_custom_call.1} parent=1 // pred_check_branch
      %226 = sbr.rel (0) target = $region113
    $region112: #{tpu_custom_call.1} parent=1 // pred_region
      %227 = dma.done [#allocation11], 128
    $region113: #{tpu_custom_call.1} parent=1 // pred_fallthru
      _
    // Predicated region
    $region114: #{tpu_custom_call.1} parent=1 // pred_check
      _
    $region115: #{tpu_custom_call.1} parent=1 // pred_check_branch
      %229 = sbr.rel (0) target = $region117
    $region116: #{tpu_custom_call.1} parent=1 // pred_region
      %230 = dma.done [#allocation14], 128
    $region117: #{tpu_custom_call.1} parent=1 // pred_fallthru
      _
    // Predicated region
    $region118: #{tpu_custom_call.1} parent=1 // pred_check
      _
    $region119: #{tpu_custom_call.1} parent=1 // pred_check_branch
      %232 = sbr.rel (0) target = $region121
    $region120: #{tpu_custom_call.1} parent=1 // pred_region
      %233 = dma.done [#allocation14], 128
    $region121: #{tpu_custom_call.1} parent=1 // pred_fallthru
      _
    // Predicated region
    $region122: #{tpu_custom_call.1} parent=1 // pred_check
      _
    $region123: #{tpu_custom_call.1} parent=1 // pred_check_branch
      %235 = sbr.rel (0) target = $region125
    $region124: #{tpu_custom_call.1} parent=1 // pred_region
      %236 = dma.done [#allocation17], 128
    $region125: #{tpu_custom_call.1} parent=1 // pred_fallthru
      _
    // Predicated region
    $region126: #{tpu_custom_call.1} parent=1 // pred_check
      _
    $region127: #{tpu_custom_call.1} parent=1 // pred_check_branch
      %238 = sbr.rel (0) target = $region129
    $region128: #{tpu_custom_call.1} parent=1 // pred_region
      %239 = dma.done [#allocation17], 128
    $region129: #{tpu_custom_call.1} parent=1 // pred_fallthru
      _
    // Predicated region
    $region130: #{tpu_custom_call.1} parent=1 // pred_check
      _
    $region131: #{tpu_custom_call.1} parent=1 // pred_check_branch
      %241 = sbr.rel (0) target = $region133
    $region132: #{tpu_custom_call.1} parent=1 // pred_region
      %242 = dma.done [#allocation20], 128
    $region133: #{tpu_custom_call.1} parent=1 // pred_fallthru
      _
    // Predicated region
    $region134: #{tpu_custom_call.1} parent=1 // pred_check
      _
    $region135: #{tpu_custom_call.1} parent=1 // pred_check_branch
      %244 = sbr.rel (0) target = $region137
    $region136: #{tpu_custom_call.1} parent=1 // pred_region
      %245 = dma.done [#allocation20], 512
    $region137: #{tpu_custom_call.1} parent=1 // pred_fallthru
      _
    // Predicated region
    $region138: #{tpu_custom_call.1} parent=1 // pred_check
      _
    $region139: #{tpu_custom_call.1} parent=1 // pred_check_branch
      %247 = sbr.rel (0) target = $region141
    $region140: #{tpu_custom_call.1} parent=1 // pred_region
      %248 = dma.done [#allocation23], 8192
    $region141: #{tpu_custom_call.1} parent=1 // pred_fallthru
      _
    // Predicated region
    $region142: #{tpu_custom_call.1} parent=1 // pred_check
      _
    $region143: #{tpu_custom_call.1} parent=1 // pred_check_branch
      %250 = sbr.rel (0) target = $region145
    $region144: #{tpu_custom_call.1} parent=1 // pred_region
      %251 = dma.done [#allocation23], 512
    $region145: #{tpu_custom_call.1} parent=1 // pred_fallthru
      _
    // Predicated region
    $region146: #{tpu_custom_call.1} parent=1 // pred_check
      _
    $region147: #{tpu_custom_call.1} parent=1 // pred_check_branch
      %253 = sbr.rel (0) target = $region149
    $region148: #{tpu_custom_call.1} parent=1 // pred_region
      %254 = dma.done [#allocation26], 256
    $region149: #{tpu_custom_call.1} parent=1 // pred_fallthru
      _
    // Predicated region
    $region150: #{tpu_custom_call.1} parent=1 // pred_check
      _
    $region151: #{tpu_custom_call.1} parent=1 // pred_check_branch
      %256 = sbr.rel (0) target = $region153
    $region152: #{tpu_custom_call.1} parent=1 // pred_region
      %257 = dma.done [#allocation26], 256
    $region153: #{tpu_custom_call.1} parent=1 // pred_fallthru
      _
    %258 = vst [vmem:[#allocation2] sm:$0xff] 0.0
    %259 = vst [vmem:[#allocation2 + $0x8] sm:$0xff] 0.0
    %260 = vst [vmem:[#allocation2 + $0x10] sm:$0xff] 0.0
    %261 = vst [vmem:[#allocation2 + $0x18] sm:$0xff] 0.0
    %262 = vst [vmem:[#allocation2 + $0x20] sm:$0xff] 0.0
    %263 = vst [vmem:[#allocation2 + $0x28] sm:$0xff] 0.0
    %264 = vst [vmem:[#allocation2 + $0x30] sm:$0xff] 0.0
    %265 = vst [vmem:[#allocation2 + $0x38] sm:$0xff] 0.0
    %266 = vst [vmem:[#allocation2 + $0x40] sm:$0xff] 0.0
    %267 = vst [vmem:[#allocation2 + $0x48] sm:$0xff] 0.0
    %268 = vst [vmem:[#allocation2 + $0x50] sm:$0xff] 0.0
    %269 = vst [vmem:[#allocation2 + $0x58] sm:$0xff] 0.0
    %270 = vst [vmem:[#allocation2 + $0x60] sm:$0xff] 0.0
    %271 = vst [vmem:[#allocation2 + $0x68] sm:$0xff] 0.0
    %272 = vst [vmem:[#allocation2 + $0x70] sm:$0xff] 0.0
    %273 = vst [vmem:[#allocation2 + $0x78] sm:$0xff] 0.0
    %274 = vst [vmem:[#allocation2 + $0x80] sm:$0xff] 0.0
    %275 = vst [vmem:[#allocation2 + $0x88] sm:$0xff] 0.0
    %276 = vst [vmem:[#allocation2 + $0x90] sm:$0xff] 0.0
    %277 = vst [vmem:[#allocation2 + $0x98] sm:$0xff] 0.0
    %278 = vst [vmem:[#allocation2 + $0xa0] sm:$0xff] 0.0
    %279 = vst [vmem:[#allocation2 + $0xa8] sm:$0xff] 0.0
    %280 = vst [vmem:[#allocation2 + $0xb0] sm:$0xff] 0.0
    %281 = vst [vmem:[#allocation2 + $0xb8] sm:$0xff] 0.0
    %v282 = vld [vmem:[#allocation10] sm:$0xff]
    %v283 = vld [vmem:[%s3] sm:$0xff]
    %v284 = vld [vmem:[%s3 + $0x8] sm:$0xff]
    %v285 = vld [vmem:[%s3 + $0x10] sm:$0xff]
    %v286 = vld [vmem:[%s3 + $0x18] sm:$0xff]
    %vm287 = vcmask 261120
    %v289 = vsel %vm287, %v282, 0
    %291 = vmatprep.subr.mxu0 0.0
    %292 = vmatpush1.msra.mxu0 0.0
    %293 = vmatprep.subr.mxu0 0.0
    %294 = vmatpush1.msra.mxu0 0.0
    %295 = vmatprep.subr.mxu0 0.0
    %296 = vmatpush1.msra.mxu0 0.0
    %297 = vmatprep.subr.mxu0 0.0
    %298 = vmatpush1.msra.mxu0 0.0
    %299 = vmatprep.subr.mxu0 0.0
    %300 = vmatpush1.msra.mxu0 0.0
    %301 = vmatprep.subr.mxu0 0.0
    %302 = vmatpush1.msra.mxu0 0.0
    %303 = vmatprep.subr.mxu0 0.0
    %304 = vmatpush1.msra.mxu0 0.0
    %305 = vmatprep.subr.mxu0 0.0
    %306 = vmatpush1.msra.mxu0 0.0
    %307 = vmatprep.subr.mxu0 0.0
    %308 = vmatpush1.msra.mxu0 0.0
    %309 = vmatprep.subr.mxu0 0.0
    %310 = vmatpush1.msra.mxu0 0.0
    %311 = vmatprep.subr.mxu0 0.0
    %312 = vmatpush1.msra.mxu0 0.0
    %313 = vmatprep.subr.mxu0 0.0
    %314 = vmatpush1.msra.mxu0 0.0
    %315 = vmatprep.subr.mxu0 0.0
    %316 = vmatpush1.msra.mxu0 %v286
    %317 = vmatprep.subr.mxu0 0.0
    %318 = vmatpush1.msra.mxu0 %v285
    %319 = vmatprep.subr.mxu0 0.0
    %320 = vmatpush1.msra.mxu0 %v284
    %321 = vmatprep.subr.mxu0 0.0
    %322 = vmatpush1.msra.mxu0 %v283
    %323 = vmatprep.subr.mxu0 0.0
    %324 = vmatpush2.msra.mxu0 0.0
    %325 = vmatprep.subr.mxu0 0.0
    %326 = vmatpush2.msra.mxu0 0.0
    %327 = vmatprep.subr.mxu0 0.0
    %328 = vmatpush2.msra.mxu0 0.0
    %329 = vmatprep.subr.mxu0 0.0
    %330 = vmatpush2.msra.mxu0 0.0
    %331 = vmatprep.subr.mxu0 0.0
    %332 = vmatpush2.msra.mxu0 0.0
    %333 = vmatprep.subr.mxu0 0.0
    %334 = vmatpush2.msra.mxu0 0.0
    %335 = vmatprep.subr.mxu0 0.0
    %336 = vmatpush2.msra.mxu0 0.0
    %337 = vmatprep.subr.mxu0 0.0
    %338 = vmatpush2.msra.mxu0 0.0
    %339 = vmatprep.subr.mxu0 0.0
    %340 = vmatpush2.msra.mxu0 0.0
    %341 = vmatprep.subr.mxu0 0.0
    %342 = vmatpush2.msra.mxu0 0.0
    %343 = vmatprep.subr.mxu0 0.0
    %344 = vmatpush2.msra.mxu0 0.0
    %345 = vmatprep.subr.mxu0 0.0
    %346 = vmatpush2.msra.mxu0 0.0
    %347 = vmatprep.subr.mxu0 0.0
    %348 = vmatpush2.msra.mxu0 0.0
    %349 = vmatprep.subr.mxu0 0.0
    %350 = vmatpush2.msra.mxu0 0.0
    %351 = vmatprep.subr.mxu0 0.0
    %352 = vmatpush2.msra.mxu0 0.0
    %353 = vmatprep.subr.mxu0 0.0
    %354 = vmatpush2.msra.mxu0 0.0
    %355 = vmatprep.mubr.f32.mxu0 0.0
    %356 = vmatmul.mubr.f32.gmra.mxu0 %v289
    %v357 = vpop.f32.mrf.mxu0
    %v358 = vadd.f32 0.0, %v357
    %v359 = vpop.f32.mrf.mxu0
    %360 = vdwg.mxu0
    %vm361 = vcmask 64512
    %v362 = vsel %vm361, %v358, 0.0
    %363 = vadd.xlane.f32.xlu0 %v362
    %v364 = vpop.xlane.xlu0 %363
    %v365 = vmul.f32 %v358, %v358
    %v366 = vsel %vm361, %v365, 0.0
    %367 = vadd.xlane.f32.xlu0 %v366
    %v368 = vpop.xlane.xlu0 %367
    %v369 = vmul.f32 %v364, 0.125
    %v370 = vmul.f32 %v368, 0.125
    %v371 = vmul.f32 %v369, %v369
    %v372 = vsub.f32 %v370, %v371
    %v373 = vmax.f32 %v372, 0.0
    %v374 = vld [vmem:[%s13] sm:$0xff]
    %v375 = vadd.f32 %v373, 1e-05
    %v376 = vrsqrt.pop %v375
    %v377 = vmul.f32 %v374, %v376
    %v378 = vld [vmem:[%s14] sm:$0xff]
    %v379 = vmul.f32 %v369, %v377
    %v380 = vsub.f32 %v378, %v379
    %382 = vset.pattern.permute.xlu0 0
    %383 = vperm.xlu0 %382, %v377
    %v384 = vpop.permute.xlu0 %383
    %v386 = vmul.f32 %v358, %v384
    %388 = vset.pattern.permute.xlu0 0
    %389 = vperm.xlu0 %388, %v380
    %v390 = vpop.permute.xlu0 %389
    %v392 = vadd.f32 %v386, %v390
    %v393 = vmax.f32 %v392, 0.0
    %v394 = vld [vmem:[#allocation12] sm:$0xff]
    %v395 = vld [vmem:[#allocation9] sm:$0xff]
    %v396 = vld [vmem:[#allocation9 + $0x8] sm:$0xff]
    %vm397 = vcmask 130048
    %v399 = vsel %vm397, %v394, 0
    %401 = vmatprep.subr.mxu0 0.0
    %402 = vmatpush1.msra.mxu0 0.0
    %403 = vmatprep.subr.mxu0 0.0
    %404 = vmatpush1.msra.mxu0 0.0
    %405 = vmatprep.subr.mxu0 0.0
    %406 = vmatpush1.msra.mxu0 0.0
    %407 = vmatprep.subr.mxu0 0.0
    %408 = vmatpush1.msra.mxu0 0.0
    %409 = vmatprep.subr.mxu0 0.0
    %410 = vmatpush1.msra.mxu0 0.0
    %411 = vmatprep.subr.mxu0 0.0
    %412 = vmatpush1.msra.mxu0 0.0
    %413 = vmatprep.subr.mxu0 0.0
    %414 = vmatpush1.msra.mxu0 0.0
    %415 = vmatprep.subr.mxu0 0.0
    %416 = vmatpush1.msra.mxu0 0.0
    %417 = vmatprep.subr.mxu0 0.0
    %418 = vmatpush1.msra.mxu0 0.0
    %419 = vmatprep.subr.mxu0 0.0
    %420 = vmatpush1.msra.mxu0 0.0
    %421 = vmatprep.subr.mxu0 0.0
    %422 = vmatpush1.msra.mxu0 0.0
    %423 = vmatprep.subr.mxu0 0.0
    %424 = vmatpush1.msra.mxu0 0.0
    %425 = vmatprep.subr.mxu0 0.0
    %426 = vmatpush1.msra.mxu0 0.0
    %427 = vmatprep.subr.mxu0 0.0
    %428 = vmatpush1.msra.mxu0 0.0
    %429 = vmatprep.subr.mxu0 0.0
    %430 = vmatpush1.msra.mxu0 %v396
    %431 = vmatprep.subr.mxu0 0.0
    %432 = vmatpush1.msra.mxu0 %v395
    %433 = vmatprep.subr.mxu0 0.0
    %434 = vmatpush2.msra.mxu0 0.0
    %435 = vmatprep.subr.mxu0 0.0
    %436 = vmatpush2.msra.mxu0 0.0
    %437 = vmatprep.subr.mxu0 0.0
    %438 = vmatpush2.msra.mxu0 0.0
    %439 = vmatprep.subr.mxu0 0.0
    %440 = vmatpush2.msra.mxu0 0.0
    %441 = vmatprep.subr.mxu0 0.0
    %442 = vmatpush2.msra.mxu0 0.0
    %443 = vmatprep.subr.mxu0 0.0
    %444 = vmatpush2.msra.mxu0 0.0
    %445 = vmatprep.subr.mxu0 0.0
    %446 = vmatpush2.msra.mxu0 0.0
    %447 = vmatprep.subr.mxu0 0.0
    %448 = vmatpush2.msra.mxu0 0.0
    %449 = vmatprep.subr.mxu0 0.0
    %450 = vmatpush2.msra.mxu0 0.0
    %451 = vmatprep.subr.mxu0 0.0
    %452 = vmatpush2.msra.mxu0 0.0
    %453 = vmatprep.subr.mxu0 0.0
    %454 = vmatpush2.msra.mxu0 0.0
    %455 = vmatprep.subr.mxu0 0.0
    %456 = vmatpush2.msra.mxu0 0.0
    %457 = vmatprep.subr.mxu0 0.0
    %458 = vmatpush2.msra.mxu0 0.0
    %459 = vmatprep.subr.mxu0 0.0
    %460 = vmatpush2.msra.mxu0 0.0
    %461 = vmatprep.subr.mxu0 0.0
    %462 = vmatpush2.msra.mxu0 0.0
    %463 = vmatprep.subr.mxu0 0.0
    %464 = vmatpush2.msra.mxu0 0.0
    %465 = vmatprep.mubr.f32.mxu0 0.0
    %466 = vmatmul.mubr.f32.gmra.mxu0 %v399
    %v467 = vpop.f32.mrf.mxu0
    %v468 = vadd.f32 0.0, %v467
    %v469 = vpop.f32.mrf.mxu0
    %470 = vdwg.mxu0
    %v471 = vsel %vm287, %v468, 0.0
    %472 = vadd.xlane.f32.xlu0 %v471
    %v473 = vpop.xlane.xlu0 %472
    %v474 = vmul.f32 %v468, %v468
    %v475 = vsel %vm287, %v474, 0.0
    %476 = vadd.xlane.f32.xlu0 %v475
    %v477 = vpop.xlane.xlu0 %476
    %v478 = vmul.f32 %v473, 0.03125
    %v479 = vmul.f32 %v477, 0.03125
    %v480 = vmul.f32 %v478, %v478
    %v481 = vsub.f32 %v479, %v480
    %v482 = vmax.f32 %v481, 0.0
    %s483 = scalar_lea.vmem %s13, 8
    %v484 = vld [vmem:[%s483] sm:$0xff]
    %v485 = vadd.f32 %v482, 1e-05
    %v486 = vrsqrt.pop %v485
    %v487 = vmul.f32 %v484, %v486
    %s488 = scalar_lea.vmem %s14, 8
    %v489 = vld [vmem:[%s488] sm:$0xff]
    %v490 = vmul.f32 %v478, %v487
    %v491 = vsub.f32 %v489, %v490
    %493 = vset.pattern.permute.xlu0 0
    %494 = vperm.xlu0 %493, %v487
    %v495 = vpop.permute.xlu0 %494
    %v497 = vmul.f32 %v468, %v495
    %499 = vset.pattern.permute.xlu0 0
    %500 = vperm.xlu0 %499, %v491
    %v501 = vpop.permute.xlu0 %500
    %v503 = vadd.f32 %v497, %v501
    %v504 = vmax.f32 %v503, 0.0
    %v505 = vld [vmem:[#allocation19] sm:$0xff]
    %v507 = vsel %vm361, %v393, 0
    %509 = vmatprep.subr.mxu0 0.0
    %510 = vmatpush1.msra.mxu0 0.0
    %511 = vmatprep.subr.mxu0 0.0
    %512 = vmatpush1.msra.mxu0 0.0
    %513 = vmatprep.subr.mxu0 0.0
    %514 = vmatpush1.msra.mxu0 0.0
    %515 = vmatprep.subr.mxu0 0.0
    %516 = vmatpush1.msra.mxu0 0.0
    %517 = vmatprep.subr.mxu0 0.0
    %518 = vmatpush1.msra.mxu0 0.0
    %519 = vmatprep.subr.mxu0 0.0
    %520 = vmatpush1.msra.mxu0 0.0
    %521 = vmatprep.subr.mxu0 0.0
    %522 = vmatpush1.msra.mxu0 0.0
    %523 = vmatprep.subr.mxu0 0.0
    %524 = vmatpush1.msra.mxu0 0.0
    %525 = vmatprep.subr.mxu0 0.0
    %526 = vmatpush1.msra.mxu0 0.0
    %527 = vmatprep.subr.mxu0 0.0
    %528 = vmatpush1.msra.mxu0 0.0
    %529 = vmatprep.subr.mxu0 0.0
    %530 = vmatpush1.msra.mxu0 0.0
    %531 = vmatprep.subr.mxu0 0.0
    %532 = vmatpush1.msra.mxu0 0.0
    %533 = vmatprep.subr.mxu0 0.0
    %534 = vmatpush1.msra.mxu0 0.0
    %535 = vmatprep.subr.mxu0 0.0
    %536 = vmatpush1.msra.mxu0 0.0
    %537 = vmatprep.subr.mxu0 0.0
    %538 = vmatpush1.msra.mxu0 0.0
    %539 = vmatprep.subr.mxu0 0.0
    %540 = vmatpush1.msra.mxu0 %v505
    %541 = vmatprep.subr.mxu0 0.0
    %542 = vmatpush2.msra.mxu0 0.0
    %543 = vmatprep.subr.mxu0 0.0
    %544 = vmatpush2.msra.mxu0 0.0
    %545 = vmatprep.subr.mxu0 0.0
    %546 = vmatpush2.msra.mxu0 0.0
    %547 = vmatprep.subr.mxu0 0.0
    %548 = vmatpush2.msra.mxu0 0.0
    %549 = vmatprep.subr.mxu0 0.0
    %550 = vmatpush2.msra.mxu0 0.0
    %551 = vmatprep.subr.mxu0 0.0
    %552 = vmatpush2.msra.mxu0 0.0
    %553 = vmatprep.subr.mxu0 0.0
    %554 = vmatpush2.msra.mxu0 0.0
    %555 = vmatprep.subr.mxu0 0.0
    %556 = vmatpush2.msra.mxu0 0.0
    %557 = vmatprep.subr.mxu0 0.0
    %558 = vmatpush2.msra.mxu0 0.0
    %559 = vmatprep.subr.mxu0 0.0
    %560 = vmatpush2.msra.mxu0 0.0
    %561 = vmatprep.subr.mxu0 0.0
    %562 = vmatpush2.msra.mxu0 0.0
    %563 = vmatprep.subr.mxu0 0.0
    %564 = vmatpush2.msra.mxu0 0.0
    %565 = vmatprep.subr.mxu0 0.0
    %566 = vmatpush2.msra.mxu0 0.0
    %567 = vmatprep.subr.mxu0 0.0
    %568 = vmatpush2.msra.mxu0 0.0
    %569 = vmatprep.subr.mxu0 0.0
    %570 = vmatpush2.msra.mxu0 0.0
    %571 = vmatprep.subr.mxu0 0.0
    %572 = vmatpush2.msra.mxu0 0.0
    %573 = vmatprep.mubr.f32.mxu0 0.0
    %574 = vmatmul.mubr.f32.gmra.mxu0 %v507
    %v575 = vpop.f32.mrf.mxu0
    %v576 = vadd.f32 %v504, %v575
    %v577 = vpop.f32.mrf.mxu0
    %578 = vdwg.mxu0
    %579 = vst.msk [vmem:[#allocation2 + $0x8] sm:$0xff] %vm287, %v576
    %v580 = vld [vmem:[#allocation25] sm:$0xff]
    %v581 = vld [vmem:[#allocation25 + $0x8] sm:$0x1]
    %v582 = vld [vmem:[#allocation2] sm:$0xff]
    %v583 = vld [vmem:[#allocation2 + $0x8] sm:$0xff]
    %v584 = vlaneseq
    %v585 = vshrl.u32 %v584, 7
    %v586 = vsub.s32 0, %v585
    %v587 = vrot.slane %v580, %v586
    %589 = vrot.lane.b32.xlu0 %v587, 123
    %v590 = vpop.permute.xlu0 %589
    %v592 = vmul.f32 %v582, %v590
    %v593 = vmul.f32 %v583, %v590
    %596 = vrot.lane.b32.xlu0 %v592, 5
    %v597 = vpop.permute.xlu0 %596
    %598 = vrot.lane.b32.xlu0 %v593, 5
    %v599 = vpop.permute.xlu0 %598
    %vm600 = vcmask 39936
    %v601 = vsel %vm600, %v597, %v599
    %603 = vst.msk [vmem:[#allocation3] sm:$0xff] %vm287, %v601
    %v604 = vld [vmem:[#allocation2] sm:$0xff]
    %v605 = vld [vmem:[#allocation2 + $0x8] sm:$0xff]
    %v606 = vlaneseq
    %v607 = vshrl.u32 %v606, 7
    %v608 = vsub.s32 1, %v607
    %v609 = vrot.slane %v580, %v608
    %611 = vrot.lane.b32.xlu0 %v609, 124
    %v612 = vpop.permute.xlu0 %611
    %v614 = vmul.f32 %v604, %v612
    %v615 = vmul.f32 %v605, %v612
    %618 = vrot.lane.b32.xlu0 %v614, 4
    %v619 = vpop.permute.xlu0 %618
    %620 = vrot.lane.b32.xlu0 %v615, 4
    %v621 = vpop.permute.xlu0 %620
    %vm622 = vcmask 31744
    %v623 = vsel %vm622, %v619, %v621
    %625 = vst.msk [vmem:[#allocation3 + $0x20] sm:$0xff] %vm287, %v623
    %v626 = vld [vmem:[#allocation2] sm:$0xff]
    %v627 = vld [vmem:[#allocation2 + $0x8] sm:$0xff]
    %v628 = vlaneseq
    %v629 = vshrl.u32 %v628, 7
    %v630 = vsub.s32 2, %v629
    %v631 = vrot.slane %v580, %v630
    %633 = vrot.lane.b32.xlu0 %v631, 125
    %v634 = vpop.permute.xlu0 %633
    %v636 = vmul.f32 %v626, %v634
    %v637 = vmul.f32 %v627, %v634
    %640 = vrot.lane.b32.xlu0 %v636, 3
    %v641 = vpop.permute.xlu0 %640
    %642 = vrot.lane.b32.xlu0 %v637, 3
    %v643 = vpop.permute.xlu0 %642
    %vm644 = vcmask 23552
    %v645 = vsel %vm644, %v641, %v643
    %647 = vst.msk [vmem:[#allocation3 + $0x40] sm:$0xff] %vm287, %v645
    %v648 = vld [vmem:[#allocation2] sm:$0xff]
    %v649 = vld [vmem:[#allocation2 + $0x8] sm:$0xff]
    %v650 = vlaneseq
    %v651 = vshrl.u32 %v650, 7
    %v652 = vsub.s32 3, %v651
    %v653 = vrot.slane %v580, %v652
    %655 = vrot.lane.b32.xlu0 %v653, 127
    %v656 = vpop.permute.xlu0 %655
    %v658 = vmul.f32 %v648, %v656
    %v659 = vmul.f32 %v649, %v656
    %662 = vrot.lane.b32.xlu0 %v658, 1
    %v663 = vpop.permute.xlu0 %662
    %664 = vrot.lane.b32.xlu0 %v659, 1
    %v665 = vpop.permute.xlu0 %664
    %vm666 = vcmask 7168
    %v667 = vsel %vm666, %v663, %v665
    %669 = vst.msk [vmem:[#allocation3 + $0x60] sm:$0xff] %vm287, %v667
    %v670 = vld [vmem:[#allocation2 + $0x8] sm:$0xff]
    %671 = vst.msk [vmem:[#allocation3 + $0x80] sm:$0xff] %vm287, %v670
    %v672 = vld [vmem:[#allocation2 + $0x8] sm:$0xff]
    %v673 = vlaneseq
    %v674 = vshrl.u32 %v673, 7
    %v675 = vsub.s32 5, %v674
    %v676 = vrot.slane %v580, %v675
    %678 = vrot.lane.b32.xlu0 %v676, 1
    %v679 = vpop.permute.xlu0 %678
    %v681 = vmul.f32 %v672, %v679
    %683 = vrot.lane.b32.xlu0 %v681, 127
    %v684 = vpop.permute.xlu0 %683
    %686 = vst.msk [vmem:[#allocation3 + $0xa0] sm:$0xff] %vm287, %v684
    %v687 = vld [vmem:[#allocation2 + $0x8] sm:$0xff]
    %v688 = vlaneseq
    %v689 = vshrl.u32 %v688, 7
    %v690 = vsub.s32 6, %v689
    %v691 = vrot.slane %v580, %v690
    %693 = vrot.lane.b32.xlu0 %v691, 3
    %v694 = vpop.permute.xlu0 %693
    %v696 = vmul.f32 %v687, %v694
    %698 = vrot.lane.b32.xlu0 %v696, 125
    %v699 = vpop.permute.xlu0 %698
    %701 = vst.msk [vmem:[#allocation3 + $0xc0] sm:$0xff] %vm287, %v699
    %v702 = vld [vmem:[#allocation2 + $0x8] sm:$0xff]
    %v703 = vlaneseq
    %v704 = vshrl.u32 %v703, 7
    %v705 = vsub.s32 7, %v704
    %v706 = vrot.slane %v580, %v705
    %708 = vrot.lane.b32.xlu0 %v706, 4
    %v709 = vpop.permute.xlu0 %708
    %v711 = vmul.f32 %v702, %v709
    %713 = vrot.lane.b32.xlu0 %v711, 124
    %v714 = vpop.permute.xlu0 %713
    %716 = vst.msk [vmem:[#allocation3 + $0xe0] sm:$0xff] %vm287, %v714
    %v717 = vld [vmem:[#allocation2 + $0x8] sm:$0xff]
    %v718 = vlaneseq
    %v719 = vshrl.u32 %v718, 7
    %v720 = vsub.s32 0, %v719
    %v721 = vrot.slane %v581, %v720
    %723 = vrot.lane.b32.xlu0 %v721, 5
    %v724 = vpop.permute.xlu0 %723
    %v726 = vmul.f32 %v717, %v724
    %728 = vrot.lane.b32.xlu0 %v726, 123
    %v729 = vpop.permute.xlu0 %728
    %731 = vst.msk [vmem:[#allocation3 + $0x100] sm:$0xff] %vm287, %v729
    %v732 = vld [vmem:[#allocation15] sm:$0xff]
    %v733 = vld [vmem:[#allocation3] sm:$0xff]
    %v734 = vld [vmem:[#allocation3 + $0x20] sm:$0xff]
    %v735 = vld [vmem:[#allocation3 + $0x40] sm:$0xff]
    %v736 = vld [vmem:[#allocation3 + $0x60] sm:$0xff]
    %v737 = vld [vmem:[#allocation3 + $0x80] sm:$0xff]
    %v738 = vld [vmem:[#allocation3 + $0xa0] sm:$0xff]
    %v739 = vld [vmem:[#allocation3 + $0xc0] sm:$0xff]
    %v740 = vld [vmem:[#allocation3 + $0xe0] sm:$0xff]
    %v741 = vld [vmem:[#allocation3 + $0x100] sm:$0xff]
    %vm742 = vcmask 588800
    %v744 = vsel %vm742, %v732, 0
    %746 = vmatprep.subr.mxu0 0.0
    %747 = vmatpush1.msra.mxu0 0.0
    %748 = vmatprep.subr.mxu0 0.0
    %749 = vmatpush1.msra.mxu0 0.0
    %750 = vmatprep.subr.mxu0 0.0
    %751 = vmatpush1.msra.mxu0 0.0
    %752 = vmatprep.subr.mxu0 0.0
    %753 = vmatpush1.msra.mxu0 0.0
    %754 = vmatprep.subr.mxu0 0.0
    %755 = vmatpush1.msra.mxu0 0.0
    %756 = vmatprep.subr.mxu0 0.0
    %757 = vmatpush1.msra.mxu0 0.0
    %758 = vmatprep.subr.mxu0 0.0
    %759 = vmatpush1.msra.mxu0 0.0
    %760 = vmatprep.subr.mxu0 0.0
    %761 = vmatpush1.msra.mxu0 %v741
    %762 = vmatprep.subr.mxu0 0.0
    %763 = vmatpush1.msra.mxu0 %v740
    %764 = vmatprep.subr.mxu0 0.0
    %765 = vmatpush1.msra.mxu0 %v739
    %766 = vmatprep.subr.mxu0 0.0
    %767 = vmatpush1.msra.mxu0 %v738
    %768 = vmatprep.subr.mxu0 0.0
    %769 = vmatpush1.msra.mxu0 %v737
    %770 = vmatprep.subr.mxu0 0.0
    %771 = vmatpush1.msra.mxu0 %v736
    %772 = vmatprep.subr.mxu0 0.0
    %773 = vmatpush1.msra.mxu0 %v735
    %774 = vmatprep.subr.mxu0 0.0
    %775 = vmatpush1.msra.mxu0 %v734
    %776 = vmatprep.subr.mxu0 0.0
    %777 = vmatpush1.msra.mxu0 %v733
    %778 = vmatprep.subr.mxu0 0.0
    %779 = vmatpush2.msra.mxu0 0.0
    %780 = vmatprep.subr.mxu0 0.0
    %781 = vmatpush2.msra.mxu0 0.0
    %782 = vmatprep.subr.mxu0 0.0
    %783 = vmatpush2.msra.mxu0 0.0
    %784 = vmatprep.subr.mxu0 0.0
    %785 = vmatpush2.msra.mxu0 0.0
    %786 = vmatprep.subr.mxu0 0.0
    %787 = vmatpush2.msra.mxu0 0.0
    %788 = vmatprep.subr.mxu0 0.0
    %789 = vmatpush2.msra.mxu0 0.0
    %790 = vmatprep.subr.mxu0 0.0
    %791 = vmatpush2.msra.mxu0 0.0
    %792 = vmatprep.subr.mxu0 0.0
    %793 = vmatpush2.msra.mxu0 0.0
    %794 = vmatprep.subr.mxu0 0.0
    %795 = vmatpush2.msra.mxu0 0.0
    %796 = vmatprep.subr.mxu0 0.0
    %797 = vmatpush2.msra.mxu0 0.0
    %798 = vmatprep.subr.mxu0 0.0
    %799 = vmatpush2.msra.mxu0 0.0
    %800 = vmatprep.subr.mxu0 0.0
    %801 = vmatpush2.msra.mxu0 0.0
    %802 = vmatprep.subr.mxu0 0.0
    %803 = vmatpush2.msra.mxu0 0.0
    %804 = vmatprep.subr.mxu0 0.0
    %805 = vmatpush2.msra.mxu0 0.0
    %806 = vmatprep.subr.mxu0 0.0
    %807 = vmatpush2.msra.mxu0 0.0
    %808 = vmatprep.subr.mxu0 0.0
    %809 = vmatpush2.msra.mxu0 0.0
    %810 = vmatprep.mubr.f32.mxu0 0.0
    %811 = vmatmul.mubr.f32.gmra.mxu0 %v744
    %v812 = vpop.f32.mrf.mxu0
    %v813 = vadd.f32 0.0, %v812
    %v814 = vpop.f32.mrf.mxu0
    %815 = vdwg.mxu0
    %v816 = vsel %vm287, %v813, 0.0
    %817 = vadd.xlane.f32.xlu0 %v816
    %v818 = vpop.xlane.xlu0 %817
    %v819 = vmul.f32 %v813, %v813
    %v820 = vsel %vm287, %v819, 0.0
    %821 = vadd.xlane.f32.xlu0 %v820
    %v822 = vpop.xlane.xlu0 %821
    %v823 = vmul.f32 %v818, 0.03125
    %v824 = vmul.f32 %v822, 0.03125
    %v825 = vmul.f32 %v823, %v823
    %v826 = vsub.f32 %v824, %v825
    %v827 = vmax.f32 %v826, 0.0
    %s828 = scalar_lea.vmem %s13, 32
    %v829 = vld [vmem:[%s828] sm:$0xff]
    %v830 = vadd.f32 %v827, 1e-05
    %v831 = vrsqrt.pop %v830
    %v832 = vmul.f32 %v829, %v831
    %s833 = scalar_lea.vmem %s14, 32
    %v834 = vld [vmem:[%s833] sm:$0xff]
    %v835 = vmul.f32 %v823, %v832
    %v836 = vsub.f32 %v834, %v835
    %838 = vset.pattern.permute.xlu0 0
    %839 = vperm.xlu0 %838, %v832
    %v840 = vpop.permute.xlu0 %839
    %v842 = vmul.f32 %v813, %v840
    %844 = vset.pattern.permute.xlu0 0
    %845 = vperm.xlu0 %844, %v836
    %v846 = vpop.permute.xlu0 %845
    %v848 = vadd.f32 %v842, %v846
    %v849 = vmax.f32 %v848, 0.0
    %v850 = vld [vmem:[#allocation13] sm:$0xff]
    %v851 = vld [vmem:[#allocation7] sm:$0xff]
    %v853 = vsel %vm361, %v850, 0
    %855 = vmatprep.subr.mxu0 0.0
    %856 = vmatpush1.msra.mxu0 0.0
    %857 = vmatprep.subr.mxu0 0.0
    %858 = vmatpush1.msra.mxu0 0.0
    %859 = vmatprep.subr.mxu0 0.0
    %860 = vmatpush1.msra.mxu0 0.0
    %861 = vmatprep.subr.mxu0 0.0
    %862 = vmatpush1.msra.mxu0 0.0
    %863 = vmatprep.subr.mxu0 0.0
    %864 = vmatpush1.msra.mxu0 0.0
    %865 = vmatprep.subr.mxu0 0.0
    %866 = vmatpush1.msra.mxu0 0.0
    %867 = vmatprep.subr.mxu0 0.0
    %868 = vmatpush1.msra.mxu0 0.0
    %869 = vmatprep.subr.mxu0 0.0
    %870 = vmatpush1.msra.mxu0 0.0
    %871 = vmatprep.subr.mxu0 0.0
    %872 = vmatpush1.msra.mxu0 0.0
    %873 = vmatprep.subr.mxu0 0.0
    %874 = vmatpush1.msra.mxu0 0.0
    %875 = vmatprep.subr.mxu0 0.0
    %876 = vmatpush1.msra.mxu0 0.0
    %877 = vmatprep.subr.mxu0 0.0
    %878 = vmatpush1.msra.mxu0 0.0
    %879 = vmatprep.subr.mxu0 0.0
    %880 = vmatpush1.msra.mxu0 0.0
    %881 = vmatprep.subr.mxu0 0.0
    %882 = vmatpush1.msra.mxu0 0.0
    %883 = vmatprep.subr.mxu0 0.0
    %884 = vmatpush1.msra.mxu0 0.0
    %885 = vmatprep.subr.mxu0 0.0
    %886 = vmatpush1.msra.mxu0 %v851
    %887 = vmatprep.subr.mxu0 0.0
    %888 = vmatpush2.msra.mxu0 0.0
    %889 = vmatprep.subr.mxu0 0.0
    %890 = vmatpush2.msra.mxu0 0.0
    %891 = vmatprep.subr.mxu0 0.0
    %892 = vmatpush2.msra.mxu0 0.0
    %893 = vmatprep.subr.mxu0 0.0
    %894 = vmatpush2.msra.mxu0 0.0
    %895 = vmatprep.subr.mxu0 0.0
    %896 = vmatpush2.msra.mxu0 0.0
    %897 = vmatprep.subr.mxu0 0.0
    %898 = vmatpush2.msra.mxu0 0.0
    %899 = vmatprep.subr.mxu0 0.0
    %900 = vmatpush2.msra.mxu0 0.0
    %901 = vmatprep.subr.mxu0 0.0
    %902 = vmatpush2.msra.mxu0 0.0
    %903 = vmatprep.subr.mxu0 0.0
    %904 = vmatpush2.msra.mxu0 0.0
    %905 = vmatprep.subr.mxu0 0.0
    %906 = vmatpush2.msra.mxu0 0.0
    %907 = vmatprep.subr.mxu0 0.0
    %908 = vmatpush2.msra.mxu0 0.0
    %909 = vmatprep.subr.mxu0 0.0
    %910 = vmatpush2.msra.mxu0 0.0
    %911 = vmatprep.subr.mxu0 0.0
    %912 = vmatpush2.msra.mxu0 0.0
    %913 = vmatprep.subr.mxu0 0.0
    %914 = vmatpush2.msra.mxu0 0.0
    %915 = vmatprep.subr.mxu0 0.0
    %916 = vmatpush2.msra.mxu0 0.0
    %917 = vmatprep.subr.mxu0 0.0
    %918 = vmatpush2.msra.mxu0 0.0
    %919 = vmatprep.mubr.f32.mxu0 0.0
    %920 = vmatmul.mubr.f32.gmra.mxu0 %v853
    %v921 = vpop.f32.mrf.mxu0
    %v922 = vadd.f32 0.0, %v921
    %v923 = vpop.f32.mrf.mxu0
    %924 = vdwg.mxu0
    %925 = vadd.xlane.f32.xlu0 %v922
    %v926 = vpop.xlane.xlu0 %925
    %v927 = vmul.f32 %v922, %v922
    %928 = vadd.xlane.f32.xlu0 %v927
    %v929 = vpop.xlane.xlu0 %928
    %v930 = vmul.f32 %v926, 0.0078125
    %v931 = vmul.f32 %v929, 0.0078125
    %v932 = vmul.f32 %v930, %v930
    %v933 = vsub.f32 %v931, %v932
    %v934 = vmax.f32 %v933, 0.0
    %s935 = scalar_lea.vmem %s13, 16
    %v936 = vld [vmem:[%s935] sm:$0xff]
    %v937 = vadd.f32 %v934, 1e-05
    %v938 = vrsqrt.pop %v937
    %v939 = vmul.f32 %v936, %v938
    %s940 = scalar_lea.vmem %s14, 16
    %v941 = vld [vmem:[%s940] sm:$0xff]
    %v942 = vmul.f32 %v930, %v939
    %v943 = vsub.f32 %v941, %v942
    %945 = vset.pattern.permute.xlu0 0
    %946 = vperm.xlu0 %945, %v939
    %v947 = vpop.permute.xlu0 %946
    %v949 = vmul.f32 %v922, %v947
    %951 = vset.pattern.permute.xlu0 0
    %952 = vperm.xlu0 %951, %v943
    %v953 = vpop.permute.xlu0 %952
    %v955 = vadd.f32 %v949, %v953
    %v956 = vmax.f32 %v955, 0.0
    %v957 = vld [vmem:[#allocation21] sm:$0xff]
    %v958 = vld [vmem:[#allocation21 + $0x8] sm:$0xff]
    %v959 = vld [vmem:[#allocation21 + $0x10] sm:$0xff]
    %v960 = vld [vmem:[#allocation21 + $0x18] sm:$0xff]
    %v962 = vsel %vm287, %v849, 0
    %964 = vmatprep.subr.mxu0 0.0
    %965 = vmatpush1.msra.mxu0 0.0
    %966 = vmatprep.subr.mxu0 0.0
    %967 = vmatpush1.msra.mxu0 0.0
    %968 = vmatprep.subr.mxu0 0.0
    %969 = vmatpush1.msra.mxu0 0.0
    %970 = vmatprep.subr.mxu0 0.0
    %971 = vmatpush1.msra.mxu0 0.0
    %972 = vmatprep.subr.mxu0 0.0
    %973 = vmatpush1.msra.mxu0 0.0
    %974 = vmatprep.subr.mxu0 0.0
    %975 = vmatpush1.msra.mxu0 0.0
    %976 = vmatprep.subr.mxu0 0.0
    %977 = vmatpush1.msra.mxu0 0.0
    %978 = vmatprep.subr.mxu0 0.0
    %979 = vmatpush1.msra.mxu0 0.0
    %980 = vmatprep.subr.mxu0 0.0
    %981 = vmatpush1.msra.mxu0 0.0
    %982 = vmatprep.subr.mxu0 0.0
    %983 = vmatpush1.msra.mxu0 0.0
    %984 = vmatprep.subr.mxu0 0.0
    %985 = vmatpush1.msra.mxu0 0.0
    %986 = vmatprep.subr.mxu0 0.0
    %987 = vmatpush1.msra.mxu0 0.0
    %988 = vmatprep.subr.mxu0 0.0
    %989 = vmatpush1.msra.mxu0 %v960
    %990 = vmatprep.subr.mxu0 0.0
    %991 = vmatpush1.msra.mxu0 %v959
    %992 = vmatprep.subr.mxu0 0.0
    %993 = vmatpush1.msra.mxu0 %v958
    %994 = vmatprep.subr.mxu0 0.0
    %995 = vmatpush1.msra.mxu0 %v957
    %996 = vmatprep.subr.mxu0 0.0
    %997 = vmatpush2.msra.mxu0 0.0
    %998 = vmatprep.subr.mxu0 0.0
    %999 = vmatpush2.msra.mxu0 0.0
    %1000 = vmatprep.subr.mxu0 0.0
    %1001 = vmatpush2.msra.mxu0 0.0
    %1002 = vmatprep.subr.mxu0 0.0
    %1003 = vmatpush2.msra.mxu0 0.0
    %1004 = vmatprep.subr.mxu0 0.0
    %1005 = vmatpush2.msra.mxu0 0.0
    %1006 = vmatprep.subr.mxu0 0.0
    %1007 = vmatpush2.msra.mxu0 0.0
    %1008 = vmatprep.subr.mxu0 0.0
    %1009 = vmatpush2.msra.mxu0 0.0
    %1010 = vmatprep.subr.mxu0 0.0
    %1011 = vmatpush2.msra.mxu0 0.0
    %1012 = vmatprep.subr.mxu0 0.0
    %1013 = vmatpush2.msra.mxu0 0.0
    %1014 = vmatprep.subr.mxu0 0.0
    %1015 = vmatpush2.msra.mxu0 0.0
    %1016 = vmatprep.subr.mxu0 0.0
    %1017 = vmatpush2.msra.mxu0 0.0
    %1018 = vmatprep.subr.mxu0 0.0
    %1019 = vmatpush2.msra.mxu0 0.0
    %1020 = vmatprep.subr.mxu0 0.0
    %1021 = vmatpush2.msra.mxu0 0.0
    %1022 = vmatprep.subr.mxu0 0.0
    %1023 = vmatpush2.msra.mxu0 0.0
    %1024 = vmatprep.subr.mxu0 0.0
    %1025 = vmatpush2.msra.mxu0 0.0
    %1026 = vmatprep.subr.mxu0 0.0
    %1027 = vmatpush2.msra.mxu0 0.0
    %1028 = vmatprep.mubr.f32.mxu0 0.0
    %1029 = vmatmul.mubr.f32.gmra.mxu0 %v962
    %v1030 = vpop.f32.mrf.mxu0
    %v1031 = vadd.f32 %v956, %v1030
    %v1032 = vpop.f32.mrf.mxu0
    %1033 = vdwg.mxu0
    %1034 = vst [vmem:[#allocation2 + $0x8] sm:$0xff] %v1031
    %v1035 = vld [vmem:[#allocation27] sm:$0xff]
    %v1036 = vld [vmem:[#allocation27 + $0x8] sm:$0x1]
    %v1037 = vld [vmem:[#allocation2] sm:$0xff]
    %v1038 = vld [vmem:[#allocation2 + $0x8] sm:$0xff]
    %v1039 = vlaneseq
    %v1040 = vshrl.u32 %v1039, 7
    %v1041 = vsub.s32 0, %v1040
    %v1042 = vrot.slane %v1035, %v1041
    %1044 = vrot.lane.b32.xlu0 %v1042, 119
    %v1045 = vpop.permute.xlu0 %1044
    %v1047 = vmul.f32 %v1037, %v1045
    %v1048 = vmul.f32 %v1038, %v1045
    %1051 = vrot.lane.b32.xlu0 %v1047, 9
    %v1052 = vpop.permute.xlu0 %1051
    %1053 = vrot.lane.b32.xlu0 %v1048, 9
    %v1054 = vpop.permute.xlu0 %1053
    %vm1055 = vcmask 72704
    %v1056 = vsel %vm1055, %v1052, %v1054
    %1058 = vst [vmem:[#allocation3] sm:$0xff] %v1056
    %v1059 = vld [vmem:[#allocation2] sm:$0xff]
    %v1060 = vld [vmem:[#allocation2 + $0x8] sm:$0xff]
    %v1061 = vlaneseq
    %v1062 = vshrl.u32 %v1061, 7
    %v1063 = vsub.s32 1, %v1062
    %v1064 = vrot.slane %v1035, %v1063
    %1066 = vrot.lane.b32.xlu0 %v1064, 120
    %v1067 = vpop.permute.xlu0 %1066
    %v1069 = vmul.f32 %v1059, %v1067
    %v1070 = vmul.f32 %v1060, %v1067
    %1073 = vrot.lane.b32.xlu0 %v1069, 8
    %v1074 = vpop.permute.xlu0 %1073
    %1075 = vrot.lane.b32.xlu0 %v1070, 8
    %v1076 = vpop.permute.xlu0 %1075
    %v1077 = vsel %vm361, %v1074, %v1076
    %1079 = vst [vmem:[#allocation3 + $0x20] sm:$0xff] %v1077
    %v1080 = vld [vmem:[#allocation2] sm:$0xff]
    %v1081 = vld [vmem:[#allocation2 + $0x8] sm:$0xff]
    %v1082 = vlaneseq
    %v1083 = vshrl.u32 %v1082, 7
    %v1084 = vsub.s32 2, %v1083
    %v1085 = vrot.slane %v1035, %v1084
    %1087 = vrot.lane.b32.xlu0 %v1085, 121
    %v1088 = vpop.permute.xlu0 %1087
    %v1090 = vmul.f32 %v1080, %v1088
    %v1091 = vmul.f32 %v1081, %v1088
    %1094 = vrot.lane.b32.xlu0 %v1090, 7
    %v1095 = vpop.permute.xlu0 %1094
    %1096 = vrot.lane.b32.xlu0 %v1091, 7
    %v1097 = vpop.permute.xlu0 %1096
    %vm1098 = vcmask 56320
    %v1099 = vsel %vm1098, %v1095, %v1097
    %1101 = vst [vmem:[#allocation3 + $0x40] sm:$0xff] %v1099
    %v1102 = vld [vmem:[#allocation2] sm:$0xff]
    %v1103 = vld [vmem:[#allocation2 + $0x8] sm:$0xff]
    %v1104 = vlaneseq
    %v1105 = vshrl.u32 %v1104, 7
    %v1106 = vsub.s32 3, %v1105
    %v1107 = vrot.slane %v1035, %v1106
    %1109 = vrot.lane.b32.xlu0 %v1107, 127
    %v1110 = vpop.permute.xlu0 %1109
    %v1112 = vmul.f32 %v1102, %v1110
    %v1113 = vmul.f32 %v1103, %v1110
    %1116 = vrot.lane.b32.xlu0 %v1112, 1
    %v1117 = vpop.permute.xlu0 %1116
    %1118 = vrot.lane.b32.xlu0 %v1113, 1
    %v1119 = vpop.permute.xlu0 %1118
    %v1120 = vsel %vm666, %v1117, %v1119
    %1122 = vst [vmem:[#allocation3 + $0x60] sm:$0xff] %v1120
    %v1123 = vld [vmem:[#allocation2 + $0x8] sm:$0xff]
    %1124 = vst [vmem:[#allocation3 + $0x80] sm:$0xff] %v1123
    %v1125 = vld [vmem:[#allocation2 + $0x8] sm:$0xff]
    %v1126 = vld [vmem:[#allocation2 + $0x10] sm:$0xff]
    %v1127 = vlaneseq
    %v1128 = vshrl.u32 %v1127, 7
    %v1129 = vsub.s32 5, %v1128
    %v1130 = vrot.slane %v1035, %v1129
    %1132 = vrot.lane.b32.xlu0 %v1130, 1
    %v1133 = vpop.permute.xlu0 %1132
    %v1135 = vmul.f32 %v1125, %v1133
    %v1136 = vmul.f32 %v1126, %v1133
    %1139 = vrot.lane.b32.xlu0 %v1135, 127
    %v1140 = vpop.permute.xlu0 %1139
    %1141 = vrot.lane.b32.xlu0 %v1136, 127
    %v1142 = vpop.permute.xlu0 %1141
    %vm1143 = vcmask 1039360
    %v1144 = vsel %vm1143, %v1140, %v1142
    %1146 = vst [vmem:[#allocation3 + $0xa0] sm:$0xff] %v1144
    %v1147 = vld [vmem:[#allocation2 + $0x8] sm:$0xff]
    %v1148 = vld [vmem:[#allocation2 + $0x10] sm:$0xff]
    %v1149 = vlaneseq
    %v1150 = vshrl.u32 %v1149, 7
    %v1151 = vsub.s32 6, %v1150
    %v1152 = vrot.slane %v1035, %v1151
    %1154 = vrot.lane.b32.xlu0 %v1152, 7
    %v1155 = vpop.permute.xlu0 %1154
    %v1157 = vmul.f32 %v1147, %v1155
    %v1158 = vmul.f32 %v1148, %v1155
    %1161 = vrot.lane.b32.xlu0 %v1157, 121
    %v1162 = vpop.permute.xlu0 %1161
    %1163 = vrot.lane.b32.xlu0 %v1158, 121
    %v1164 = vpop.permute.xlu0 %1163
    %vm1165 = vcmask 990208
    %v1166 = vsel %vm1165, %v1162, %v1164
    %1168 = vst [vmem:[#allocation3 + $0xc0] sm:$0xff] %v1166
    %v1169 = vld [vmem:[#allocation2 + $0x8] sm:$0xff]
    %v1170 = vld [vmem:[#allocation2 + $0x10] sm:$0xff]
    %v1171 = vlaneseq
    %v1172 = vshrl.u32 %v1171, 7
    %v1173 = vsub.s32 7, %v1172
    %v1174 = vrot.slane %v1035, %v1173
    %1176 = vrot.lane.b32.xlu0 %v1174, 8
    %v1177 = vpop.permute.xlu0 %1176
    %v1179 = vmul.f32 %v1169, %v1177
    %v1180 = vmul.f32 %v1170, %v1177
    %1183 = vrot.lane.b32.xlu0 %v1179, 120
    %v1184 = vpop.permute.xlu0 %1183
    %1185 = vrot.lane.b32.xlu0 %v1180, 120
    %v1186 = vpop.permute.xlu0 %1185
    %vm1187 = vcmask 982016
    %v1188 = vsel %vm1187, %v1184, %v1186
    %1190 = vst [vmem:[#allocation3 + $0xe0] sm:$0xff] %v1188
    %v1191 = vld [vmem:[#allocation2 + $0x8] sm:$0xff]
    %v1192 = vld [vmem:[#allocation2 + $0x10] sm:$0xff]
    %v1193 = vlaneseq
    %v1194 = vshrl.u32 %v1193, 7
    %v1195 = vsub.s32 0, %v1194
    %v1196 = vrot.slane %v1036, %v1195
    %1198 = vrot.lane.b32.xlu0 %v1196, 9
    %v1199 = vpop.permute.xlu0 %1198
    %v1201 = vmul.f32 %v1191, %v1199
    %v1202 = vmul.f32 %v1192, %v1199
    %1205 = vrot.lane.b32.xlu0 %v1201, 119
    %v1206 = vpop.permute.xlu0 %1205
    %1207 = vrot.lane.b32.xlu0 %v1202, 119
    %v1208 = vpop.permute.xlu0 %1207
    %vm1209 = vcmask 973824
    %v1210 = vsel %vm1209, %v1206, %v1208
    %1212 = vst [vmem:[#allocation3 + $0x100] sm:$0xff] %v1210
    %v1213 = vld [vmem:[#allocation16] sm:$0xff]
    %v1214 = vld [vmem:[#allocation3] sm:$0xff]
    %v1215 = vld [vmem:[#allocation3 + $0x20] sm:$0xff]
    %v1216 = vld [vmem:[#allocation3 + $0x40] sm:$0xff]
    %v1217 = vld [vmem:[#allocation3 + $0x60] sm:$0xff]
    %v1218 = vld [vmem:[#allocation3 + $0x80] sm:$0xff]
    %v1219 = vld [vmem:[#allocation3 + $0xa0] sm:$0xff]
    %v1220 = vld [vmem:[#allocation3 + $0xc0] sm:$0xff]
    %v1221 = vld [vmem:[#allocation3 + $0xe0] sm:$0xff]
    %v1222 = vld [vmem:[#allocation3 + $0x100] sm:$0xff]
    %v1224 = vsel %vm742, %v1213, 0
    %1226 = vmatprep.subr.mxu0 0.0
    %1227 = vmatpush1.msra.mxu0 0.0
    %1228 = vmatprep.subr.mxu0 0.0
    %1229 = vmatpush1.msra.mxu0 0.0
    %1230 = vmatprep.subr.mxu0 0.0
    %1231 = vmatpush1.msra.mxu0 0.0
    %1232 = vmatprep.subr.mxu0 0.0
    %1233 = vmatpush1.msra.mxu0 0.0
    %1234 = vmatprep.subr.mxu0 0.0
    %1235 = vmatpush1.msra.mxu0 0.0
    %1236 = vmatprep.subr.mxu0 0.0
    %1237 = vmatpush1.msra.mxu0 0.0
    %1238 = vmatprep.subr.mxu0 0.0
    %1239 = vmatpush1.msra.mxu0 0.0
    %1240 = vmatprep.subr.mxu0 0.0
    %1241 = vmatpush1.msra.mxu0 %v1222
    %1242 = vmatprep.subr.mxu0 0.0
    %1243 = vmatpush1.msra.mxu0 %v1221
    %1244 = vmatprep.subr.mxu0 0.0
    %1245 = vmatpush1.msra.mxu0 %v1220
    %1246 = vmatprep.subr.mxu0 0.0
    %1247 = vmatpush1.msra.mxu0 %v1219
    %1248 = vmatprep.subr.mxu0 0.0
    %1249 = vmatpush1.msra.mxu0 %v1218
    %1250 = vmatprep.subr.mxu0 0.0
    %1251 = vmatpush1.msra.mxu0 %v1217
    %1252 = vmatprep.subr.mxu0 0.0
    %1253 = vmatpush1.msra.mxu0 %v1216
    %1254 = vmatprep.subr.mxu0 0.0
    %1255 = vmatpush1.msra.mxu0 %v1215
    %1256 = vmatprep.subr.mxu0 0.0
    %1257 = vmatpush1.msra.mxu0 %v1214
    %1258 = vmatprep.subr.mxu0 0.0
    %1259 = vmatpush2.msra.mxu0 0.0
    %1260 = vmatprep.subr.mxu0 0.0
    %1261 = vmatpush2.msra.mxu0 0.0
    %1262 = vmatprep.subr.mxu0 0.0
    %1263 = vmatpush2.msra.mxu0 0.0
    %1264 = vmatprep.subr.mxu0 0.0
    %1265 = vmatpush2.msra.mxu0 0.0
    %1266 = vmatprep.subr.mxu0 0.0
    %1267 = vmatpush2.msra.mxu0 0.0
    %1268 = vmatprep.subr.mxu0 0.0
    %1269 = vmatpush2.msra.mxu0 0.0
    %1270 = vmatprep.subr.mxu0 0.0
    %1271 = vmatpush2.msra.mxu0 0.0
    %1272 = vmatprep.subr.mxu0 0.0
    %1273 = vmatpush2.msra.mxu0 0.0
    %1274 = vmatprep.subr.mxu0 0.0
    %1275 = vmatpush2.msra.mxu0 0.0
    %1276 = vmatprep.subr.mxu0 0.0
    %1277 = vmatpush2.msra.mxu0 0.0
    %1278 = vmatprep.subr.mxu0 0.0
    %1279 = vmatpush2.msra.mxu0 0.0
    %1280 = vmatprep.subr.mxu0 0.0
    %1281 = vmatpush2.msra.mxu0 0.0
    %1282 = vmatprep.subr.mxu0 0.0
    %1283 = vmatpush2.msra.mxu0 0.0
    %1284 = vmatprep.subr.mxu0 0.0
    %1285 = vmatpush2.msra.mxu0 0.0
    %1286 = vmatprep.subr.mxu0 0.0
    %1287 = vmatpush2.msra.mxu0 0.0
    %1288 = vmatprep.subr.mxu0 0.0
    %1289 = vmatpush2.msra.mxu0 0.0
    %1290 = vmatprep.mubr.f32.mxu0 0.0
    %1291 = vmatmul.mubr.f32.gmra.mxu0 %v1224
    %v1292 = vpop.f32.mrf.mxu0
    %v1293 = vadd.f32 0.0, %v1292
    %v1294 = vpop.f32.mrf.mxu0
    %1295 = vdwg.mxu0
    %1296 = vadd.xlane.f32.xlu0 %v1293
    %v1297 = vpop.xlane.xlu0 %1296
    %v1298 = vmul.f32 %v1293, %v1293
    %1299 = vadd.xlane.f32.xlu0 %v1298
    %v1300 = vpop.xlane.xlu0 %1299
    %v1301 = vmul.f32 %v1297, 0.0078125
    %v1302 = vmul.f32 %v1300, 0.0078125
    %v1303 = vmul.f32 %v1301, %v1301
    %v1304 = vsub.f32 %v1302, %v1303
    %v1305 = vmax.f32 %v1304, 0.0
    %s1306 = scalar_lea.vmem %s13, 40
    %v1307 = vld [vmem:[%s1306] sm:$0xff]
    %v1308 = vadd.f32 %v1305, 1e-05
    %v1309 = vrsqrt.pop %v1308
    %v1310 = vmul.f32 %v1307, %v1309
    %s1311 = scalar_lea.vmem %s14, 40
    %v1312 = vld [vmem:[%s1311] sm:$0xff]
    %v1313 = vmul.f32 %v1301, %v1310
    %v1314 = vsub.f32 %v1312, %v1313
    %1316 = vset.pattern.permute.xlu0 0
    %1317 = vperm.xlu0 %1316, %v1310
    %v1318 = vpop.permute.xlu0 %1317
    %v1320 = vmul.f32 %v1293, %v1318
    %1322 = vset.pattern.permute.xlu0 0
    %1323 = vperm.xlu0 %1322, %v1314
    %v1324 = vpop.permute.xlu0 %1323
    %v1326 = vadd.f32 %v1320, %v1324
    %v1327 = vmax.f32 %v1326, 0.0
    %v1328 = vld [vmem:[%s7] sm:$0xff]
    %v1329 = vld [vmem:[#allocation4] sm:$0xff]
    %v1330 = vld [vmem:[#allocation4 + $0x8] sm:$0xff]
    %v1333 = vcombine.high %v1329, %v1329
    %v1334 = vcombine.high %v1330, %v1330
    %v1336 = vsel %vm622, %v1328, 0
    %vm1338 = vcmask 1043456
    %v1339 = vsel %vm1338, %v1329, 0
    %v1341 = vsel %vm1338, %v1333, 0
    %v1343 = vsel %vm1338, %v1330, 0
    %v1345 = vsel %vm1338, %v1334, 0
    %1347 = vmatprep.subr.mxu0 0.0
    %1348 = vmatpush1.msra.mxu0 0.0
    %1349 = vmatprep.subr.mxu0 0.0
    %1350 = vmatpush1.msra.mxu0 0.0
    %1351 = vmatprep.subr.mxu0 0.0
    %1352 = vmatpush1.msra.mxu0 0.0
    %1353 = vmatprep.subr.mxu0 0.0
    %1354 = vmatpush1.msra.mxu0 0.0
    %1355 = vmatprep.subr.mxu0 0.0
    %1356 = vmatpush1.msra.mxu0 0.0
    %1357 = vmatprep.subr.mxu0 0.0
    %1358 = vmatpush1.msra.mxu0 0.0
    %1359 = vmatprep.subr.mxu0 0.0
    %1360 = vmatpush1.msra.mxu0 0.0
    %1361 = vmatprep.subr.mxu0 0.0
    %1362 = vmatpush1.msra.mxu0 0.0
    %1363 = vmatprep.subr.mxu0 0.0
    %1364 = vmatpush1.msra.mxu0 0.0
    %1365 = vmatprep.subr.mxu0 0.0
    %1366 = vmatpush1.msra.mxu0 0.0
    %1367 = vmatprep.subr.mxu0 0.0
    %1368 = vmatpush1.msra.mxu0 0.0
    %1369 = vmatprep.subr.mxu0 0.0
    %1370 = vmatpush1.msra.mxu0 0.0
    %1371 = vmatprep.subr.mxu0 0.0
    %1372 = vmatpush1.msra.mxu0 0.0
    %1373 = vmatprep.subr.mxu0 0.0
    %1374 = vmatpush1.msra.mxu0 0.0
    %1375 = vmatprep.subr.mxu0 0.0
    %1376 = vmatpush1.msra.mxu0 0.0
    %1377 = vmatprep.subr.mxu0 %v1341
    %1378 = vmatpush1.msra.mxu0 %v1339
    %1379 = vmatprep.subr.mxu0 0.0
    %1380 = vmatpush2.msra.mxu0 0.0
    %1381 = vmatprep.subr.mxu0 0.0
    %1382 = vmatpush2.msra.mxu0 0.0
    %1383 = vmatprep.subr.mxu0 0.0
    %1384 = vmatpush2.msra.mxu0 0.0
    %1385 = vmatprep.subr.mxu0 0.0
    %1386 = vmatpush2.msra.mxu0 0.0
    %1387 = vmatprep.subr.mxu0 0.0
    %1388 = vmatpush2.msra.mxu0 0.0
    %1389 = vmatprep.subr.mxu0 0.0
    %1390 = vmatpush2.msra.mxu0 0.0
    %1391 = vmatprep.subr.mxu0 0.0
    %1392 = vmatpush2.msra.mxu0 0.0
    %1393 = vmatprep.subr.mxu0 0.0
    %1394 = vmatpush2.msra.mxu0 0.0
    %1395 = vmatprep.subr.mxu0 0.0
    %1396 = vmatpush2.msra.mxu0 0.0
    %1397 = vmatprep.subr.mxu0 0.0
    %1398 = vmatpush2.msra.mxu0 0.0
    %1399 = vmatprep.subr.mxu0 0.0
    %1400 = vmatpush2.msra.mxu0 0.0
    %1401 = vmatprep.subr.mxu0 0.0
    %1402 = vmatpush2.msra.mxu0 0.0
    %1403 = vmatprep.subr.mxu0 0.0
    %1404 = vmatpush2.msra.mxu0 0.0
    %1405 = vmatprep.subr.mxu0 0.0
    %1406 = vmatpush2.msra.mxu0 0.0
    %1407 = vmatprep.subr.mxu0 0.0
    %1408 = vmatpush2.msra.mxu0 0.0
    %1409 = vmatprep.subr.mxu0 0.0
    %1410 = vmatpush2.msra.mxu0 0.0
    %1411 = vmatprep.mubr.f32.mxu0 0.0
    %1412 = vmatmul.mubr.f32.gmra.mxu0 %v1336
    %v1413 = vpop.f32.mrf.mxu0
    %v1414 = vadd.f32 0.0, %v1413
    %v1415 = vpop.f32.mrf.mxu0
    %v1416 = vadd.f32 0.0, %v1415
    %1417 = vdwg.mxu0
    %1418 = vmatprep.subr.mxu0 0.0
    %1419 = vmatpush1.msra.mxu0 0.0
    %1420 = vmatprep.subr.mxu0 0.0
    %1421 = vmatpush1.msra.mxu0 0.0
    %1422 = vmatprep.subr.mxu0 0.0
    %1423 = vmatpush1.msra.mxu0 0.0
    %1424 = vmatprep.subr.mxu0 0.0
    %1425 = vmatpush1.msra.mxu0 0.0
    %1426 = vmatprep.subr.mxu0 0.0
    %1427 = vmatpush1.msra.mxu0 0.0
    %1428 = vmatprep.subr.mxu0 0.0
    %1429 = vmatpush1.msra.mxu0 0.0
    %1430 = vmatprep.subr.mxu0 0.0
    %1431 = vmatpush1.msra.mxu0 0.0
    %1432 = vmatprep.subr.mxu0 0.0
    %1433 = vmatpush1.msra.mxu0 0.0
    %1434 = vmatprep.subr.mxu0 0.0
    %1435 = vmatpush1.msra.mxu0 0.0
    %1436 = vmatprep.subr.mxu0 0.0
    %1437 = vmatpush1.msra.mxu0 0.0
    %1438 = vmatprep.subr.mxu0 0.0
    %1439 = vmatpush1.msra.mxu0 0.0
    %1440 = vmatprep.subr.mxu0 0.0
    %1441 = vmatpush1.msra.mxu0 0.0
    %1442 = vmatprep.subr.mxu0 0.0
    %1443 = vmatpush1.msra.mxu0 0.0
    %1444 = vmatprep.subr.mxu0 0.0
    %1445 = vmatpush1.msra.mxu0 0.0
    %1446 = vmatprep.subr.mxu0 0.0
    %1447 = vmatpush1.msra.mxu0 0.0
    %1448 = vmatprep.subr.mxu0 %v1345
    %1449 = vmatpush1.msra.mxu0 %v1343
    %1450 = vmatprep.subr.mxu0 0.0
    %1451 = vmatpush2.msra.mxu0 0.0
    %1452 = vmatprep.subr.mxu0 0.0
    %1453 = vmatpush2.msra.mxu0 0.0
    %1454 = vmatprep.subr.mxu0 0.0
    %1455 = vmatpush2.msra.mxu0 0.0
    %1456 = vmatprep.subr.mxu0 0.0
    %1457 = vmatpush2.msra.mxu0 0.0
    %1458 = vmatprep.subr.mxu0 0.0
    %1459 = vmatpush2.msra.mxu0 0.0
    %1460 = vmatprep.subr.mxu0 0.0
    %1461 = vmatpush2.msra.mxu0 0.0
    %1462 = vmatprep.subr.mxu0 0.0
    %1463 = vmatpush2.msra.mxu0 0.0
    %1464 = vmatprep.subr.mxu0 0.0
    %1465 = vmatpush2.msra.mxu0 0.0
    %1466 = vmatprep.subr.mxu0 0.0
    %1467 = vmatpush2.msra.mxu0 0.0
    %1468 = vmatprep.subr.mxu0 0.0
    %1469 = vmatpush2.msra.mxu0 0.0
    %1470 = vmatprep.subr.mxu0 0.0
    %1471 = vmatpush2.msra.mxu0 0.0
    %1472 = vmatprep.subr.mxu0 0.0
    %1473 = vmatpush2.msra.mxu0 0.0
    %1474 = vmatprep.subr.mxu0 0.0
    %1475 = vmatpush2.msra.mxu0 0.0
    %1476 = vmatprep.subr.mxu0 0.0
    %1477 = vmatpush2.msra.mxu0 0.0
    %1478 = vmatprep.subr.mxu0 0.0
    %1479 = vmatpush2.msra.mxu0 0.0
    %1480 = vmatprep.subr.mxu0 0.0
    %1481 = vmatpush2.msra.mxu0 0.0
    %1482 = vmatprep.mubr.f32.mxu0 0.0
    %1483 = vmatmul.mubr.f32.gmra.mxu0 %v1336
    %v1484 = vpop.f32.mrf.mxu0
    %v1485 = vadd.f32 0.0, %v1484
    %v1486 = vpop.f32.mrf.mxu0
    %v1487 = vadd.f32 0.0, %v1486
    %1488 = vdwg.mxu0
    %v1489 = vadd.f32 %v1414, %v1416
    %v1490 = vadd.f32 %v1489, %v1485
    %v1491 = vadd.f32 %v1490, %v1487
    %1492 = vadd.xlane.f32.xlu0 %v1491
    %v1493 = vpop.xlane.xlu0 %1492
    %v1494 = vmul.f32 %v1414, %v1414
    %v1495 = vmul.f32 %v1416, %v1416
    %v1496 = vmul.f32 %v1485, %v1485
    %v1497 = vmul.f32 %v1487, %v1487
    %v1498 = vadd.f32 %v1494, %v1495
    %v1499 = vadd.f32 %v1498, %v1496
    %v1500 = vadd.f32 %v1499, %v1497
    %1501 = vadd.xlane.f32.xlu0 %v1500
    %v1502 = vpop.xlane.xlu0 %1501
    %v1503 = vmul.f32 %v1493, 0.001953125
    %v1504 = vmul.f32 %v1502, 0.001953125
    %v1505 = vmul.f32 %v1503, %v1503
    %v1506 = vsub.f32 %v1504, %v1505
    %v1507 = vmax.f32 %v1506, 0.0
    %s1508 = scalar_lea.vmem %s13, 24
    %v1509 = vld [vmem:[%s1508] sm:$0xff]
    %v1510 = vadd.f32 %v1507, 1e-05
    %v1511 = vrsqrt.pop %v1510
    %v1512 = vmul.f32 %v1509, %v1511
    %s1513 = scalar_lea.vmem %s14, 24
    %v1514 = vld [vmem:[%s1513] sm:$0xff]
    %v1515 = vmul.f32 %v1503, %v1512
    %v1516 = vsub.f32 %v1514, %v1515
    %1518 = vset.pattern.permute.xlu0 0
    %1519 = vperm.xlu0 %1518, %v1512
    %v1520 = vpop.permute.xlu0 %1519
    %v1522 = vmul.f32 %v1414, %v1520
    %v1523 = vmul.f32 %v1416, %v1520
    %v1524 = vmul.f32 %v1485, %v1520
    %v1525 = vmul.f32 %v1487, %v1520
    %1527 = vset.pattern.permute.xlu0 0
    %1528 = vperm.xlu0 %1527, %v1516
    %v1529 = vpop.permute.xlu0 %1528
    %v1531 = vadd.f32 %v1522, %v1529
    %v1532 = vadd.f32 %v1523, %v1529
    %v1533 = vadd.f32 %v1524, %v1529
    %v1534 = vadd.f32 %v1525, %v1529
    %v1535 = vmax.f32 %v1531, 0.0
    %v1536 = vmax.f32 %v1532, 0.0
    %v1537 = vmax.f32 %v1533, 0.0
    %v1538 = vmax.f32 %v1534, 0.0
    %v1539 = vld [vmem:[#allocation22] sm:$0xff]
    %v1540 = vld [vmem:[#allocation22 + $0x8] sm:$0xff]
    %v1541 = vld [vmem:[#allocation22 + $0x10] sm:$0xff]
    %v1542 = vld [vmem:[#allocation22 + $0x18] sm:$0xff]
    %v1543 = vld [vmem:[#allocation22 + $0x20] sm:$0xff]
    %v1544 = vld [vmem:[#allocation22 + $0x28] sm:$0xff]
    %v1545 = vld [vmem:[#allocation22 + $0x30] sm:$0xff]
    %v1546 = vld [vmem:[#allocation22 + $0x38] sm:$0xff]
    %v1547 = vld [vmem:[#allocation22 + $0x40] sm:$0xff]
    %v1548 = vld [vmem:[#allocation22 + $0x48] sm:$0xff]
    %v1549 = vld [vmem:[#allocation22 + $0x50] sm:$0xff]
    %v1550 = vld [vmem:[#allocation22 + $0x58] sm:$0xff]
    %v1551 = vld [vmem:[#allocation22 + $0x60] sm:$0xff]
    %v1552 = vld [vmem:[#allocation22 + $0x68] sm:$0xff]
    %v1553 = vld [vmem:[#allocation22 + $0x70] sm:$0xff]
    %v1554 = vld [vmem:[#allocation22 + $0x78] sm:$0xff]
    %v1555 = vld [vmem:[#allocation22 + $0x80] sm:$0xff]
    %v1556 = vld [vmem:[#allocation22 + $0x88] sm:$0xff]
    %v1557 = vld [vmem:[#allocation22 + $0x90] sm:$0xff]
    %v1558 = vld [vmem:[#allocation22 + $0x98] sm:$0xff]
    %v1559 = vld [vmem:[#allocation22 + $0xa0] sm:$0xff]
    %v1560 = vld [vmem:[#allocation22 + $0xa8] sm:$0xff]
    %v1561 = vld [vmem:[#allocation22 + $0xb0] sm:$0xff]
    %v1562 = vld [vmem:[#allocation22 + $0xb8] sm:$0xff]
    %v1563 = vld [vmem:[#allocation22 + $0xc0] sm:$0xff]
    %v1564 = vld [vmem:[#allocation22 + $0xc8] sm:$0xff]
    %v1565 = vld [vmem:[#allocation22 + $0xd0] sm:$0xff]
    %v1566 = vld [vmem:[#allocation22 + $0xd8] sm:$0xff]
    %v1567 = vld [vmem:[#allocation22 + $0xe0] sm:$0xff]
    %v1568 = vld [vmem:[#allocation22 + $0xe8] sm:$0xff]
    %v1569 = vld [vmem:[#allocation22 + $0xf0] sm:$0xff]
    %v1570 = vld [vmem:[#allocation22 + $0xf8] sm:$0xff]
    %v1571 = vld [vmem:[#allocation22 + $0x100] sm:$0xff]
    %v1572 = vld [vmem:[#allocation22 + $0x108] sm:$0xff]
    %v1573 = vld [vmem:[#allocation22 + $0x110] sm:$0xff]
    %v1574 = vld [vmem:[#allocation22 + $0x118] sm:$0xff]
    %v1575 = vld [vmem:[#allocation22 + $0x120] sm:$0xff]
    %v1576 = vld [vmem:[#allocation22 + $0x128] sm:$0xff]
    %v1577 = vld [vmem:[#allocation22 + $0x130] sm:$0xff]
    %v1578 = vld [vmem:[#allocation22 + $0x138] sm:$0xff]
    %v1579 = vld [vmem:[#allocation22 + $0x140] sm:$0xff]
    %v1580 = vld [vmem:[#allocation22 + $0x148] sm:$0xff]
    %v1581 = vld [vmem:[#allocation22 + $0x150] sm:$0xff]
    %v1582 = vld [vmem:[#allocation22 + $0x158] sm:$0xff]
    %v1583 = vld [vmem:[#allocation22 + $0x160] sm:$0xff]
    %v1584 = vld [vmem:[#allocation22 + $0x168] sm:$0xff]
    %v1585 = vld [vmem:[#allocation22 + $0x170] sm:$0xff]
    %v1586 = vld [vmem:[#allocation22 + $0x178] sm:$0xff]
    %v1587 = vld [vmem:[#allocation22 + $0x180] sm:$0xff]
    %v1588 = vld [vmem:[#allocation22 + $0x188] sm:$0xff]
    %v1589 = vld [vmem:[#allocation22 + $0x190] sm:$0xff]
    %v1590 = vld [vmem:[#allocation22 + $0x198] sm:$0xff]
    %v1591 = vld [vmem:[#allocation22 + $0x1a0] sm:$0xff]
    %v1592 = vld [vmem:[#allocation22 + $0x1a8] sm:$0xff]
    %v1593 = vld [vmem:[#allocation22 + $0x1b0] sm:$0xff]
    %v1594 = vld [vmem:[#allocation22 + $0x1b8] sm:$0xff]
    %v1595 = vld [vmem:[#allocation22 + $0x1c0] sm:$0xff]
    %v1596 = vld [vmem:[#allocation22 + $0x1c8] sm:$0xff]
    %v1597 = vld [vmem:[#allocation22 + $0x1d0] sm:$0xff]
    %v1598 = vld [vmem:[#allocation22 + $0x1d8] sm:$0xff]
    %v1599 = vld [vmem:[#allocation22 + $0x1e0] sm:$0xff]
    %v1600 = vld [vmem:[#allocation22 + $0x1e8] sm:$0xff]
    %v1601 = vld [vmem:[#allocation22 + $0x1f0] sm:$0xff]
    %v1602 = vld [vmem:[#allocation22 + $0x1f8] sm:$0xff]
    %1603 = vmatprep.subr.mxu0 %v1600
    %1604 = vmatpush1.msra.mxu0 %v1599
    %1605 = vmatprep.subr.mxu0 %v1596
    %1606 = vmatpush1.msra.mxu0 %v1595
    %1607 = vmatprep.subr.mxu0 %v1592
    %1608 = vmatpush1.msra.mxu0 %v1591
    %1609 = vmatprep.subr.mxu0 %v1588
    %1610 = vmatpush1.msra.mxu0 %v1587
    %1611 = vmatprep.subr.mxu0 %v1584
    %1612 = vmatpush1.msra.mxu0 %v1583
    %1613 = vmatprep.subr.mxu0 %v1580
    %1614 = vmatpush1.msra.mxu0 %v1579
    %1615 = vmatprep.subr.mxu0 %v1576
    %1616 = vmatpush1.msra.mxu0 %v1575
    %1617 = vmatprep.subr.mxu0 %v1572
    %1618 = vmatpush1.msra.mxu0 %v1571
    %1619 = vmatprep.subr.mxu0 %v1568
    %1620 = vmatpush1.msra.mxu0 %v1567
    %1621 = vmatprep.subr.mxu0 %v1564
    %1622 = vmatpush1.msra.mxu0 %v1563
    %1623 = vmatprep.subr.mxu0 %v1560
    %1624 = vmatpush1.msra.mxu0 %v1559
    %1625 = vmatprep.subr.mxu0 %v1556
    %1626 = vmatpush1.msra.mxu0 %v1555
    %1627 = vmatprep.subr.mxu0 %v1552
    %1628 = vmatpush1.msra.mxu0 %v1551
    %1629 = vmatprep.subr.mxu0 %v1548
    %1630 = vmatpush1.msra.mxu0 %v1547
    %1631 = vmatprep.subr.mxu0 %v1544
    %1632 = vmatpush1.msra.mxu0 %v1543
    %1633 = vmatprep.subr.mxu0 %v1540
    %1634 = vmatpush1.msra.mxu0 %v1539
    %1635 = vmatprep.subr.mxu0 0.0
    %1636 = vmatpush2.msra.mxu0 0.0
    %1637 = vmatprep.subr.mxu0 0.0
    %1638 = vmatpush2.msra.mxu0 0.0
    %1639 = vmatprep.subr.mxu0 0.0
    %1640 = vmatpush2.msra.mxu0 0.0
    %1641 = vmatprep.subr.mxu0 0.0
    %1642 = vmatpush2.msra.mxu0 0.0
    %1643 = vmatprep.subr.mxu0 0.0
    %1644 = vmatpush2.msra.mxu0 0.0
    %1645 = vmatprep.subr.mxu0 0.0
    %1646 = vmatpush2.msra.mxu0 0.0
    %1647 = vmatprep.subr.mxu0 0.0
    %1648 = vmatpush2.msra.mxu0 0.0
    %1649 = vmatprep.subr.mxu0 0.0
    %1650 = vmatpush2.msra.mxu0 0.0
    %1651 = vmatprep.subr.mxu0 0.0
    %1652 = vmatpush2.msra.mxu0 0.0
    %1653 = vmatprep.subr.mxu0 0.0
    %1654 = vmatpush2.msra.mxu0 0.0
    %1655 = vmatprep.subr.mxu0 0.0
    %1656 = vmatpush2.msra.mxu0 0.0
    %1657 = vmatprep.subr.mxu0 0.0
    %1658 = vmatpush2.msra.mxu0 0.0
    %1659 = vmatprep.subr.mxu0 0.0
    %1660 = vmatpush2.msra.mxu0 0.0
    %1661 = vmatprep.subr.mxu0 0.0
    %1662 = vmatpush2.msra.mxu0 0.0
    %1663 = vmatprep.subr.mxu0 0.0
    %1664 = vmatpush2.msra.mxu0 0.0
    %1665 = vmatprep.subr.mxu0 0.0
    %1666 = vmatpush2.msra.mxu0 0.0
    %1667 = vmatprep.mubr.f32.mxu0 0.0
    %1668 = vmatmul.mubr.f32.gmra.mxu0 %v1327
    %v1669 = vpop.f32.mrf.mxu0
    %v1670 = vadd.f32 %v1535, %v1669
    %v1671 = vpop.f32.mrf.mxu0
    %v1672 = vadd.f32 %v1536, %v1671
    %1673 = vdwg.mxu0
    %1674 = vmatprep.subr.mxu0 %v1602
    %1675 = vmatpush1.msra.mxu0 %v1601
    %1676 = vmatprep.subr.mxu0 %v1598
    %1677 = vmatpush1.msra.mxu0 %v1597
    %1678 = vmatprep.subr.mxu0 %v1594
    %1679 = vmatpush1.msra.mxu0 %v1593
    %1680 = vmatprep.subr.mxu0 %v1590
    %1681 = vmatpush1.msra.mxu0 %v1589
    %1682 = vmatprep.subr.mxu0 %v1586
    %1683 = vmatpush1.msra.mxu0 %v1585
    %1684 = vmatprep.subr.mxu0 %v1582
    %1685 = vmatpush1.msra.mxu0 %v1581
    %1686 = vmatprep.subr.mxu0 %v1578
    %1687 = vmatpush1.msra.mxu0 %v1577
    %1688 = vmatprep.subr.mxu0 %v1574
    %1689 = vmatpush1.msra.mxu0 %v1573
    %1690 = vmatprep.subr.mxu0 %v1570
    %1691 = vmatpush1.msra.mxu0 %v1569
    %1692 = vmatprep.subr.mxu0 %v1566
    %1693 = vmatpush1.msra.mxu0 %v1565
    %1694 = vmatprep.subr.mxu0 %v1562
    %1695 = vmatpush1.msra.mxu0 %v1561
    %1696 = vmatprep.subr.mxu0 %v1558
    %1697 = vmatpush1.msra.mxu0 %v1557
    %1698 = vmatprep.subr.mxu0 %v1554
    %1699 = vmatpush1.msra.mxu0 %v1553
    %1700 = vmatprep.subr.mxu0 %v1550
    %1701 = vmatpush1.msra.mxu0 %v1549
    %1702 = vmatprep.subr.mxu0 %v1546
    %1703 = vmatpush1.msra.mxu0 %v1545
    %1704 = vmatprep.subr.mxu0 %v1542
    %1705 = vmatpush1.msra.mxu0 %v1541
    %1706 = vmatprep.subr.mxu0 0.0
    %1707 = vmatpush2.msra.mxu0 0.0
    %1708 = vmatprep.subr.mxu0 0.0
    %1709 = vmatpush2.msra.mxu0 0.0
    %1710 = vmatprep.subr.mxu0 0.0
    %1711 = vmatpush2.msra.mxu0 0.0
    %1712 = vmatprep.subr.mxu0 0.0
    %1713 = vmatpush2.msra.mxu0 0.0
    %1714 = vmatprep.subr.mxu0 0.0
    %1715 = vmatpush2.msra.mxu0 0.0
    %1716 = vmatprep.subr.mxu0 0.0
    %1717 = vmatpush2.msra.mxu0 0.0
    %1718 = vmatprep.subr.mxu0 0.0
    %1719 = vmatpush2.msra.mxu0 0.0
    %1720 = vmatprep.subr.mxu0 0.0
    %1721 = vmatpush2.msra.mxu0 0.0
    %1722 = vmatprep.subr.mxu0 0.0
    %1723 = vmatpush2.msra.mxu0 0.0
    %1724 = vmatprep.subr.mxu0 0.0
    %1725 = vmatpush2.msra.mxu0 0.0
    %1726 = vmatprep.subr.mxu0 0.0
    %1727 = vmatpush2.msra.mxu0 0.0
    %1728 = vmatprep.subr.mxu0 0.0
    %1729 = vmatpush2.msra.mxu0 0.0
    %1730 = vmatprep.subr.mxu0 0.0
    %1731 = vmatpush2.msra.mxu0 0.0
    %1732 = vmatprep.subr.mxu0 0.0
    %1733 = vmatpush2.msra.mxu0 0.0
    %1734 = vmatprep.subr.mxu0 0.0
    %1735 = vmatpush2.msra.mxu0 0.0
    %1736 = vmatprep.subr.mxu0 0.0
    %1737 = vmatpush2.msra.mxu0 0.0
    %1738 = vmatprep.mubr.f32.mxu0 0.0
    %1739 = vmatmul.mubr.f32.gmra.mxu0 %v1327
    %v1740 = vpop.f32.mrf.mxu0
    %v1741 = vadd.f32 %v1537, %v1740
    %v1742 = vpop.f32.mrf.mxu0
    %v1743 = vadd.f32 %v1538, %v1742
    %1744 = vdwg.mxu0
    %1745 = vst [vmem:[#allocation2 + $0x8] sm:$0xff] %v1670
    %1746 = vst [vmem:[#allocation2 + $0x10] sm:$0xff] %v1672
    %1747 = vst [vmem:[#allocation2 + $0x18] sm:$0xff] %v1741
    %1748 = vst [vmem:[#allocation2 + $0x20] sm:$0xff] %v1743
    %v1749 = vld [vmem:[%s22] sm:$0xff]
    %v1750 = vld [vmem:[%s22 + $0x8] sm:$0xff]
    %v1751 = vld [vmem:[%s22 + $0x10] sm:$0xff]
    %v1752 = vld [vmem:[%s22 + $0x18] sm:$0xff]
    %v1753 = vld [vmem:[%s22 + $0x20] sm:$0x1]
    %v1754 = vld [vmem:[%s22 + $0x28] sm:$0x1]
    %v1755 = vld [vmem:[%s22 + $0x30] sm:$0x1]
    %v1756 = vld [vmem:[%s22 + $0x38] sm:$0x1]
    %v1757 = vld [vmem:[#allocation2] sm:$0xff]
    %v1758 = vld [vmem:[#allocation2 + $0x8] sm:$0xff]
    %v1759 = vld [vmem:[#allocation2 + $0x10] sm:$0xff]
    %v1760 = vld [vmem:[#allocation2 + $0x18] sm:$0xff]
    %v1761 = vld [vmem:[#allocation2 + $0x20] sm:$0xff]
    %v1762 = vlaneseq
    %v1763 = vshrl.u32 %v1762, 7
    %v1764 = vsub.s32 0, %v1763
    %v1765 = vrot.slane %v1749, %v1764
    %v1766 = vlaneseq
    %v1767 = vshrl.u32 %v1766, 7
    %v1768 = vsub.s32 0, %v1767
    %v1769 = vrot.slane %v1750, %v1768
    %v1770 = vlaneseq
    %v1771 = vshrl.u32 %v1770, 7
    %v1772 = vsub.s32 0, %v1771
    %v1773 = vrot.slane %v1751, %v1772
    %v1774 = vlaneseq
    %v1775 = vshrl.u32 %v1774, 7
    %v1776 = vsub.s32 0, %v1775
    %v1777 = vrot.slane %v1752, %v1776
    %1782 = vrot.lane.b32.xlu0 %v1765, 111
    %v1783 = vpop.permute.xlu0 %1782
    %1784 = vrot.lane.b32.xlu0 %v1769, 111
    %v1785 = vpop.permute.xlu0 %1784
    %1786 = vrot.lane.b32.xlu0 %v1773, 111
    %v1787 = vpop.permute.xlu0 %1786
    %1788 = vrot.lane.b32.xlu0 %v1777, 111
    %v1789 = vpop.permute.xlu0 %1788
    %vm1790 = vcmask 908288
    %v1791 = vsel %vm1790, %v1783, %v1785
    %v1792 = vsel %vm1790, %v1785, %v1787
    %v1793 = vsel %vm1790, %v1787, %v1789
    %v1799 = vmul.f32 %v1757, %v1783
    %v1800 = vmul.f32 %v1758, %v1791
    %v1801 = vmul.f32 %v1759, %v1792
    %v1802 = vmul.f32 %v1760, %v1793
    %v1803 = vmul.f32 %v1761, %v1789
    %1809 = vrot.lane.b32.xlu0 %v1799, 17
    %v1810 = vpop.permute.xlu0 %1809
    %1811 = vrot.lane.b32.xlu0 %v1800, 17
    %v1812 = vpop.permute.xlu0 %1811
    %1813 = vrot.lane.b32.xlu0 %v1801, 17
    %v1814 = vpop.permute.xlu0 %1813
    %1815 = vrot.lane.b32.xlu0 %v1802, 17
    %v1816 = vpop.permute.xlu0 %1815
    %1817 = vrot.lane.b32.xlu0 %v1803, 17
    %v1818 = vpop.permute.xlu0 %1817
    %vm1819 = vcmask 138240
    %v1820 = vsel %vm1819, %v1810, %v1812
    %v1821 = vsel %vm1819, %v1812, %v1814
    %v1822 = vsel %vm1819, %v1814, %v1816
    %v1823 = vsel %vm1819, %v1816, %v1818
    %1828 = vst [vmem:[#allocation3] sm:$0xff] %v1820
    %1829 = vst [vmem:[#allocation3 + $0x8] sm:$0xff] %v1821
    %1830 = vst [vmem:[#allocation3 + $0x10] sm:$0xff] %v1822
    %1831 = vst [vmem:[#allocation3 + $0x18] sm:$0xff] %v1823
    %v1832 = vld [vmem:[#allocation2] sm:$0xff]
    %v1833 = vld [vmem:[#allocation2 + $0x8] sm:$0xff]
    %v1834 = vld [vmem:[#allocation2 + $0x10] sm:$0xff]
    %v1835 = vld [vmem:[#allocation2 + $0x18] sm:$0xff]
    %v1836 = vld [vmem:[#allocation2 + $0x20] sm:$0xff]
    %v1837 = vlaneseq
    %v1838 = vshrl.u32 %v1837, 7
    %v1839 = vsub.s32 1, %v1838
    %v1840 = vrot.slane %v1749, %v1839
    %v1841 = vlaneseq
    %v1842 = vshrl.u32 %v1841, 7
    %v1843 = vsub.s32 1, %v1842
    %v1844 = vrot.slane %v1750, %v1843
    %v1845 = vlaneseq
    %v1846 = vshrl.u32 %v1845, 7
    %v1847 = vsub.s32 1, %v1846
    %v1848 = vrot.slane %v1751, %v1847
    %v1849 = vlaneseq
    %v1850 = vshrl.u32 %v1849, 7
    %v1851 = vsub.s32 1, %v1850
    %v1852 = vrot.slane %v1752, %v1851
    %1857 = vrot.lane.b32.xlu0 %v1840, 112
    %v1858 = vpop.permute.xlu0 %1857
    %1859 = vrot.lane.b32.xlu0 %v1844, 112
    %v1860 = vpop.permute.xlu0 %1859
    %1861 = vrot.lane.b32.xlu0 %v1848, 112
    %v1862 = vpop.permute.xlu0 %1861
    %1863 = vrot.lane.b32.xlu0 %v1852, 112
    %v1864 = vpop.permute.xlu0 %1863
    %vm1865 = vcmask 916480
    %v1866 = vsel %vm1865, %v1858, %v1860
    %v1867 = vsel %vm1865, %v1860, %v1862
    %v1868 = vsel %vm1865, %v1862, %v1864
    %v1874 = vmul.f32 %v1832, %v1858
    %v1875 = vmul.f32 %v1833, %v1866
    %v1876 = vmul.f32 %v1834, %v1867
    %v1877 = vmul.f32 %v1835, %v1868
    %v1878 = vmul.f32 %v1836, %v1864
    %1884 = vrot.lane.b32.xlu0 %v1874, 16
    %v1885 = vpop.permute.xlu0 %1884
    %1886 = vrot.lane.b32.xlu0 %v1875, 16
    %v1887 = vpop.permute.xlu0 %1886
    %1888 = vrot.lane.b32.xlu0 %v1876, 16
    %v1889 = vpop.permute.xlu0 %1888
    %1890 = vrot.lane.b32.xlu0 %v1877, 16
    %v1891 = vpop.permute.xlu0 %1890
    %1892 = vrot.lane.b32.xlu0 %v1878, 16
    %v1893 = vpop.permute.xlu0 %1892
    %v1894 = vsel %vm397, %v1885, %v1887
    %v1895 = vsel %vm397, %v1887, %v1889
    %v1896 = vsel %vm397, %v1889, %v1891
    %v1897 = vsel %vm397, %v1891, %v1893
    %1902 = vst [vmem:[#allocation3 + $0x20] sm:$0xff] %v1894
    %1903 = vst [vmem:[#allocation3 + $0x28] sm:$0xff] %v1895
    %1904 = vst [vmem:[#allocation3 + $0x30] sm:$0xff] %v1896
    %1905 = vst [vmem:[#allocation3 + $0x38] sm:$0xff] %v1897
    %v1906 = vld [vmem:[#allocation2] sm:$0xff]
    %v1907 = vld [vmem:[#allocation2 + $0x8] sm:$0xff]
    %v1908 = vld [vmem:[#allocation2 + $0x10] sm:$0xff]
    %v1909 = vld [vmem:[#allocation2 + $0x18] sm:$0xff]
    %v1910 = vld [vmem:[#allocation2 + $0x20] sm:$0xff]
    %v1911 = vlaneseq
    %v1912 = vshrl.u32 %v1911, 7
    %v1913 = vsub.s32 2, %v1912
    %v1914 = vrot.slane %v1749, %v1913
    %v1915 = vlaneseq
    %v1916 = vshrl.u32 %v1915, 7
    %v1917 = vsub.s32 2, %v1916
    %v1918 = vrot.slane %v1750, %v1917
    %v1919 = vlaneseq
    %v1920 = vshrl.u32 %v1919, 7
    %v1921 = vsub.s32 2, %v1920
    %v1922 = vrot.slane %v1751, %v1921
    %v1923 = vlaneseq
    %v1924 = vshrl.u32 %v1923, 7
    %v1925 = vsub.s32 2, %v1924
    %v1926 = vrot.slane %v1752, %v1925
    %1931 = vrot.lane.b32.xlu0 %v1914, 113
    %v1932 = vpop.permute.xlu0 %1931
    %1933 = vrot.lane.b32.xlu0 %v1918, 113
    %v1934 = vpop.permute.xlu0 %1933
    %1935 = vrot.lane.b32.xlu0 %v1922, 113
    %v1936 = vpop.permute.xlu0 %1935
    %1937 = vrot.lane.b32.xlu0 %v1926, 113
    %v1938 = vpop.permute.xlu0 %1937
    %vm1939 = vcmask 924672
    %v1940 = vsel %vm1939, %v1932, %v1934
    %v1941 = vsel %vm1939, %v1934, %v1936
    %v1942 = vsel %vm1939, %v1936, %v1938
    %v1948 = vmul.f32 %v1906, %v1932
    %v1949 = vmul.f32 %v1907, %v1940
    %v1950 = vmul.f32 %v1908, %v1941
    %v1951 = vmul.f32 %v1909, %v1942
    %v1952 = vmul.f32 %v1910, %v1938
    %1958 = vrot.lane.b32.xlu0 %v1948, 15
    %v1959 = vpop.permute.xlu0 %1958
    %1960 = vrot.lane.b32.xlu0 %v1949, 15
    %v1961 = vpop.permute.xlu0 %1960
    %1962 = vrot.lane.b32.xlu0 %v1950, 15
    %v1963 = vpop.permute.xlu0 %1962
    %1964 = vrot.lane.b32.xlu0 %v1951, 15
    %v1965 = vpop.permute.xlu0 %1964
    %1966 = vrot.lane.b32.xlu0 %v1952, 15
    %v1967 = vpop.permute.xlu0 %1966
    %vm1968 = vcmask 121856
    %v1969 = vsel %vm1968, %v1959, %v1961
    %v1970 = vsel %vm1968, %v1961, %v1963
    %v1971 = vsel %vm1968, %v1963, %v1965
    %v1972 = vsel %vm1968, %v1965, %v1967
    %1977 = vst [vmem:[#allocation3 + $0x40] sm:$0xff] %v1969
    %1978 = vst [vmem:[#allocation3 + $0x48] sm:$0xff] %v1970
    %1979 = vst [vmem:[#allocation3 + $0x50] sm:$0xff] %v1971
    %1980 = vst [vmem:[#allocation3 + $0x58] sm:$0xff] %v1972
    %v1981 = vld [vmem:[#allocation2] sm:$0xff]
    %v1982 = vld [vmem:[#allocation2 + $0x8] sm:$0xff]
    %v1983 = vld [vmem:[#allocation2 + $0x10] sm:$0xff]
    %v1984 = vld [vmem:[#allocation2 + $0x18] sm:$0xff]
    %v1985 = vld [vmem:[#allocation2 + $0x20] sm:$0xff]
    %v1986 = vlaneseq
    %v1987 = vshrl.u32 %v1986, 7
    %v1988 = vsub.s32 3, %v1987
    %v1989 = vrot.slane %v1749, %v1988
    %v1990 = vlaneseq
    %v1991 = vshrl.u32 %v1990, 7
    %v1992 = vsub.s32 3, %v1991
    %v1993 = vrot.slane %v1750, %v1992
    %v1994 = vlaneseq
    %v1995 = vshrl.u32 %v1994, 7
    %v1996 = vsub.s32 3, %v1995
    %v1997 = vrot.slane %v1751, %v1996
    %v1998 = vlaneseq
    %v1999 = vshrl.u32 %v1998, 7
    %v2000 = vsub.s32 3, %v1999
    %v2001 = vrot.slane %v1752, %v2000
    %2006 = vrot.lane.b32.xlu0 %v1989, 127
    %v2007 = vpop.permute.xlu0 %2006
    %2008 = vrot.lane.b32.xlu0 %v1993, 127
    %v2009 = vpop.permute.xlu0 %2008
    %2010 = vrot.lane.b32.xlu0 %v1997, 127
    %v2011 = vpop.permute.xlu0 %2010
    %2012 = vrot.lane.b32.xlu0 %v2001, 127
    %v2013 = vpop.permute.xlu0 %2012
    %v2014 = vsel %vm1143, %v2007, %v2009
    %v2015 = vsel %vm1143, %v2009, %v2011
    %v2016 = vsel %vm1143, %v2011, %v2013
    %v2022 = vmul.f32 %v1981, %v2007
    %v2023 = vmul.f32 %v1982, %v2014
    %v2024 = vmul.f32 %v1983, %v2015
    %v2025 = vmul.f32 %v1984, %v2016
    %v2026 = vmul.f32 %v1985, %v2013
    %2032 = vrot.lane.b32.xlu0 %v2022, 1
    %v2033 = vpop.permute.xlu0 %2032
    %2034 = vrot.lane.b32.xlu0 %v2023, 1
    %v2035 = vpop.permute.xlu0 %2034
    %2036 = vrot.lane.b32.xlu0 %v2024, 1
    %v2037 = vpop.permute.xlu0 %2036
    %2038 = vrot.lane.b32.xlu0 %v2025, 1
    %v2039 = vpop.permute.xlu0 %2038
    %2040 = vrot.lane.b32.xlu0 %v2026, 1
    %v2041 = vpop.permute.xlu0 %2040
    %v2042 = vsel %vm666, %v2033, %v2035
    %v2043 = vsel %vm666, %v2035, %v2037
    %v2044 = vsel %vm666, %v2037, %v2039
    %v2045 = vsel %vm666, %v2039, %v2041
    %2050 = vst [vmem:[#allocation3 + $0x60] sm:$0xff] %v2042
    %2051 = vst [vmem:[#allocation3 + $0x68] sm:$0xff] %v2043
    %2052 = vst [vmem:[#allocation3 + $0x70] sm:$0xff] %v2044
    %2053 = vst [vmem:[#allocation3 + $0x78] sm:$0xff] %v2045
    %v2054 = vld [vmem:[#allocation2 + $0x8] sm:$0xff]
    %v2055 = vld [vmem:[#allocation2 + $0x10] sm:$0xff]
    %v2056 = vld [vmem:[#allocation2 + $0x18] sm:$0xff]
    %v2057 = vld [vmem:[#allocation2 + $0x20] sm:$0xff]
    %2058 = vst [vmem:[#allocation3 + $0x80] sm:$0xff] %v2054
    %2059 = vst [vmem:[#allocation3 + $0x88] sm:$0xff] %v2055
    %2060 = vst [vmem:[#allocation3 + $0x90] sm:$0xff] %v2056
    %2061 = vst [vmem:[#allocation3 + $0x98] sm:$0xff] %v2057
    %v2062 = vld [vmem:[#allocation2 + $0x8] sm:$0xff]
    %v2063 = vld [vmem:[#allocation2 + $0x10] sm:$0xff]
    %v2064 = vld [vmem:[#allocation2 + $0x18] sm:$0xff]
    %v2065 = vld [vmem:[#allocation2 + $0x20] sm:$0xff]
    %v2066 = vld [vmem:[#allocation2 + $0x28] sm:$0xff]
    %v2067 = vlaneseq
    %v2068 = vshrl.u32 %v2067, 7
    %v2069 = vsub.s32 5, %v2068
    %v2070 = vrot.slane %v1749, %v2069
    %v2071 = vlaneseq
    %v2072 = vshrl.u32 %v2071, 7
    %v2073 = vsub.s32 5, %v2072
    %v2074 = vrot.slane %v1750, %v2073
    %v2075 = vlaneseq
    %v2076 = vshrl.u32 %v2075, 7
    %v2077 = vsub.s32 5, %v2076
    %v2078 = vrot.slane %v1751, %v2077
    %v2079 = vlaneseq
    %v2080 = vshrl.u32 %v2079, 7
    %v2081 = vsub.s32 5, %v2080
    %v2082 = vrot.slane %v1752, %v2081
    %2087 = vrot.lane.b32.xlu0 %v2070, 1
    %v2088 = vpop.permute.xlu0 %2087
    %2089 = vrot.lane.b32.xlu0 %v2074, 1
    %v2090 = vpop.permute.xlu0 %2089
    %2091 = vrot.lane.b32.xlu0 %v2078, 1
    %v2092 = vpop.permute.xlu0 %2091
    %2093 = vrot.lane.b32.xlu0 %v2082, 1
    %v2094 = vpop.permute.xlu0 %2093
    %v2095 = vsel %vm666, %v2088, %v2090
    %v2096 = vsel %vm666, %v2090, %v2092
    %v2097 = vsel %vm666, %v2092, %v2094
    %v2103 = vmul.f32 %v2062, %v2088
    %v2104 = vmul.f32 %v2063, %v2095
    %v2105 = vmul.f32 %v2064, %v2096
    %v2106 = vmul.f32 %v2065, %v2097
    %v2107 = vmul.f32 %v2066, %v2094
    %2113 = vrot.lane.b32.xlu0 %v2103, 127
    %v2114 = vpop.permute.xlu0 %2113
    %2115 = vrot.lane.b32.xlu0 %v2104, 127
    %v2116 = vpop.permute.xlu0 %2115
    %2117 = vrot.lane.b32.xlu0 %v2105, 127
    %v2118 = vpop.permute.xlu0 %2117
    %2119 = vrot.lane.b32.xlu0 %v2106, 127
    %v2120 = vpop.permute.xlu0 %2119
    %2121 = vrot.lane.b32.xlu0 %v2107, 127
    %v2122 = vpop.permute.xlu0 %2121
    %v2123 = vsel %vm1143, %v2114, %v2116
    %v2124 = vsel %vm1143, %v2116, %v2118
    %v2125 = vsel %vm1143, %v2118, %v2120
    %v2126 = vsel %vm1143, %v2120, %v2122
    %2131 = vst [vmem:[#allocation3 + $0xa0] sm:$0xff] %v2123
    %2132 = vst [vmem:[#allocation3 + $0xa8] sm:$0xff] %v2124
    %2133 = vst [vmem:[#allocation3 + $0xb0] sm:$0xff] %v2125
    %2134 = vst [vmem:[#allocation3 + $0xb8] sm:$0xff] %v2126
    %v2135 = vld [vmem:[#allocation2 + $0x8] sm:$0xff]
    %v2136 = vld [vmem:[#allocation2 + $0x10] sm:$0xff]
    %v2137 = vld [vmem:[#allocation2 + $0x18] sm:$0xff]
    %v2138 = vld [vmem:[#allocation2 + $0x20] sm:$0xff]
    %v2139 = vld [vmem:[#allocation2 + $0x28] sm:$0xff]
    %v2140 = vlaneseq
    %v2141 = vshrl.u32 %v2140, 7
    %v2142 = vsub.s32 6, %v2141
    %v2143 = vrot.slane %v1749, %v2142
    %v2144 = vlaneseq
    %v2145 = vshrl.u32 %v2144, 7
    %v2146 = vsub.s32 6, %v2145
    %v2147 = vrot.slane %v1750, %v2146
    %v2148 = vlaneseq
    %v2149 = vshrl.u32 %v2148, 7
    %v2150 = vsub.s32 6, %v2149
    %v2151 = vrot.slane %v1751, %v2150
    %v2152 = vlaneseq
    %v2153 = vshrl.u32 %v2152, 7
    %v2154 = vsub.s32 6, %v2153
    %v2155 = vrot.slane %v1752, %v2154
    %2160 = vrot.lane.b32.xlu0 %v2143, 15
    %v2161 = vpop.permute.xlu0 %2160
    %2162 = vrot.lane.b32.xlu0 %v2147, 15
    %v2163 = vpop.permute.xlu0 %2162
    %2164 = vrot.lane.b32.xlu0 %v2151, 15
    %v2165 = vpop.permute.xlu0 %2164
    %2166 = vrot.lane.b32.xlu0 %v2155, 15
    %v2167 = vpop.permute.xlu0 %2166
    %v2168 = vsel %vm1968, %v2161, %v2163
    %v2169 = vsel %vm1968, %v2163, %v2165
    %v2170 = vsel %vm1968, %v2165, %v2167
    %v2176 = vmul.f32 %v2135, %v2161
    %v2177 = vmul.f32 %v2136, %v2168
    %v2178 = vmul.f32 %v2137, %v2169
    %v2179 = vmul.f32 %v2138, %v2170
    %v2180 = vmul.f32 %v2139, %v2167
    %2186 = vrot.lane.b32.xlu0 %v2176, 113
    %v2187 = vpop.permute.xlu0 %2186
    %2188 = vrot.lane.b32.xlu0 %v2177, 113
    %v2189 = vpop.permute.xlu0 %2188
    %2190 = vrot.lane.b32.xlu0 %v2178, 113
    %v2191 = vpop.permute.xlu0 %2190
    %2192 = vrot.lane.b32.xlu0 %v2179, 113
    %v2193 = vpop.permute.xlu0 %2192
    %2194 = vrot.lane.b32.xlu0 %v2180, 113
    %v2195 = vpop.permute.xlu0 %2194
    %v2196 = vsel %vm1939, %v2187, %v2189
    %v2197 = vsel %vm1939, %v2189, %v2191
    %v2198 = vsel %vm1939, %v2191, %v2193
    %v2199 = vsel %vm1939, %v2193, %v2195
    %2204 = vst [vmem:[#allocation3 + $0xc0] sm:$0xff] %v2196
    %2205 = vst [vmem:[#allocation3 + $0xc8] sm:$0xff] %v2197
    %2206 = vst [vmem:[#allocation3 + $0xd0] sm:$0xff] %v2198
    %2207 = vst [vmem:[#allocation3 + $0xd8] sm:$0xff] %v2199
    %v2208 = vld [vmem:[#allocation2 + $0x8] sm:$0xff]
    %v2209 = vld [vmem:[#allocation2 + $0x10] sm:$0xff]
    %v2210 = vld [vmem:[#allocation2 + $0x18] sm:$0xff]
    %v2211 = vld [vmem:[#allocation2 + $0x20] sm:$0xff]
    %v2212 = vld [vmem:[#allocation2 + $0x28] sm:$0xff]
    %v2213 = vlaneseq
    %v2214 = vshrl.u32 %v2213, 7
    %v2215 = vsub.s32 7, %v2214
    %v2216 = vrot.slane %v1749, %v2215
    %v2217 = vlaneseq
    %v2218 = vshrl.u32 %v2217, 7
    %v2219 = vsub.s32 7, %v2218
    %v2220 = vrot.slane %v1750, %v2219
    %v2221 = vlaneseq
    %v2222 = vshrl.u32 %v2221, 7
    %v2223 = vsub.s32 7, %v2222
    %v2224 = vrot.slane %v1751, %v2223
    %v2225 = vlaneseq
    %v2226 = vshrl.u32 %v2225, 7
    %v2227 = vsub.s32 7, %v2226
    %v2228 = vrot.slane %v1752, %v2227
    %2233 = vrot.lane.b32.xlu0 %v2216, 16
    %v2234 = vpop.permute.xlu0 %2233
    %2235 = vrot.lane.b32.xlu0 %v2220, 16
    %v2236 = vpop.permute.xlu0 %2235
    %2237 = vrot.lane.b32.xlu0 %v2224, 16
    %v2238 = vpop.permute.xlu0 %2237
    %2239 = vrot.lane.b32.xlu0 %v2228, 16
    %v2240 = vpop.permute.xlu0 %2239
    %v2241 = vsel %vm397, %v2234, %v2236
    %v2242 = vsel %vm397, %v2236, %v2238
    %v2243 = vsel %vm397, %v2238, %v2240
    %v2249 = vmul.f32 %v2208, %v2234
    %v2250 = vmul.f32 %v2209, %v2241
    %v2251 = vmul.f32 %v2210, %v2242
    %v2252 = vmul.f32 %v2211, %v2243
    %v2253 = vmul.f32 %v2212, %v2240
    %2259 = vrot.lane.b32.xlu0 %v2249, 112
    %v2260 = vpop.permute.xlu0 %2259
    %2261 = vrot.lane.b32.xlu0 %v2250, 112
    %v2262 = vpop.permute.xlu0 %2261
    %2263 = vrot.lane.b32.xlu0 %v2251, 112
    %v2264 = vpop.permute.xlu0 %2263
    %2265 = vrot.lane.b32.xlu0 %v2252, 112
    %v2266 = vpop.permute.xlu0 %2265
    %2267 = vrot.lane.b32.xlu0 %v2253, 112
    %v2268 = vpop.permute.xlu0 %2267
    %v2269 = vsel %vm1865, %v2260, %v2262
    %v2270 = vsel %vm1865, %v2262, %v2264
    %v2271 = vsel %vm1865, %v2264, %v2266
    %v2272 = vsel %vm1865, %v2266, %v2268
    %2277 = vst [vmem:[#allocation3 + $0xe0] sm:$0xff] %v2269
    %2278 = vst [vmem:[#allocation3 + $0xe8] sm:$0xff] %v2270
    %2279 = vst [vmem:[#allocation3 + $0xf0] sm:$0xff] %v2271
    %2280 = vst [vmem:[#allocation3 + $0xf8] sm:$0xff] %v2272
    %v2281 = vld [vmem:[#allocation2 + $0x8] sm:$0xff]
    %v2282 = vld [vmem:[#allocation2 + $0x10] sm:$0xff]
    %v2283 = vld [vmem:[#allocation2 + $0x18] sm:$0xff]
    %v2284 = vld [vmem:[#allocation2 + $0x20] sm:$0xff]
    %v2285 = vld [vmem:[#allocation2 + $0x28] sm:$0xff]
    %v2286 = vlaneseq
    %v2287 = vshrl.u32 %v2286, 7
    %v2288 = vsub.s32 0, %v2287
    %v2289 = vrot.slane %v1753, %v2288
    %v2290 = vlaneseq
    %v2291 = vshrl.u32 %v2290, 7
    %v2292 = vsub.s32 0, %v2291
    %v2293 = vrot.slane %v1754, %v2292
    %v2294 = vlaneseq
    %v2295 = vshrl.u32 %v2294, 7
    %v2296 = vsub.s32 0, %v2295
    %v2297 = vrot.slane %v1755, %v2296
    %v2298 = vlaneseq
    %v2299 = vshrl.u32 %v2298, 7
    %v2300 = vsub.s32 0, %v2299
    %v2301 = vrot.slane %v1756, %v2300
    %2306 = vrot.lane.b32.xlu0 %v2289, 17
    %v2307 = vpop.permute.xlu0 %2306
    %2308 = vrot.lane.b32.xlu0 %v2293, 17
    %v2309 = vpop.permute.xlu0 %2308
    %2310 = vrot.lane.b32.xlu0 %v2297, 17
    %v2311 = vpop.permute.xlu0 %2310
    %2312 = vrot.lane.b32.xlu0 %v2301, 17
    %v2313 = vpop.permute.xlu0 %2312
    %v2314 = vsel %vm1819, %v2307, %v2309
    %v2315 = vsel %vm1819, %v2309, %v2311
    %v2316 = vsel %vm1819, %v2311, %v2313
    %v2322 = vmul.f32 %v2281, %v2307
    %v2323 = vmul.f32 %v2282, %v2314
    %v2324 = vmul.f32 %v2283, %v2315
    %v2325 = vmul.f32 %v2284, %v2316
    %v2326 = vmul.f32 %v2285, %v2313
    %2332 = vrot.lane.b32.xlu0 %v2322, 111
    %v2333 = vpop.permute.xlu0 %2332
    %2334 = vrot.lane.b32.xlu0 %v2323, 111
    %v2335 = vpop.permute.xlu0 %2334
    %2336 = vrot.lane.b32.xlu0 %v2324, 111
    %v2337 = vpop.permute.xlu0 %2336
    %2338 = vrot.lane.b32.xlu0 %v2325, 111
    %v2339 = vpop.permute.xlu0 %2338
    %2340 = vrot.lane.b32.xlu0 %v2326, 111
    %v2341 = vpop.permute.xlu0 %2340
    %v2342 = vsel %vm1790, %v2333, %v2335
    %v2343 = vsel %vm1790, %v2335, %v2337
    %v2344 = vsel %vm1790, %v2337, %v2339
    %v2345 = vsel %vm1790, %v2339, %v2341
    %2350 = vst [vmem:[#allocation3 + $0x100] sm:$0xff] %v2342
    %2351 = vst [vmem:[#allocation3 + $0x108] sm:$0xff] %v2343
    %2352 = vst [vmem:[#allocation3 + $0x110] sm:$0xff] %v2344
    %2353 = vst [vmem:[#allocation3 + $0x118] sm:$0xff] %v2345
    %v2354 = vld [vmem:[#allocation18] sm:$0xff]
    %v2355 = vld [vmem:[#allocation3] sm:$0xff]
    %v2356 = vld [vmem:[#allocation3 + $0x8] sm:$0xff]
    %v2357 = vld [vmem:[#allocation3 + $0x10] sm:$0xff]
    %v2358 = vld [vmem:[#allocation3 + $0x18] sm:$0xff]
    %v2359 = vld [vmem:[#allocation3 + $0x20] sm:$0xff]
    %v2360 = vld [vmem:[#allocation3 + $0x28] sm:$0xff]
    %v2361 = vld [vmem:[#allocation3 + $0x30] sm:$0xff]
    %v2362 = vld [vmem:[#allocation3 + $0x38] sm:$0xff]
    %v2363 = vld [vmem:[#allocation3 + $0x40] sm:$0xff]
    %v2364 = vld [vmem:[#allocation3 + $0x48] sm:$0xff]
    %v2365 = vld [vmem:[#allocation3 + $0x50] sm:$0xff]
    %v2366 = vld [vmem:[#allocation3 + $0x58] sm:$0xff]
    %v2367 = vld [vmem:[#allocation3 + $0x60] sm:$0xff]
    %v2368 = vld [vmem:[#allocation3 + $0x68] sm:$0xff]
    %v2369 = vld [vmem:[#allocation3 + $0x70] sm:$0xff]
    %v2370 = vld [vmem:[#allocation3 + $0x78] sm:$0xff]
    %v2371 = vld [vmem:[#allocation3 + $0x80] sm:$0xff]
    %v2372 = vld [vmem:[#allocation3 + $0x88] sm:$0xff]
    %v2373 = vld [vmem:[#allocation3 + $0x90] sm:$0xff]
    %v2374 = vld [vmem:[#allocation3 + $0x98] sm:$0xff]
    %v2375 = vld [vmem:[#allocation3 + $0xa0] sm:$0xff]
    %v2376 = vld [vmem:[#allocation3 + $0xa8] sm:$0xff]
    %v2377 = vld [vmem:[#allocation3 + $0xb0] sm:$0xff]
    %v2378 = vld [vmem:[#allocation3 + $0xb8] sm:$0xff]
    %v2379 = vld [vmem:[#allocation3 + $0xc0] sm:$0xff]
    %v2380 = vld [vmem:[#allocation3 + $0xc8] sm:$0xff]
    %v2381 = vld [vmem:[#allocation3 + $0xd0] sm:$0xff]
    %v2382 = vld [vmem:[#allocation3 + $0xd8] sm:$0xff]
    %v2383 = vld [vmem:[#allocation3 + $0xe0] sm:$0xff]
    %v2384 = vld [vmem:[#allocation3 + $0xe8] sm:$0xff]
    %v2385 = vld [vmem:[#allocation3 + $0xf0] sm:$0xff]
    %v2386 = vld [vmem:[#allocation3 + $0xf8] sm:$0xff]
    %v2387 = vld [vmem:[#allocation3 + $0x100] sm:$0xff]
    %v2388 = vld [vmem:[#allocation3 + $0x108] sm:$0xff]
    %v2389 = vld [vmem:[#allocation3 + $0x110] sm:$0xff]
    %v2390 = vld [vmem:[#allocation3 + $0x118] sm:$0xff]
    %v2392 = vsel %vm742, %v2354, 0
    %2394 = vmatprep.subr.mxu0 0.0
    %2395 = vmatpush1.msra.mxu0 0.0
    %2396 = vmatprep.subr.mxu0 0.0
    %2397 = vmatpush1.msra.mxu0 0.0
    %2398 = vmatprep.subr.mxu0 0.0
    %2399 = vmatpush1.msra.mxu0 0.0
    %2400 = vmatprep.subr.mxu0 0.0
    %2401 = vmatpush1.msra.mxu0 0.0
    %2402 = vmatprep.subr.mxu0 0.0
    %2403 = vmatpush1.msra.mxu0 0.0
    %2404 = vmatprep.subr.mxu0 0.0
    %2405 = vmatpush1.msra.mxu0 0.0
    %2406 = vmatprep.subr.mxu0 0.0
    %2407 = vmatpush1.msra.mxu0 0.0
    %2408 = vmatprep.subr.mxu0 %v2388
    %2409 = vmatpush1.msra.mxu0 %v2387
    %2410 = vmatprep.subr.mxu0 %v2384
    %2411 = vmatpush1.msra.mxu0 %v2383
    %2412 = vmatprep.subr.mxu0 %v2380
    %2413 = vmatpush1.msra.mxu0 %v2379
    %2414 = vmatprep.subr.mxu0 %v2376
    %2415 = vmatpush1.msra.mxu0 %v2375
    %2416 = vmatprep.subr.mxu0 %v2372
    %2417 = vmatpush1.msra.mxu0 %v2371
    %2418 = vmatprep.subr.mxu0 %v2368
    %2419 = vmatpush1.msra.mxu0 %v2367
    %2420 = vmatprep.subr.mxu0 %v2364
    %2421 = vmatpush1.msra.mxu0 %v2363
    %2422 = vmatprep.subr.mxu0 %v2360
    %2423 = vmatpush1.msra.mxu0 %v2359
    %2424 = vmatprep.subr.mxu0 %v2356
    %2425 = vmatpush1.msra.mxu0 %v2355
    %2426 = vmatprep.subr.mxu0 0.0
    %2427 = vmatpush2.msra.mxu0 0.0
    %2428 = vmatprep.subr.mxu0 0.0
    %2429 = vmatpush2.msra.mxu0 0.0
    %2430 = vmatprep.subr.mxu0 0.0
    %2431 = vmatpush2.msra.mxu0 0.0
    %2432 = vmatprep.subr.mxu0 0.0
    %2433 = vmatpush2.msra.mxu0 0.0
    %2434 = vmatprep.subr.mxu0 0.0
    %2435 = vmatpush2.msra.mxu0 0.0
    %2436 = vmatprep.subr.mxu0 0.0
    %2437 = vmatpush2.msra.mxu0 0.0
    %2438 = vmatprep.subr.mxu0 0.0
    %2439 = vmatpush2.msra.mxu0 0.0
    %2440 = vmatprep.subr.mxu0 0.0
    %2441 = vmatpush2.msra.mxu0 0.0
    %2442 = vmatprep.subr.mxu0 0.0
    %2443 = vmatpush2.msra.mxu0 0.0
    %2444 = vmatprep.subr.mxu0 0.0
    %2445 = vmatpush2.msra.mxu0 0.0
    %2446 = vmatprep.subr.mxu0 0.0
    %2447 = vmatpush2.msra.mxu0 0.0
    %2448 = vmatprep.subr.mxu0 0.0
    %2449 = vmatpush2.msra.mxu0 0.0
    %2450 = vmatprep.subr.mxu0 0.0
    %2451 = vmatpush2.msra.mxu0 0.0
    %2452 = vmatprep.subr.mxu0 0.0
    %2453 = vmatpush2.msra.mxu0 0.0
    %2454 = vmatprep.subr.mxu0 0.0
    %2455 = vmatpush2.msra.mxu0 0.0
    %2456 = vmatprep.subr.mxu0 0.0
    %2457 = vmatpush2.msra.mxu0 0.0
    %2458 = vmatprep.mubr.f32.mxu0 0.0
    %2459 = vmatmul.mubr.f32.gmra.mxu0 %v2392
    %v2460 = vpop.f32.mrf.mxu0
    %v2461 = vadd.f32 0.0, %v2460
    %v2462 = vpop.f32.mrf.mxu0
    %v2463 = vadd.f32 0.0, %v2462
    %2464 = vdwg.mxu0
    %2465 = vmatprep.subr.mxu0 0.0
    %2466 = vmatpush1.msra.mxu0 0.0
    %2467 = vmatprep.subr.mxu0 0.0
    %2468 = vmatpush1.msra.mxu0 0.0
    %2469 = vmatprep.subr.mxu0 0.0
    %2470 = vmatpush1.msra.mxu0 0.0
    %2471 = vmatprep.subr.mxu0 0.0
    %2472 = vmatpush1.msra.mxu0 0.0
    %2473 = vmatprep.subr.mxu0 0.0
    %2474 = vmatpush1.msra.mxu0 0.0
    %2475 = vmatprep.subr.mxu0 0.0
    %2476 = vmatpush1.msra.mxu0 0.0
    %2477 = vmatprep.subr.mxu0 0.0
    %2478 = vmatpush1.msra.mxu0 0.0
    %2479 = vmatprep.subr.mxu0 %v2390
    %2480 = vmatpush1.msra.mxu0 %v2389
    %2481 = vmatprep.subr.mxu0 %v2386
    %2482 = vmatpush1.msra.mxu0 %v2385
    %2483 = vmatprep.subr.mxu0 %v2382
    %2484 = vmatpush1.msra.mxu0 %v2381
    %2485 = vmatprep.subr.mxu0 %v2378
    %2486 = vmatpush1.msra.mxu0 %v2377
    %2487 = vmatprep.subr.mxu0 %v2374
    %2488 = vmatpush1.msra.mxu0 %v2373
    %2489 = vmatprep.subr.mxu0 %v2370
    %2490 = vmatpush1.msra.mxu0 %v2369
    %2491 = vmatprep.subr.mxu0 %v2366
    %2492 = vmatpush1.msra.mxu0 %v2365
    %2493 = vmatprep.subr.mxu0 %v2362
    %2494 = vmatpush1.msra.mxu0 %v2361
    %2495 = vmatprep.subr.mxu0 %v2358
    %2496 = vmatpush1.msra.mxu0 %v2357
    %2497 = vmatprep.subr.mxu0 0.0
    %2498 = vmatpush2.msra.mxu0 0.0
    %2499 = vmatprep.subr.mxu0 0.0
    %2500 = vmatpush2.msra.mxu0 0.0
    %2501 = vmatprep.subr.mxu0 0.0
    %2502 = vmatpush2.msra.mxu0 0.0
    %2503 = vmatprep.subr.mxu0 0.0
    %2504 = vmatpush2.msra.mxu0 0.0
    %2505 = vmatprep.subr.mxu0 0.0
    %2506 = vmatpush2.msra.mxu0 0.0
    %2507 = vmatprep.subr.mxu0 0.0
    %2508 = vmatpush2.msra.mxu0 0.0
    %2509 = vmatprep.subr.mxu0 0.0
    %2510 = vmatpush2.msra.mxu0 0.0
    %2511 = vmatprep.subr.mxu0 0.0
    %2512 = vmatpush2.msra.mxu0 0.0
    %2513 = vmatprep.subr.mxu0 0.0
    %2514 = vmatpush2.msra.mxu0 0.0
    %2515 = vmatprep.subr.mxu0 0.0
    %2516 = vmatpush2.msra.mxu0 0.0
    %2517 = vmatprep.subr.mxu0 0.0
    %2518 = vmatpush2.msra.mxu0 0.0
    %2519 = vmatprep.subr.mxu0 0.0
    %2520 = vmatpush2.msra.mxu0 0.0
    %2521 = vmatprep.subr.mxu0 0.0
    %2522 = vmatpush2.msra.mxu0 0.0
    %2523 = vmatprep.subr.mxu0 0.0
    %2524 = vmatpush2.msra.mxu0 0.0
    %2525 = vmatprep.subr.mxu0 0.0
    %2526 = vmatpush2.msra.mxu0 0.0
    %2527 = vmatprep.subr.mxu0 0.0
    %2528 = vmatpush2.msra.mxu0 0.0
    %2529 = vmatprep.mubr.f32.mxu0 0.0
    %2530 = vmatmul.mubr.f32.gmra.mxu0 %v2392
    %v2531 = vpop.f32.mrf.mxu0
    %v2532 = vadd.f32 0.0, %v2531
    %v2533 = vpop.f32.mrf.mxu0
    %v2534 = vadd.f32 0.0, %v2533
    %2535 = vdwg.mxu0
    %v2536 = vadd.f32 %v2461, %v2463
    %v2537 = vadd.f32 %v2536, %v2532
    %v2538 = vadd.f32 %v2537, %v2534
    %2539 = vadd.xlane.f32.xlu0 %v2538
    %v2540 = vpop.xlane.xlu0 %2539
    %v2541 = vmul.f32 %v2461, %v2461
    %v2542 = vmul.f32 %v2463, %v2463
    %v2543 = vmul.f32 %v2532, %v2532
    %v2544 = vmul.f32 %v2534, %v2534
    %v2545 = vadd.f32 %v2541, %v2542
    %v2546 = vadd.f32 %v2545, %v2543
    %v2547 = vadd.f32 %v2546, %v2544
    %2548 = vadd.xlane.f32.xlu0 %v2547
    %v2549 = vpop.xlane.xlu0 %2548
    %v2550 = vmul.f32 %v2540, 0.001953125
    %v2551 = vmul.f32 %v2549, 0.001953125
    %v2552 = vmul.f32 %v2550, %v2550
    %v2553 = vsub.f32 %v2551, %v2552
    %v2554 = vmax.f32 %v2553, 0.0
    %s2555 = scalar_lea.vmem %s13, 48
    %v2556 = vld [vmem:[%s2555] sm:$0xff]
    %v2557 = vadd.f32 %v2554, 1e-05
    %v2558 = vrsqrt.pop %v2557
    %v2559 = vmul.f32 %v2556, %v2558
    %s2560 = scalar_lea.vmem %s14, 48
    %v2561 = vld [vmem:[%s2560] sm:$0xff]
    %v2562 = vmul.f32 %v2550, %v2559
    %v2563 = vsub.f32 %v2561, %v2562
    %2565 = vset.pattern.permute.xlu0 0
    %2566 = vperm.xlu0 %2565, %v2559
    %v2567 = vpop.permute.xlu0 %2566
    %v2569 = vmul.f32 %v2461, %v2567
    %v2570 = vmul.f32 %v2463, %v2567
    %v2571 = vmul.f32 %v2532, %v2567
    %v2572 = vmul.f32 %v2534, %v2567
    %2574 = vset.pattern.permute.xlu0 0
    %2575 = vperm.xlu0 %2574, %v2563
    %v2576 = vpop.permute.xlu0 %2575
    %v2578 = vadd.f32 %v2569, %v2576
    %v2579 = vadd.f32 %v2570, %v2576
    %v2580 = vadd.f32 %v2571, %v2576
    %v2581 = vadd.f32 %v2572, %v2576
    %v2582 = vmax.f32 %v2578, 0.0
    %v2583 = vmax.f32 %v2579, 0.0
    %v2584 = vmax.f32 %v2580, 0.0
    %v2585 = vmax.f32 %v2581, 0.0
    %v2586 = vld [vmem:[#allocation22] sm:$0xff]
    %v2587 = vld [vmem:[#allocation22 + $0x8] sm:$0xff]
    %v2588 = vld [vmem:[#allocation22 + $0x10] sm:$0xff]
    %v2589 = vld [vmem:[#allocation22 + $0x18] sm:$0xff]
    %v2590 = vld [vmem:[#allocation22 + $0x20] sm:$0xff]
    %v2591 = vld [vmem:[#allocation22 + $0x28] sm:$0xff]
    %v2592 = vld [vmem:[#allocation22 + $0x30] sm:$0xff]
    %v2593 = vld [vmem:[#allocation22 + $0x38] sm:$0xff]
    %v2594 = vld [vmem:[#allocation22 + $0x40] sm:$0xff]
    %v2595 = vld [vmem:[#allocation22 + $0x48] sm:$0xff]
    %v2596 = vld [vmem:[#allocation22 + $0x50] sm:$0xff]
    %v2597 = vld [vmem:[#allocation22 + $0x58] sm:$0xff]
    %v2598 = vld [vmem:[#allocation22 + $0x60] sm:$0xff]
    %v2599 = vld [vmem:[#allocation22 + $0x68] sm:$0xff]
    %v2600 = vld [vmem:[#allocation22 + $0x70] sm:$0xff]
    %v2601 = vld [vmem:[#allocation22 + $0x78] sm:$0xff]
    %v2602 = vld [vmem:[#allocation22 + $0x80] sm:$0xff]
    %v2603 = vld [vmem:[#allocation22 + $0x88] sm:$0xff]
    %v2604 = vld [vmem:[#allocation22 + $0x90] sm:$0xff]
    %v2605 = vld [vmem:[#allocation22 + $0x98] sm:$0xff]
    %v2606 = vld [vmem:[#allocation22 + $0xa0] sm:$0xff]
    %v2607 = vld [vmem:[#allocation22 + $0xa8] sm:$0xff]
    %v2608 = vld [vmem:[#allocation22 + $0xb0] sm:$0xff]
    %v2609 = vld [vmem:[#allocation22 + $0xb8] sm:$0xff]
    %v2610 = vld [vmem:[#allocation22 + $0xc0] sm:$0xff]
    %v2611 = vld [vmem:[#allocation22 + $0xc8] sm:$0xff]
    %v2612 = vld [vmem:[#allocation22 + $0xd0] sm:$0xff]
    %v2613 = vld [vmem:[#allocation22 + $0xd8] sm:$0xff]
    %v2614 = vld [vmem:[#allocation22 + $0xe0] sm:$0xff]
    %v2615 = vld [vmem:[#allocation22 + $0xe8] sm:$0xff]
    %v2616 = vld [vmem:[#allocation22 + $0xf0] sm:$0xff]
    %v2617 = vld [vmem:[#allocation22 + $0xf8] sm:$0xff]
    %v2618 = vld [vmem:[#allocation22 + $0x100] sm:$0xff]
    %v2619 = vld [vmem:[#allocation22 + $0x108] sm:$0xff]
    %v2620 = vld [vmem:[#allocation22 + $0x110] sm:$0xff]
    %v2621 = vld [vmem:[#allocation22 + $0x118] sm:$0xff]
    %v2622 = vld [vmem:[#allocation22 + $0x120] sm:$0xff]
    %v2623 = vld [vmem:[#allocation22 + $0x128] sm:$0xff]
    %v2624 = vld [vmem:[#allocation22 + $0x130] sm:$0xff]
    %v2625 = vld [vmem:[#allocation22 + $0x138] sm:$0xff]
    %v2626 = vld [vmem:[#allocation22 + $0x140] sm:$0xff]
    %v2627 = vld [vmem:[#allocation22 + $0x148] sm:$0xff]
    %v2628 = vld [vmem:[#allocation22 + $0x150] sm:$0xff]
    %v2629 = vld [vmem:[#allocation22 + $0x158] sm:$0xff]
    %v2630 = vld [vmem:[#allocation22 + $0x160] sm:$0xff]
    %v2631 = vld [vmem:[#allocation22 + $0x168] sm:$0xff]
    %v2632 = vld [vmem:[#allocation22 + $0x170] sm:$0xff]
    %v2633 = vld [vmem:[#allocation22 + $0x178] sm:$0xff]
    %v2634 = vld [vmem:[#allocation22 + $0x180] sm:$0xff]
    %v2635 = vld [vmem:[#allocation22 + $0x188] sm:$0xff]
    %v2636 = vld [vmem:[#allocation22 + $0x190] sm:$0xff]
    %v2637 = vld [vmem:[#allocation22 + $0x198] sm:$0xff]
    %v2638 = vld [vmem:[#allocation22 + $0x1a0] sm:$0xff]
    %v2639 = vld [vmem:[#allocation22 + $0x1a8] sm:$0xff]
    %v2640 = vld [vmem:[#allocation22 + $0x1b0] sm:$0xff]
    %v2641 = vld [vmem:[#allocation22 + $0x1b8] sm:$0xff]
    %v2642 = vld [vmem:[#allocation22 + $0x1c0] sm:$0xff]
    %v2643 = vld [vmem:[#allocation22 + $0x1c8] sm:$0xff]
    %v2644 = vld [vmem:[#allocation22 + $0x1d0] sm:$0xff]
    %v2645 = vld [vmem:[#allocation22 + $0x1d8] sm:$0xff]
    %v2646 = vld [vmem:[#allocation22 + $0x1e0] sm:$0xff]
    %v2647 = vld [vmem:[#allocation22 + $0x1e8] sm:$0xff]
    %v2648 = vld [vmem:[#allocation22 + $0x1f0] sm:$0xff]
    %v2649 = vld [vmem:[#allocation22 + $0x1f8] sm:$0xff]
    %2650 = vmatprep.subr.mxu0 %v2647
    %2651 = vmatpush1.msra.mxu0 %v2646
    %2652 = vmatprep.subr.mxu0 %v2643
    %2653 = vmatpush1.msra.mxu0 %v2642
    %2654 = vmatprep.subr.mxu0 %v2639
    %2655 = vmatpush1.msra.mxu0 %v2638
    %2656 = vmatprep.subr.mxu0 %v2635
    %2657 = vmatpush1.msra.mxu0 %v2634
    %2658 = vmatprep.subr.mxu0 %v2631
    %2659 = vmatpush1.msra.mxu0 %v2630
    %2660 = vmatprep.subr.mxu0 %v2627
    %2661 = vmatpush1.msra.mxu0 %v2626
    %2662 = vmatprep.subr.mxu0 %v2623
    %2663 = vmatpush1.msra.mxu0 %v2622
    %2664 = vmatprep.subr.mxu0 %v2619
    %2665 = vmatpush1.msra.mxu0 %v2618
    %2666 = vmatprep.subr.mxu0 %v2615
    %2667 = vmatpush1.msra.mxu0 %v2614
    %2668 = vmatprep.subr.mxu0 %v2611
    %2669 = vmatpush1.msra.mxu0 %v2610
    %2670 = vmatprep.subr.mxu0 %v2607
    %2671 = vmatpush1.msra.mxu0 %v2606
    %2672 = vmatprep.subr.mxu0 %v2603
    %2673 = vmatpush1.msra.mxu0 %v2602
    %2674 = vmatprep.subr.mxu0 %v2599
    %2675 = vmatpush1.msra.mxu0 %v2598
    %2676 = vmatprep.subr.mxu0 %v2595
    %2677 = vmatpush1.msra.mxu0 %v2594
    %2678 = vmatprep.subr.mxu0 %v2591
    %2679 = vmatpush1.msra.mxu0 %v2590
    %2680 = vmatprep.subr.mxu0 %v2587
    %2681 = vmatpush1.msra.mxu0 %v2586
    %2682 = vmatprep.subr.mxu0 0.0
    %2683 = vmatpush2.msra.mxu0 0.0
    %2684 = vmatprep.subr.mxu0 0.0
    %2685 = vmatpush2.msra.mxu0 0.0
    %2686 = vmatprep.subr.mxu0 0.0
    %2687 = vmatpush2.msra.mxu0 0.0
    %2688 = vmatprep.subr.mxu0 0.0
    %2689 = vmatpush2.msra.mxu0 0.0
    %2690 = vmatprep.subr.mxu0 0.0
    %2691 = vmatpush2.msra.mxu0 0.0
    %2692 = vmatprep.subr.mxu0 0.0
    %2693 = vmatpush2.msra.mxu0 0.0
    %2694 = vmatprep.subr.mxu0 0.0
    %2695 = vmatpush2.msra.mxu0 0.0
    %2696 = vmatprep.subr.mxu0 0.0
    %2697 = vmatpush2.msra.mxu0 0.0
    %2698 = vmatprep.subr.mxu0 0.0
    %2699 = vmatpush2.msra.mxu0 0.0
    %2700 = vmatprep.subr.mxu0 0.0
    %2701 = vmatpush2.msra.mxu0 0.0
    %2702 = vmatprep.subr.mxu0 0.0
    %2703 = vmatpush2.msra.mxu0 0.0
    %2704 = vmatprep.subr.mxu0 0.0
    %2705 = vmatpush2.msra.mxu0 0.0
    %2706 = vmatprep.subr.mxu0 0.0
    %2707 = vmatpush2.msra.mxu0 0.0
    %2708 = vmatprep.subr.mxu0 0.0
    %2709 = vmatpush2.msra.mxu0 0.0
    %2710 = vmatprep.subr.mxu0 0.0
    %2711 = vmatpush2.msra.mxu0 0.0
    %2712 = vmatprep.subr.mxu0 0.0
    %2713 = vmatpush2.msra.mxu0 0.0
    %2714 = vmatprep.mubr.f32.mxu0 0.0
    %2715 = vmatmul.mubr.f32.gmra.mxu0 %v1327
    %v2716 = vpop.f32.mrf.mxu0
    %v2717 = vadd.f32 0.0, %v2716
    %v2718 = vpop.f32.mrf.mxu0
    %v2719 = vadd.f32 0.0, %v2718
    %2720 = vdwg.mxu0
    %2721 = vmatprep.subr.mxu0 %v2649
    %2722 = vmatpush1.msra.mxu0 %v2648
    %2723 = vmatprep.subr.mxu0 %v2645
    %2724 = vmatpush1.msra.mxu0 %v2644
    %2725 = vmatprep.subr.mxu0 %v2641
    %2726 = vmatpush1.msra.mxu0 %v2640
    %2727 = vmatprep.subr.mxu0 %v2637
    %2728 = vmatpush1.msra.mxu0 %v2636
    %2729 = vmatprep.subr.mxu0 %v2633
    %2730 = vmatpush1.msra.mxu0 %v2632
    %2731 = vmatprep.subr.mxu0 %v2629
    %2732 = vmatpush1.msra.mxu0 %v2628
    %2733 = vmatprep.subr.mxu0 %v2625
    %2734 = vmatpush1.msra.mxu0 %v2624
    %2735 = vmatprep.subr.mxu0 %v2621
    %2736 = vmatpush1.msra.mxu0 %v2620
    %2737 = vmatprep.subr.mxu0 %v2617
    %2738 = vmatpush1.msra.mxu0 %v2616
    %2739 = vmatprep.subr.mxu0 %v2613
    %2740 = vmatpush1.msra.mxu0 %v2612
    %2741 = vmatprep.subr.mxu0 %v2609
    %2742 = vmatpush1.msra.mxu0 %v2608
    %2743 = vmatprep.subr.mxu0 %v2605
    %2744 = vmatpush1.msra.mxu0 %v2604
    %2745 = vmatprep.subr.mxu0 %v2601
    %2746 = vmatpush1.msra.mxu0 %v2600
    %2747 = vmatprep.subr.mxu0 %v2597
    %2748 = vmatpush1.msra.mxu0 %v2596
    %2749 = vmatprep.subr.mxu0 %v2593
    %2750 = vmatpush1.msra.mxu0 %v2592
    %2751 = vmatprep.subr.mxu0 %v2589
    %2752 = vmatpush1.msra.mxu0 %v2588
    %2753 = vmatprep.subr.mxu0 0.0
    %2754 = vmatpush2.msra.mxu0 0.0
    %2755 = vmatprep.subr.mxu0 0.0
    %2756 = vmatpush2.msra.mxu0 0.0
    %2757 = vmatprep.subr.mxu0 0.0
    %2758 = vmatpush2.msra.mxu0 0.0
    %2759 = vmatprep.subr.mxu0 0.0
    %2760 = vmatpush2.msra.mxu0 0.0
    %2761 = vmatprep.subr.mxu0 0.0
    %2762 = vmatpush2.msra.mxu0 0.0
    %2763 = vmatprep.subr.mxu0 0.0
    %2764 = vmatpush2.msra.mxu0 0.0
    %2765 = vmatprep.subr.mxu0 0.0
    %2766 = vmatpush2.msra.mxu0 0.0
    %2767 = vmatprep.subr.mxu0 0.0
    %2768 = vmatpush2.msra.mxu0 0.0
    %2769 = vmatprep.subr.mxu0 0.0
    %2770 = vmatpush2.msra.mxu0 0.0
    %2771 = vmatprep.subr.mxu0 0.0
    %2772 = vmatpush2.msra.mxu0 0.0
    %2773 = vmatprep.subr.mxu0 0.0
    %2774 = vmatpush2.msra.mxu0 0.0
    %2775 = vmatprep.subr.mxu0 0.0
    %2776 = vmatpush2.msra.mxu0 0.0
    %2777 = vmatprep.subr.mxu0 0.0
    %2778 = vmatpush2.msra.mxu0 0.0
    %2779 = vmatprep.subr.mxu0 0.0
    %2780 = vmatpush2.msra.mxu0 0.0
    %2781 = vmatprep.subr.mxu0 0.0
    %2782 = vmatpush2.msra.mxu0 0.0
    %2783 = vmatprep.subr.mxu0 0.0
    %2784 = vmatpush2.msra.mxu0 0.0
    %2785 = vmatprep.mubr.f32.mxu0 0.0
    %2786 = vmatmul.mubr.f32.gmra.mxu0 %v1327
    %v2787 = vpop.f32.mrf.mxu0
    %v2788 = vadd.f32 0.0, %v2787
    %v2789 = vpop.f32.mrf.mxu0
    %v2790 = vadd.f32 0.0, %v2789
    %2791 = vdwg.mxu0
    %v2792 = vld [vmem:[%s18] sm:$0xff]
    %v2793 = vld [vmem:[%s18 + $0x8] sm:$0xff]
    %v2794 = vld [vmem:[%s18 + $0x10] sm:$0xff]
    %v2795 = vld [vmem:[%s18 + $0x18] sm:$0xff]
    %v2796 = vld [vmem:[%s18 + $0x20] sm:$0xff]
    %v2797 = vld [vmem:[%s18 + $0x28] sm:$0xff]
    %v2798 = vld [vmem:[%s18 + $0x30] sm:$0xff]
    %v2799 = vld [vmem:[%s18 + $0x38] sm:$0xff]
    %v2800 = vld [vmem:[%s18 + $0x40] sm:$0xff]
    %v2801 = vld [vmem:[%s18 + $0x48] sm:$0xff]
    %v2802 = vld [vmem:[%s18 + $0x50] sm:$0xff]
    %v2803 = vld [vmem:[%s18 + $0x58] sm:$0xff]
    %v2804 = vld [vmem:[%s18 + $0x60] sm:$0xff]
    %v2805 = vld [vmem:[%s18 + $0x68] sm:$0xff]
    %v2806 = vld [vmem:[%s18 + $0x70] sm:$0xff]
    %v2807 = vld [vmem:[%s18 + $0x78] sm:$0xff]
    %2808 = vmatprep.subr.mxu0 0.0
    %2809 = vmatpush1.msra.mxu0 0.0
    %2810 = vmatprep.subr.mxu0 0.0
    %2811 = vmatpush1.msra.mxu0 0.0
    %2812 = vmatprep.subr.mxu0 0.0
    %2813 = vmatpush1.msra.mxu0 0.0
    %2814 = vmatprep.subr.mxu0 0.0
    %2815 = vmatpush1.msra.mxu0 0.0
    %2816 = vmatprep.subr.mxu0 0.0
    %2817 = vmatpush1.msra.mxu0 0.0
    %2818 = vmatprep.subr.mxu0 0.0
    %2819 = vmatpush1.msra.mxu0 0.0
    %2820 = vmatprep.subr.mxu0 0.0
    %2821 = vmatpush1.msra.mxu0 0.0
    %2822 = vmatprep.subr.mxu0 0.0
    %2823 = vmatpush1.msra.mxu0 0.0
    %2824 = vmatprep.subr.mxu0 0.0
    %2825 = vmatpush1.msra.mxu0 0.0
    %2826 = vmatprep.subr.mxu0 0.0
    %2827 = vmatpush1.msra.mxu0 0.0
    %2828 = vmatprep.subr.mxu0 0.0
    %2829 = vmatpush1.msra.mxu0 0.0
    %2830 = vmatprep.subr.mxu0 0.0
    %2831 = vmatpush1.msra.mxu0 0.0
    %2832 = vmatprep.subr.mxu0 %v2805
    %2833 = vmatpush1.msra.mxu0 %v2804
    %2834 = vmatprep.subr.mxu0 %v2801
    %2835 = vmatpush1.msra.mxu0 %v2800
    %2836 = vmatprep.subr.mxu0 %v2797
    %2837 = vmatpush1.msra.mxu0 %v2796
    %2838 = vmatprep.subr.mxu0 %v2793
    %2839 = vmatpush1.msra.mxu0 %v2792
    %2840 = vmatprep.subr.mxu0 0.0
    %2841 = vmatpush2.msra.mxu0 0.0
    %2842 = vmatprep.subr.mxu0 0.0
    %2843 = vmatpush2.msra.mxu0 0.0
    %2844 = vmatprep.subr.mxu0 0.0
    %2845 = vmatpush2.msra.mxu0 0.0
    %2846 = vmatprep.subr.mxu0 0.0
    %2847 = vmatpush2.msra.mxu0 0.0
    %2848 = vmatprep.subr.mxu0 0.0
    %2849 = vmatpush2.msra.mxu0 0.0
    %2850 = vmatprep.subr.mxu0 0.0
    %2851 = vmatpush2.msra.mxu0 0.0
    %2852 = vmatprep.subr.mxu0 0.0
    %2853 = vmatpush2.msra.mxu0 0.0
    %2854 = vmatprep.subr.mxu0 0.0
    %2855 = vmatpush2.msra.mxu0 0.0
    %2856 = vmatprep.subr.mxu0 0.0
    %2857 = vmatpush2.msra.mxu0 0.0
    %2858 = vmatprep.subr.mxu0 0.0
    %2859 = vmatpush2.msra.mxu0 0.0
    %2860 = vmatprep.subr.mxu0 0.0
    %2861 = vmatpush2.msra.mxu0 0.0
    %2862 = vmatprep.subr.mxu0 0.0
    %2863 = vmatpush2.msra.mxu0 0.0
    %2864 = vmatprep.subr.mxu0 0.0
    %2865 = vmatpush2.msra.mxu0 0.0
    %2866 = vmatprep.subr.mxu0 0.0
    %2867 = vmatpush2.msra.mxu0 0.0
    %2868 = vmatprep.subr.mxu0 0.0
    %2869 = vmatpush2.msra.mxu0 0.0
    %2870 = vmatprep.subr.mxu0 0.0
    %2871 = vmatpush2.msra.mxu0 0.0
    %2872 = vmatprep.mubr.f32.mxu0 0.0
    %2873 = vmatmul.mubr.f32.gmra.mxu0 %v962
    %v2874 = vpop.f32.mrf.mxu0
    %v2875 = vadd.f32 0.0, %v2874
    %v2876 = vpop.f32.mrf.mxu0
    %v2877 = vadd.f32 0.0, %v2876
    %2878 = vdwg.mxu0
    %2879 = vmatprep.subr.mxu0 0.0
    %2880 = vmatpush1.msra.mxu0 0.0
    %2881 = vmatprep.subr.mxu0 0.0
    %2882 = vmatpush1.msra.mxu0 0.0
    %2883 = vmatprep.subr.mxu0 0.0
    %2884 = vmatpush1.msra.mxu0 0.0
    %2885 = vmatprep.subr.mxu0 0.0
    %2886 = vmatpush1.msra.mxu0 0.0
    %2887 = vmatprep.subr.mxu0 0.0
    %2888 = vmatpush1.msra.mxu0 0.0
    %2889 = vmatprep.subr.mxu0 0.0
    %2890 = vmatpush1.msra.mxu0 0.0
    %2891 = vmatprep.subr.mxu0 0.0
    %2892 = vmatpush1.msra.mxu0 0.0
    %2893 = vmatprep.subr.mxu0 0.0
    %2894 = vmatpush1.msra.mxu0 0.0
    %2895 = vmatprep.subr.mxu0 0.0
    %2896 = vmatpush1.msra.mxu0 0.0
    %2897 = vmatprep.subr.mxu0 0.0
    %2898 = vmatpush1.msra.mxu0 0.0
    %2899 = vmatprep.subr.mxu0 0.0
    %2900 = vmatpush1.msra.mxu0 0.0
    %2901 = vmatprep.subr.mxu0 0.0
    %2902 = vmatpush1.msra.mxu0 0.0
    %2903 = vmatprep.subr.mxu0 %v2807
    %2904 = vmatpush1.msra.mxu0 %v2806
    %2905 = vmatprep.subr.mxu0 %v2803
    %2906 = vmatpush1.msra.mxu0 %v2802
    %2907 = vmatprep.subr.mxu0 %v2799
    %2908 = vmatpush1.msra.mxu0 %v2798
    %2909 = vmatprep.subr.mxu0 %v2795
    %2910 = vmatpush1.msra.mxu0 %v2794
    %2911 = vmatprep.subr.mxu0 0.0
    %2912 = vmatpush2.msra.mxu0 0.0
    %2913 = vmatprep.subr.mxu0 0.0
    %2914 = vmatpush2.msra.mxu0 0.0
    %2915 = vmatprep.subr.mxu0 0.0
    %2916 = vmatpush2.msra.mxu0 0.0
    %2917 = vmatprep.subr.mxu0 0.0
    %2918 = vmatpush2.msra.mxu0 0.0
    %2919 = vmatprep.subr.mxu0 0.0
    %2920 = vmatpush2.msra.mxu0 0.0
    %2921 = vmatprep.subr.mxu0 0.0
    %2922 = vmatpush2.msra.mxu0 0.0
    %2923 = vmatprep.subr.mxu0 0.0
    %2924 = vmatpush2.msra.mxu0 0.0
    %2925 = vmatprep.subr.mxu0 0.0
    %2926 = vmatpush2.msra.mxu0 0.0
    %2927 = vmatprep.subr.mxu0 0.0
    %2928 = vmatpush2.msra.mxu0 0.0
    %2929 = vmatprep.subr.mxu0 0.0
    %2930 = vmatpush2.msra.mxu0 0.0
    %2931 = vmatprep.subr.mxu0 0.0
    %2932 = vmatpush2.msra.mxu0 0.0
    %2933 = vmatprep.subr.mxu0 0.0
    %2934 = vmatpush2.msra.mxu0 0.0
    %2935 = vmatprep.subr.mxu0 0.0
    %2936 = vmatpush2.msra.mxu0 0.0
    %2937 = vmatprep.subr.mxu0 0.0
    %2938 = vmatpush2.msra.mxu0 0.0
    %2939 = vmatprep.subr.mxu0 0.0
    %2940 = vmatpush2.msra.mxu0 0.0
    %2941 = vmatprep.subr.mxu0 0.0
    %2942 = vmatpush2.msra.mxu0 0.0
    %2943 = vmatprep.mubr.f32.mxu0 0.0
    %2944 = vmatmul.mubr.f32.gmra.mxu0 %v962
    %v2945 = vpop.f32.mrf.mxu0
    %v2946 = vadd.f32 0.0, %v2945
    %v2947 = vpop.f32.mrf.mxu0
    %v2948 = vadd.f32 0.0, %v2947
    %2949 = vdwg.mxu0
    %v2950 = vld [vmem:[#allocation24] sm:$0xff]
    %v2951 = vld [vmem:[#allocation24 + $0x8] sm:$0xff]
    %v2952 = vld [vmem:[#allocation24 + $0x10] sm:$0xff]
    %v2953 = vld [vmem:[#allocation24 + $0x18] sm:$0xff]
    %2954 = vmatprep.subr.mxu0 0.0
    %2955 = vmatpush1.msra.mxu0 0.0
    %2956 = vmatprep.subr.mxu0 0.0
    %2957 = vmatpush1.msra.mxu0 0.0
    %2958 = vmatprep.subr.mxu0 0.0
    %2959 = vmatpush1.msra.mxu0 0.0
    %2960 = vmatprep.subr.mxu0 0.0
    %2961 = vmatpush1.msra.mxu0 0.0
    %2962 = vmatprep.subr.mxu0 0.0
    %2963 = vmatpush1.msra.mxu0 0.0
    %2964 = vmatprep.subr.mxu0 0.0
    %2965 = vmatpush1.msra.mxu0 0.0
    %2966 = vmatprep.subr.mxu0 0.0
    %2967 = vmatpush1.msra.mxu0 0.0
    %2968 = vmatprep.subr.mxu0 0.0
    %2969 = vmatpush1.msra.mxu0 0.0
    %2970 = vmatprep.subr.mxu0 0.0
    %2971 = vmatpush1.msra.mxu0 0.0
    %2972 = vmatprep.subr.mxu0 0.0
    %2973 = vmatpush1.msra.mxu0 0.0
    %2974 = vmatprep.subr.mxu0 0.0
    %2975 = vmatpush1.msra.mxu0 0.0
    %2976 = vmatprep.subr.mxu0 0.0
    %2977 = vmatpush1.msra.mxu0 0.0
    %2978 = vmatprep.subr.mxu0 0.0
    %2979 = vmatpush1.msra.mxu0 0.0
    %2980 = vmatprep.subr.mxu0 0.0
    %2981 = vmatpush1.msra.mxu0 0.0
    %2982 = vmatprep.subr.mxu0 0.0
    %2983 = vmatpush1.msra.mxu0 0.0
    %2984 = vmatprep.subr.mxu0 %v2951
    %2985 = vmatpush1.msra.mxu0 %v2950
    %2986 = vmatprep.subr.mxu0 0.0
    %2987 = vmatpush2.msra.mxu0 0.0
    %2988 = vmatprep.subr.mxu0 0.0
    %2989 = vmatpush2.msra.mxu0 0.0
    %2990 = vmatprep.subr.mxu0 0.0
    %2991 = vmatpush2.msra.mxu0 0.0
    %2992 = vmatprep.subr.mxu0 0.0
    %2993 = vmatpush2.msra.mxu0 0.0
    %2994 = vmatprep.subr.mxu0 0.0
    %2995 = vmatpush2.msra.mxu0 0.0
    %2996 = vmatprep.subr.mxu0 0.0
    %2997 = vmatpush2.msra.mxu0 0.0
    %2998 = vmatprep.subr.mxu0 0.0
    %2999 = vmatpush2.msra.mxu0 0.0
    %3000 = vmatprep.subr.mxu0 0.0
    %3001 = vmatpush2.msra.mxu0 0.0
    %3002 = vmatprep.subr.mxu0 0.0
    %3003 = vmatpush2.msra.mxu0 0.0
    %3004 = vmatprep.subr.mxu0 0.0
    %3005 = vmatpush2.msra.mxu0 0.0
    %3006 = vmatprep.subr.mxu0 0.0
    %3007 = vmatpush2.msra.mxu0 0.0
    %3008 = vmatprep.subr.mxu0 0.0
    %3009 = vmatpush2.msra.mxu0 0.0
    %3010 = vmatprep.subr.mxu0 0.0
    %3011 = vmatpush2.msra.mxu0 0.0
    %3012 = vmatprep.subr.mxu0 0.0
    %3013 = vmatpush2.msra.mxu0 0.0
    %3014 = vmatprep.subr.mxu0 0.0
    %3015 = vmatpush2.msra.mxu0 0.0
    %3016 = vmatprep.subr.mxu0 0.0
    %3017 = vmatpush2.msra.mxu0 0.0
    %3018 = vmatprep.mubr.f32.mxu0 0.0
    %3019 = vmatmul.mubr.f32.gmra.mxu0 %v507
    %v3020 = vpop.f32.mrf.mxu0
    %v3021 = vadd.f32 0.0, %v3020
    %v3022 = vpop.f32.mrf.mxu0
    %v3023 = vadd.f32 0.0, %v3022
    %3024 = vdwg.mxu0
    %3025 = vmatprep.subr.mxu0 0.0
    %3026 = vmatpush1.msra.mxu0 0.0
    %3027 = vmatprep.subr.mxu0 0.0
    %3028 = vmatpush1.msra.mxu0 0.0
    %3029 = vmatprep.subr.mxu0 0.0
    %3030 = vmatpush1.msra.mxu0 0.0
    %3031 = vmatprep.subr.mxu0 0.0
    %3032 = vmatpush1.msra.mxu0 0.0
    %3033 = vmatprep.subr.mxu0 0.0
    %3034 = vmatpush1.msra.mxu0 0.0
    %3035 = vmatprep.subr.mxu0 0.0
    %3036 = vmatpush1.msra.mxu0 0.0
    %3037 = vmatprep.subr.mxu0 0.0
    %3038 = vmatpush1.msra.mxu0 0.0
    %3039 = vmatprep.subr.mxu0 0.0
    %3040 = vmatpush1.msra.mxu0 0.0
    %3041 = vmatprep.subr.mxu0 0.0
    %3042 = vmatpush1.msra.mxu0 0.0
    %3043 = vmatprep.subr.mxu0 0.0
    %3044 = vmatpush1.msra.mxu0 0.0
    %3045 = vmatprep.subr.mxu0 0.0
    %3046 = vmatpush1.msra.mxu0 0.0
    %3047 = vmatprep.subr.mxu0 0.0
    %3048 = vmatpush1.msra.mxu0 0.0
    %3049 = vmatprep.subr.mxu0 0.0
    %3050 = vmatpush1.msra.mxu0 0.0
    %3051 = vmatprep.subr.mxu0 0.0
    %3052 = vmatpush1.msra.mxu0 0.0
    %3053 = vmatprep.subr.mxu0 0.0
    %3054 = vmatpush1.msra.mxu0 0.0
    %3055 = vmatprep.subr.mxu0 %v2953
    %3056 = vmatpush1.msra.mxu0 %v2952
    %3057 = vmatprep.subr.mxu0 0.0
    %3058 = vmatpush2.msra.mxu0 0.0
    %3059 = vmatprep.subr.mxu0 0.0
    %3060 = vmatpush2.msra.mxu0 0.0
    %3061 = vmatprep.subr.mxu0 0.0
    %3062 = vmatpush2.msra.mxu0 0.0
    %3063 = vmatprep.subr.mxu0 0.0
    %3064 = vmatpush2.msra.mxu0 0.0
    %3065 = vmatprep.subr.mxu0 0.0
    %3066 = vmatpush2.msra.mxu0 0.0
    %3067 = vmatprep.subr.mxu0 0.0
    %3068 = vmatpush2.msra.mxu0 0.0
    %3069 = vmatprep.subr.mxu0 0.0
    %3070 = vmatpush2.msra.mxu0 0.0
    %3071 = vmatprep.subr.mxu0 0.0
    %3072 = vmatpush2.msra.mxu0 0.0
    %3073 = vmatprep.subr.mxu0 0.0
    %3074 = vmatpush2.msra.mxu0 0.0
    %3075 = vmatprep.subr.mxu0 0.0
    %3076 = vmatpush2.msra.mxu0 0.0
    %3077 = vmatprep.subr.mxu0 0.0
    %3078 = vmatpush2.msra.mxu0 0.0
    %3079 = vmatprep.subr.mxu0 0.0
    %3080 = vmatpush2.msra.mxu0 0.0
    %3081 = vmatprep.subr.mxu0 0.0
    %3082 = vmatpush2.msra.mxu0 0.0
    %3083 = vmatprep.subr.mxu0 0.0
    %3084 = vmatpush2.msra.mxu0 0.0
    %3085 = vmatprep.subr.mxu0 0.0
    %3086 = vmatpush2.msra.mxu0 0.0
    %3087 = vmatprep.subr.mxu0 0.0
    %3088 = vmatpush2.msra.mxu0 0.0
    %3089 = vmatprep.mubr.f32.mxu0 0.0
    %3090 = vmatmul.mubr.f32.gmra.mxu0 %v507
    %v3091 = vpop.f32.mrf.mxu0
    %v3092 = vadd.f32 0.0, %v3091
    %v3093 = vpop.f32.mrf.mxu0
    %v3094 = vadd.f32 0.0, %v3093
    %3095 = vdwg.mxu0
    %3096 = vst [vmem:[#allocation2 + $0x8] sm:$0xff] %v2582
    %3097 = vst [vmem:[#allocation2 + $0x10] sm:$0xff] %v2583
    %3098 = vst [vmem:[#allocation2 + $0x18] sm:$0xff] %v2584
    %3099 = vst [vmem:[#allocation2 + $0x20] sm:$0xff] %v2585
    %3100 = vst [vmem:[#allocation2 + $0x38] sm:$0xff] %v2717
    %3101 = vst [vmem:[#allocation2 + $0x40] sm:$0xff] %v2719
    %3102 = vst [vmem:[#allocation2 + $0x48] sm:$0xff] %v2788
    %3103 = vst [vmem:[#allocation2 + $0x50] sm:$0xff] %v2790
    %3104 = vst [vmem:[#allocation2 + $0x68] sm:$0xff] %v2875
    %3105 = vst [vmem:[#allocation2 + $0x70] sm:$0xff] %v2877
    %3106 = vst [vmem:[#allocation2 + $0x78] sm:$0xff] %v2946
    %3107 = vst [vmem:[#allocation2 + $0x80] sm:$0xff] %v2948
    %3108 = vst [vmem:[#allocation2 + $0x98] sm:$0xff] %v3021
    %3109 = vst [vmem:[#allocation2 + $0xa0] sm:$0xff] %v3023
    %3110 = vst [vmem:[#allocation2 + $0xa8] sm:$0xff] %v3092
    %3111 = vst [vmem:[#allocation2 + $0xb0] sm:$0xff] %v3094
    %v3112 = vld [vmem:[%s22] sm:$0xff]
    %v3113 = vld [vmem:[%s22 + $0x8] sm:$0xff]
    %v3114 = vld [vmem:[%s22 + $0x10] sm:$0xff]
    %v3115 = vld [vmem:[%s22 + $0x18] sm:$0xff]
    %v3116 = vld [vmem:[%s22 + $0x20] sm:$0x1]
    %v3117 = vld [vmem:[%s22 + $0x28] sm:$0x1]
    %v3118 = vld [vmem:[%s22 + $0x30] sm:$0x1]
    %v3119 = vld [vmem:[%s22 + $0x38] sm:$0x1]
    %v3120 = vld [vmem:[#allocation2] sm:$0xff]
    %v3121 = vld [vmem:[#allocation2 + $0x8] sm:$0xff]
    %v3122 = vld [vmem:[#allocation2 + $0x10] sm:$0xff]
    %v3123 = vld [vmem:[#allocation2 + $0x18] sm:$0xff]
    %v3124 = vld [vmem:[#allocation2 + $0x20] sm:$0xff]
    %v3125 = vld [vmem:[#allocation2 + $0x30] sm:$0xff]
    %v3126 = vld [vmem:[#allocation2 + $0x38] sm:$0xff]
    %v3127 = vld [vmem:[#allocation2 + $0x40] sm:$0xff]
    %v3128 = vld [vmem:[#allocation2 + $0x48] sm:$0xff]
    %v3129 = vld [vmem:[#allocation2 + $0x50] sm:$0xff]
    %v3130 = vld [vmem:[#allocation2 + $0x60] sm:$0xff]
    %v3131 = vld [vmem:[#allocation2 + $0x68] sm:$0xff]
    %v3132 = vld [vmem:[#allocation2 + $0x70] sm:$0xff]
    %v3133 = vld [vmem:[#allocation2 + $0x78] sm:$0xff]
    %v3134 = vld [vmem:[#allocation2 + $0x80] sm:$0xff]
    %v3135 = vld [vmem:[#allocation2 + $0x90] sm:$0xff]
    %v3136 = vld [vmem:[#allocation2 + $0x98] sm:$0xff]
    %v3137 = vld [vmem:[#allocation2 + $0xa0] sm:$0xff]
    %v3138 = vld [vmem:[#allocation2 + $0xa8] sm:$0xff]
    %v3139 = vld [vmem:[#allocation2 + $0xb0] sm:$0xff]
    %v3140 = vlaneseq
    %v3141 = vshrl.u32 %v3140, 7
    %v3142 = vsub.s32 0, %v3141
    %v3143 = vrot.slane %v3112, %v3142
    %v3144 = vlaneseq
    %v3145 = vshrl.u32 %v3144, 7
    %v3146 = vsub.s32 0, %v3145
    %v3147 = vrot.slane %v3113, %v3146
    %v3148 = vlaneseq
    %v3149 = vshrl.u32 %v3148, 7
    %v3150 = vsub.s32 0, %v3149
    %v3151 = vrot.slane %v3114, %v3150
    %v3152 = vlaneseq
    %v3153 = vshrl.u32 %v3152, 7
    %v3154 = vsub.s32 0, %v3153
    %v3155 = vrot.slane %v3115, %v3154
    %3160 = vrot.lane.b32.xlu0 %v3143, 111
    %v3161 = vpop.permute.xlu0 %3160
    %3162 = vrot.lane.b32.xlu0 %v3147, 111
    %v3163 = vpop.permute.xlu0 %3162
    %3164 = vrot.lane.b32.xlu0 %v3151, 111
    %v3165 = vpop.permute.xlu0 %3164
    %3166 = vrot.lane.b32.xlu0 %v3155, 111
    %v3167 = vpop.permute.xlu0 %3166
    %v3168 = vsel %vm1790, %v3161, %v3163
    %v3169 = vsel %vm1790, %v3163, %v3165
    %v3170 = vsel %vm1790, %v3165, %v3167
    %v3176 = vmul.f32 %v3120, %v3161
    %v3177 = vmul.f32 %v3121, %v3168
    %v3178 = vmul.f32 %v3122, %v3169
    %v3179 = vmul.f32 %v3123, %v3170
    %v3180 = vmul.f32 %v3124, %v3167
    %v3181 = vmul.f32 %v3125, %v3161
    %v3182 = vmul.f32 %v3126, %v3168
    %v3183 = vmul.f32 %v3127, %v3169
    %v3184 = vmul.f32 %v3128, %v3170
    %v3185 = vmul.f32 %v3129, %v3167
    %v3186 = vmul.f32 %v3130, %v3161
    %v3187 = vmul.f32 %v3131, %v3168
    %v3188 = vmul.f32 %v3132, %v3169
    %v3189 = vmul.f32 %v3133, %v3170
    %v3190 = vmul.f32 %v3134, %v3167
    %v3191 = vmul.f32 %v3135, %v3161
    %v3192 = vmul.f32 %v3136, %v3168
    %v3193 = vmul.f32 %v3137, %v3169
    %v3194 = vmul.f32 %v3138, %v3170
    %v3195 = vmul.f32 %v3139, %v3167
    %3216 = vrot.lane.b32.xlu0 %v3176, 17
    %v3217 = vpop.permute.xlu0 %3216
    %3218 = vrot.lane.b32.xlu0 %v3177, 17
    %v3219 = vpop.permute.xlu0 %3218
    %3220 = vrot.lane.b32.xlu0 %v3178, 17
    %v3221 = vpop.permute.xlu0 %3220
    %3222 = vrot.lane.b32.xlu0 %v3179, 17
    %v3223 = vpop.permute.xlu0 %3222
    %3224 = vrot.lane.b32.xlu0 %v3180, 17
    %v3225 = vpop.permute.xlu0 %3224
    %3226 = vrot.lane.b32.xlu0 %v3181, 17
    %v3227 = vpop.permute.xlu0 %3226
    %3228 = vrot.lane.b32.xlu0 %v3182, 17
    %v3229 = vpop.permute.xlu0 %3228
    %3230 = vrot.lane.b32.xlu0 %v3183, 17
    %v3231 = vpop.permute.xlu0 %3230
    %3232 = vrot.lane.b32.xlu0 %v3184, 17
    %v3233 = vpop.permute.xlu0 %3232
    %3234 = vrot.lane.b32.xlu0 %v3185, 17
    %v3235 = vpop.permute.xlu0 %3234
    %3236 = vrot.lane.b32.xlu0 %v3186, 17
    %v3237 = vpop.permute.xlu0 %3236
    %3238 = vrot.lane.b32.xlu0 %v3187, 17
    %v3239 = vpop.permute.xlu0 %3238
    %3240 = vrot.lane.b32.xlu0 %v3188, 17
    %v3241 = vpop.permute.xlu0 %3240
    %3242 = vrot.lane.b32.xlu0 %v3189, 17
    %v3243 = vpop.permute.xlu0 %3242
    %3244 = vrot.lane.b32.xlu0 %v3190, 17
    %v3245 = vpop.permute.xlu0 %3244
    %3246 = vrot.lane.b32.xlu0 %v3191, 17
    %v3247 = vpop.permute.xlu0 %3246
    %3248 = vrot.lane.b32.xlu0 %v3192, 17
    %v3249 = vpop.permute.xlu0 %3248
    %3250 = vrot.lane.b32.xlu0 %v3193, 17
    %v3251 = vpop.permute.xlu0 %3250
    %3252 = vrot.lane.b32.xlu0 %v3194, 17
    %v3253 = vpop.permute.xlu0 %3252
    %3254 = vrot.lane.b32.xlu0 %v3195, 17
    %v3255 = vpop.permute.xlu0 %3254
    %v3256 = vsel %vm1819, %v3217, %v3219
    %v3257 = vsel %vm1819, %v3219, %v3221
    %v3258 = vsel %vm1819, %v3221, %v3223
    %v3259 = vsel %vm1819, %v3223, %v3225
    %v3260 = vsel %vm1819, %v3227, %v3229
    %v3261 = vsel %vm1819, %v3229, %v3231
    %v3262 = vsel %vm1819, %v3231, %v3233
    %v3263 = vsel %vm1819, %v3233, %v3235
    %v3264 = vsel %vm1819, %v3237, %v3239
    %v3265 = vsel %vm1819, %v3239, %v3241
    %v3266 = vsel %vm1819, %v3241, %v3243
    %v3267 = vsel %vm1819, %v3243, %v3245
    %v3268 = vsel %vm1819, %v3247, %v3249
    %v3269 = vsel %vm1819, %v3249, %v3251
    %v3270 = vsel %vm1819, %v3251, %v3253
    %v3271 = vsel %vm1819, %v3253, %v3255
    %3288 = vst [vmem:[#allocation3] sm:$0xff] %v3256
    %3289 = vst [vmem:[#allocation3 + $0x8] sm:$0xff] %v3257
    %3290 = vst [vmem:[#allocation3 + $0x10] sm:$0xff] %v3258
    %3291 = vst [vmem:[#allocation3 + $0x18] sm:$0xff] %v3259
    %3292 = vst [vmem:[#allocation3 + $0x20] sm:$0xff] %v3260
    %3293 = vst [vmem:[#allocation3 + $0x28] sm:$0xff] %v3261
    %3294 = vst [vmem:[#allocation3 + $0x30] sm:$0xff] %v3262
    %3295 = vst [vmem:[#allocation3 + $0x38] sm:$0xff] %v3263
    %3296 = vst [vmem:[#allocation3 + $0x40] sm:$0xff] %v3264
    %3297 = vst [vmem:[#allocation3 + $0x48] sm:$0xff] %v3265
    %3298 = vst [vmem:[#allocation3 + $0x50] sm:$0xff] %v3266
    %3299 = vst [vmem:[#allocation3 + $0x58] sm:$0xff] %v3267
    %3300 = vst [vmem:[#allocation3 + $0x60] sm:$0xff] %v3268
    %3301 = vst [vmem:[#allocation3 + $0x68] sm:$0xff] %v3269
    %3302 = vst [vmem:[#allocation3 + $0x70] sm:$0xff] %v3270
    %3303 = vst [vmem:[#allocation3 + $0x78] sm:$0xff] %v3271
    %v3304 = vld [vmem:[#allocation2] sm:$0xff]
    %v3305 = vld [vmem:[#allocation2 + $0x8] sm:$0xff]
    %v3306 = vld [vmem:[#allocation2 + $0x10] sm:$0xff]
    %v3307 = vld [vmem:[#allocation2 + $0x18] sm:$0xff]
    %v3308 = vld [vmem:[#allocation2 + $0x20] sm:$0xff]
    %v3309 = vld [vmem:[#allocation2 + $0x30] sm:$0xff]
    %v3310 = vld [vmem:[#allocation2 + $0x38] sm:$0xff]
    %v3311 = vld [vmem:[#allocation2 + $0x40] sm:$0xff]
    %v3312 = vld [vmem:[#allocation2 + $0x48] sm:$0xff]
    %v3313 = vld [vmem:[#allocation2 + $0x50] sm:$0xff]
    %v3314 = vld [vmem:[#allocation2 + $0x60] sm:$0xff]
    %v3315 = vld [vmem:[#allocation2 + $0x68] sm:$0xff]
    %v3316 = vld [vmem:[#allocation2 + $0x70] sm:$0xff]
    %v3317 = vld [vmem:[#allocation2 + $0x78] sm:$0xff]
    %v3318 = vld [vmem:[#allocation2 + $0x80] sm:$0xff]
    %v3319 = vld [vmem:[#allocation2 + $0x90] sm:$0xff]
    %v3320 = vld [vmem:[#allocation2 + $0x98] sm:$0xff]
    %v3321 = vld [vmem:[#allocation2 + $0xa0] sm:$0xff]
    %v3322 = vld [vmem:[#allocation2 + $0xa8] sm:$0xff]
    %v3323 = vld [vmem:[#allocation2 + $0xb0] sm:$0xff]
    %v3324 = vlaneseq
    %v3325 = vshrl.u32 %v3324, 7
    %v3326 = vsub.s32 1, %v3325
    %v3327 = vrot.slane %v3112, %v3326
    %v3328 = vlaneseq
    %v3329 = vshrl.u32 %v3328, 7
    %v3330 = vsub.s32 1, %v3329
    %v3331 = vrot.slane %v3113, %v3330
    %v3332 = vlaneseq
    %v3333 = vshrl.u32 %v3332, 7
    %v3334 = vsub.s32 1, %v3333
    %v3335 = vrot.slane %v3114, %v3334
    %v3336 = vlaneseq
    %v3337 = vshrl.u32 %v3336, 7
    %v3338 = vsub.s32 1, %v3337
    %v3339 = vrot.slane %v3115, %v3338
    %3344 = vrot.lane.b32.xlu0 %v3327, 112
    %v3345 = vpop.permute.xlu0 %3344
    %3346 = vrot.lane.b32.xlu0 %v3331, 112
    %v3347 = vpop.permute.xlu0 %3346
    %3348 = vrot.lane.b32.xlu0 %v3335, 112
    %v3349 = vpop.permute.xlu0 %3348
    %3350 = vrot.lane.b32.xlu0 %v3339, 112
    %v3351 = vpop.permute.xlu0 %3350
    %v3352 = vsel %vm1865, %v3345, %v3347
    %v3353 = vsel %vm1865, %v3347, %v3349
    %v3354 = vsel %vm1865, %v3349, %v3351
    %v3360 = vmul.f32 %v3304, %v3345
    %v3361 = vmul.f32 %v3305, %v3352
    %v3362 = vmul.f32 %v3306, %v3353
    %v3363 = vmul.f32 %v3307, %v3354
    %v3364 = vmul.f32 %v3308, %v3351
    %v3365 = vmul.f32 %v3309, %v3345
    %v3366 = vmul.f32 %v3310, %v3352
    %v3367 = vmul.f32 %v3311, %v3353
    %v3368 = vmul.f32 %v3312, %v3354
    %v3369 = vmul.f32 %v3313, %v3351
    %v3370 = vmul.f32 %v3314, %v3345
    %v3371 = vmul.f32 %v3315, %v3352
    %v3372 = vmul.f32 %v3316, %v3353
    %v3373 = vmul.f32 %v3317, %v3354
    %v3374 = vmul.f32 %v3318, %v3351
    %v3375 = vmul.f32 %v3319, %v3345
    %v3376 = vmul.f32 %v3320, %v3352
    %v3377 = vmul.f32 %v3321, %v3353
    %v3378 = vmul.f32 %v3322, %v3354
    %v3379 = vmul.f32 %v3323, %v3351
    %3400 = vrot.lane.b32.xlu0 %v3360, 16
    %v3401 = vpop.permute.xlu0 %3400
    %3402 = vrot.lane.b32.xlu0 %v3361, 16
    %v3403 = vpop.permute.xlu0 %3402
    %3404 = vrot.lane.b32.xlu0 %v3362, 16
    %v3405 = vpop.permute.xlu0 %3404
    %3406 = vrot.lane.b32.xlu0 %v3363, 16
    %v3407 = vpop.permute.xlu0 %3406
    %3408 = vrot.lane.b32.xlu0 %v3364, 16
    %v3409 = vpop.permute.xlu0 %3408
    %3410 = vrot.lane.b32.xlu0 %v3365, 16
    %v3411 = vpop.permute.xlu0 %3410
    %3412 = vrot.lane.b32.xlu0 %v3366, 16
    %v3413 = vpop.permute.xlu0 %3412
    %3414 = vrot.lane.b32.xlu0 %v3367, 16
    %v3415 = vpop.permute.xlu0 %3414
    %3416 = vrot.lane.b32.xlu0 %v3368, 16
    %v3417 = vpop.permute.xlu0 %3416
    %3418 = vrot.lane.b32.xlu0 %v3369, 16
    %v3419 = vpop.permute.xlu0 %3418
    %3420 = vrot.lane.b32.xlu0 %v3370, 16
    %v3421 = vpop.permute.xlu0 %3420
    %3422 = vrot.lane.b32.xlu0 %v3371, 16
    %v3423 = vpop.permute.xlu0 %3422
    %3424 = vrot.lane.b32.xlu0 %v3372, 16
    %v3425 = vpop.permute.xlu0 %3424
    %3426 = vrot.lane.b32.xlu0 %v3373, 16
    %v3427 = vpop.permute.xlu0 %3426
    %3428 = vrot.lane.b32.xlu0 %v3374, 16
    %v3429 = vpop.permute.xlu0 %3428
    %3430 = vrot.lane.b32.xlu0 %v3375, 16
    %v3431 = vpop.permute.xlu0 %3430
    %3432 = vrot.lane.b32.xlu0 %v3376, 16
    %v3433 = vpop.permute.xlu0 %3432
    %3434 = vrot.lane.b32.xlu0 %v3377, 16
    %v3435 = vpop.permute.xlu0 %3434
    %3436 = vrot.lane.b32.xlu0 %v3378, 16
    %v3437 = vpop.permute.xlu0 %3436
    %3438 = vrot.lane.b32.xlu0 %v3379, 16
    %v3439 = vpop.permute.xlu0 %3438
    %v3440 = vsel %vm397, %v3401, %v3403
    %v3441 = vsel %vm397, %v3403, %v3405
    %v3442 = vsel %vm397, %v3405, %v3407
    %v3443 = vsel %vm397, %v3407, %v3409
    %v3444 = vsel %vm397, %v3411, %v3413
    %v3445 = vsel %vm397, %v3413, %v3415
    %v3446 = vsel %vm397, %v3415, %v3417
    %v3447 = vsel %vm397, %v3417, %v3419
    %v3448 = vsel %vm397, %v3421, %v3423
    %v3449 = vsel %vm397, %v3423, %v3425
    %v3450 = vsel %vm397, %v3425, %v3427
    %v3451 = vsel %vm397, %v3427, %v3429
    %v3452 = vsel %vm397, %v3431, %v3433
    %v3453 = vsel %vm397, %v3433, %v3435
    %v3454 = vsel %vm397, %v3435, %v3437
    %v3455 = vsel %vm397, %v3437, %v3439
    %3472 = vst [vmem:[#allocation3 + $0x80] sm:$0xff] %v3440
    %3473 = vst [vmem:[#allocation3 + $0x88] sm:$0xff] %v3441
    %3474 = vst [vmem:[#allocation3 + $0x90] sm:$0xff] %v3442
    %3475 = vst [vmem:[#allocation3 + $0x98] sm:$0xff] %v3443
    %3476 = vst [vmem:[#allocation3 + $0xa0] sm:$0xff] %v3444
    %3477 = vst [vmem:[#allocation3 + $0xa8] sm:$0xff] %v3445
    %3478 = vst [vmem:[#allocation3 + $0xb0] sm:$0xff] %v3446
    %3479 = vst [vmem:[#allocation3 + $0xb8] sm:$0xff] %v3447
    %3480 = vst [vmem:[#allocation3 + $0xc0] sm:$0xff] %v3448
    %3481 = vst [vmem:[#allocation3 + $0xc8] sm:$0xff] %v3449
    %3482 = vst [vmem:[#allocation3 + $0xd0] sm:$0xff] %v3450
    %3483 = vst [vmem:[#allocation3 + $0xd8] sm:$0xff] %v3451
    %3484 = vst [vmem:[#allocation3 + $0xe0] sm:$0xff] %v3452
    %3485 = vst [vmem:[#allocation3 + $0xe8] sm:$0xff] %v3453
    %3486 = vst [vmem:[#allocation3 + $0xf0] sm:$0xff] %v3454
    %3487 = vst [vmem:[#allocation3 + $0xf8] sm:$0xff] %v3455
    %v3488 = vld [vmem:[#allocation2] sm:$0xff]
    %v3489 = vld [vmem:[#allocation2 + $0x8] sm:$0xff]
    %v3490 = vld [vmem:[#allocation2 + $0x10] sm:$0xff]
    %v3491 = vld [vmem:[#allocation2 + $0x18] sm:$0xff]
    %v3492 = vld [vmem:[#allocation2 + $0x20] sm:$0xff]
    %v3493 = vld [vmem:[#allocation2 + $0x30] sm:$0xff]
    %v3494 = vld [vmem:[#allocation2 + $0x38] sm:$0xff]
    %v3495 = vld [vmem:[#allocation2 + $0x40] sm:$0xff]
    %v3496 = vld [vmem:[#allocation2 + $0x48] sm:$0xff]
    %v3497 = vld [vmem:[#allocation2 + $0x50] sm:$0xff]
    %v3498 = vld [vmem:[#allocation2 + $0x60] sm:$0xff]
    %v3499 = vld [vmem:[#allocation2 + $0x68] sm:$0xff]
    %v3500 = vld [vmem:[#allocation2 + $0x70] sm:$0xff]
    %v3501 = vld [vmem:[#allocation2 + $0x78] sm:$0xff]
    %v3502 = vld [vmem:[#allocation2 + $0x80] sm:$0xff]
    %v3503 = vld [vmem:[#allocation2 + $0x90] sm:$0xff]
    %v3504 = vld [vmem:[#allocation2 + $0x98] sm:$0xff]
    %v3505 = vld [vmem:[#allocation2 + $0xa0] sm:$0xff]
    %v3506 = vld [vmem:[#allocation2 + $0xa8] sm:$0xff]
    %v3507 = vld [vmem:[#allocation2 + $0xb0] sm:$0xff]
    %v3508 = vlaneseq
    %v3509 = vshrl.u32 %v3508, 7
    %v3510 = vsub.s32 2, %v3509
    %v3511 = vrot.slane %v3112, %v3510
    %v3512 = vlaneseq
    %v3513 = vshrl.u32 %v3512, 7
    %v3514 = vsub.s32 2, %v3513
    %v3515 = vrot.slane %v3113, %v3514
    %v3516 = vlaneseq
    %v3517 = vshrl.u32 %v3516, 7
    %v3518 = vsub.s32 2, %v3517
    %v3519 = vrot.slane %v3114, %v3518
    %v3520 = vlaneseq
    %v3521 = vshrl.u32 %v3520, 7
    %v3522 = vsub.s32 2, %v3521
    %v3523 = vrot.slane %v3115, %v3522
    %3528 = vrot.lane.b32.xlu0 %v3511, 113
    %v3529 = vpop.permute.xlu0 %3528
    %3530 = vrot.lane.b32.xlu0 %v3515, 113
    %v3531 = vpop.permute.xlu0 %3530
    %3532 = vrot.lane.b32.xlu0 %v3519, 113
    %v3533 = vpop.permute.xlu0 %3532
    %3534 = vrot.lane.b32.xlu0 %v3523, 113
    %v3535 = vpop.permute.xlu0 %3534
    %v3536 = vsel %vm1939, %v3529, %v3531
    %v3537 = vsel %vm1939, %v3531, %v3533
    %v3538 = vsel %vm1939, %v3533, %v3535
    %v3544 = vmul.f32 %v3488, %v3529
    %v3545 = vmul.f32 %v3489, %v3536
    %v3546 = vmul.f32 %v3490, %v3537
    %v3547 = vmul.f32 %v3491, %v3538
    %v3548 = vmul.f32 %v3492, %v3535
    %v3549 = vmul.f32 %v3493, %v3529
    %v3550 = vmul.f32 %v3494, %v3536
    %v3551 = vmul.f32 %v3495, %v3537
    %v3552 = vmul.f32 %v3496, %v3538
    %v3553 = vmul.f32 %v3497, %v3535
    %v3554 = vmul.f32 %v3498, %v3529
    %v3555 = vmul.f32 %v3499, %v3536
    %v3556 = vmul.f32 %v3500, %v3537
    %v3557 = vmul.f32 %v3501, %v3538
    %v3558 = vmul.f32 %v3502, %v3535
    %v3559 = vmul.f32 %v3503, %v3529
    %v3560 = vmul.f32 %v3504, %v3536
    %v3561 = vmul.f32 %v3505, %v3537
    %v3562 = vmul.f32 %v3506, %v3538
    %v3563 = vmul.f32 %v3507, %v3535
    %3584 = vrot.lane.b32.xlu0 %v3544, 15
    %v3585 = vpop.permute.xlu0 %3584
    %3586 = vrot.lane.b32.xlu0 %v3545, 15
    %v3587 = vpop.permute.xlu0 %3586
    %3588 = vrot.lane.b32.xlu0 %v3546, 15
    %v3589 = vpop.permute.xlu0 %3588
    %3590 = vrot.lane.b32.xlu0 %v3547, 15
    %v3591 = vpop.permute.xlu0 %3590
    %3592 = vrot.lane.b32.xlu0 %v3548, 15
    %v3593 = vpop.permute.xlu0 %3592
    %3594 = vrot.lane.b32.xlu0 %v3549, 15
    %v3595 = vpop.permute.xlu0 %3594
    %3596 = vrot.lane.b32.xlu0 %v3550, 15
    %v3597 = vpop.permute.xlu0 %3596
    %3598 = vrot.lane.b32.xlu0 %v3551, 15
    %v3599 = vpop.permute.xlu0 %3598
    %3600 = vrot.lane.b32.xlu0 %v3552, 15
    %v3601 = vpop.permute.xlu0 %3600
    %3602 = vrot.lane.b32.xlu0 %v3553, 15
    %v3603 = vpop.permute.xlu0 %3602
    %3604 = vrot.lane.b32.xlu0 %v3554, 15
    %v3605 = vpop.permute.xlu0 %3604
    %3606 = vrot.lane.b32.xlu0 %v3555, 15
    %v3607 = vpop.permute.xlu0 %3606
    %3608 = vrot.lane.b32.xlu0 %v3556, 15
    %v3609 = vpop.permute.xlu0 %3608
    %3610 = vrot.lane.b32.xlu0 %v3557, 15
    %v3611 = vpop.permute.xlu0 %3610
    %3612 = vrot.lane.b32.xlu0 %v3558, 15
    %v3613 = vpop.permute.xlu0 %3612
    %3614 = vrot.lane.b32.xlu0 %v3559, 15
    %v3615 = vpop.permute.xlu0 %3614
    %3616 = vrot.lane.b32.xlu0 %v3560, 15
    %v3617 = vpop.permute.xlu0 %3616
    %3618 = vrot.lane.b32.xlu0 %v3561, 15
    %v3619 = vpop.permute.xlu0 %3618
    %3620 = vrot.lane.b32.xlu0 %v3562, 15
    %v3621 = vpop.permute.xlu0 %3620
    %3622 = vrot.lane.b32.xlu0 %v3563, 15
    %v3623 = vpop.permute.xlu0 %3622
    %v3624 = vsel %vm1968, %v3585, %v3587
    %v3625 = vsel %vm1968, %v3587, %v3589
    %v3626 = vsel %vm1968, %v3589, %v3591
    %v3627 = vsel %vm1968, %v3591, %v3593
    %v3628 = vsel %vm1968, %v3595, %v3597
    %v3629 = vsel %vm1968, %v3597, %v3599
    %v3630 = vsel %vm1968, %v3599, %v3601
    %v3631 = vsel %vm1968, %v3601, %v3603
    %v3632 = vsel %vm1968, %v3605, %v3607
    %v3633 = vsel %vm1968, %v3607, %v3609
    %v3634 = vsel %vm1968, %v3609, %v3611
    %v3635 = vsel %vm1968, %v3611, %v3613
    %v3636 = vsel %vm1968, %v3615, %v3617
    %v3637 = vsel %vm1968, %v3617, %v3619
    %v3638 = vsel %vm1968, %v3619, %v3621
    %v3639 = vsel %vm1968, %v3621, %v3623
    %3656 = vst [vmem:[#allocation3 + $0x100] sm:$0xff] %v3624
    %3657 = vst [vmem:[#allocation3 + $0x108] sm:$0xff] %v3625
    %3658 = vst [vmem:[#allocation3 + $0x110] sm:$0xff] %v3626
    %3659 = vst [vmem:[#allocation3 + $0x118] sm:$0xff] %v3627
    %3660 = vst [vmem:[#allocation3 + $0x120] sm:$0xff] %v3628
    %3661 = vst [vmem:[#allocation3 + $0x128] sm:$0xff] %v3629
    %3662 = vst [vmem:[#allocation3 + $0x130] sm:$0xff] %v3630
    %3663 = vst [vmem:[#allocation3 + $0x138] sm:$0xff] %v3631
    %3664 = vst [vmem:[#allocation3 + $0x140] sm:$0xff] %v3632
    %3665 = vst [vmem:[#allocation3 + $0x148] sm:$0xff] %v3633
    %3666 = vst [vmem:[#allocation3 + $0x150] sm:$0xff] %v3634
    %3667 = vst [vmem:[#allocation3 + $0x158] sm:$0xff] %v3635
    %3668 = vst [vmem:[#allocation3 + $0x160] sm:$0xff] %v3636
    %3669 = vst [vmem:[#allocation3 + $0x168] sm:$0xff] %v3637
    %3670 = vst [vmem:[#allocation3 + $0x170] sm:$0xff] %v3638
    %3671 = vst [vmem:[#allocation3 + $0x178] sm:$0xff] %v3639
    %v3672 = vld [vmem:[#allocation2] sm:$0xff]
    %v3673 = vld [vmem:[#allocation2 + $0x8] sm:$0xff]
    %v3674 = vld [vmem:[#allocation2 + $0x10] sm:$0xff]
    %v3675 = vld [vmem:[#allocation2 + $0x18] sm:$0xff]
    %v3676 = vld [vmem:[#allocation2 + $0x20] sm:$0xff]
    %v3677 = vld [vmem:[#allocation2 + $0x30] sm:$0xff]
    %v3678 = vld [vmem:[#allocation2 + $0x38] sm:$0xff]
    %v3679 = vld [vmem:[#allocation2 + $0x40] sm:$0xff]
    %v3680 = vld [vmem:[#allocation2 + $0x48] sm:$0xff]
    %v3681 = vld [vmem:[#allocation2 + $0x50] sm:$0xff]
    %v3682 = vld [vmem:[#allocation2 + $0x60] sm:$0xff]
    %v3683 = vld [vmem:[#allocation2 + $0x68] sm:$0xff]
    %v3684 = vld [vmem:[#allocation2 + $0x70] sm:$0xff]
    %v3685 = vld [vmem:[#allocation2 + $0x78] sm:$0xff]
    %v3686 = vld [vmem:[#allocation2 + $0x80] sm:$0xff]
    %v3687 = vld [vmem:[#allocation2 + $0x90] sm:$0xff]
    %v3688 = vld [vmem:[#allocation2 + $0x98] sm:$0xff]
    %v3689 = vld [vmem:[#allocation2 + $0xa0] sm:$0xff]
    %v3690 = vld [vmem:[#allocation2 + $0xa8] sm:$0xff]
    %v3691 = vld [vmem:[#allocation2 + $0xb0] sm:$0xff]
    %v3692 = vlaneseq
    %v3693 = vshrl.u32 %v3692, 7
    %v3694 = vsub.s32 3, %v3693
    %v3695 = vrot.slane %v3112, %v3694
    %v3696 = vlaneseq
    %v3697 = vshrl.u32 %v3696, 7
    %v3698 = vsub.s32 3, %v3697
    %v3699 = vrot.slane %v3113, %v3698
    %v3700 = vlaneseq
    %v3701 = vshrl.u32 %v3700, 7
    %v3702 = vsub.s32 3, %v3701
    %v3703 = vrot.slane %v3114, %v3702
    %v3704 = vlaneseq
    %v3705 = vshrl.u32 %v3704, 7
    %v3706 = vsub.s32 3, %v3705
    %v3707 = vrot.slane %v3115, %v3706
    %3712 = vrot.lane.b32.xlu0 %v3695, 127
    %v3713 = vpop.permute.xlu0 %3712
    %3714 = vrot.lane.b32.xlu0 %v3699, 127
    %v3715 = vpop.permute.xlu0 %3714
    %3716 = vrot.lane.b32.xlu0 %v3703, 127
    %v3717 = vpop.permute.xlu0 %3716
    %3718 = vrot.lane.b32.xlu0 %v3707, 127
    %v3719 = vpop.permute.xlu0 %3718
    %v3720 = vsel %vm1143, %v3713, %v3715
    %v3721 = vsel %vm1143, %v3715, %v3717
    %v3722 = vsel %vm1143, %v3717, %v3719
    %v3728 = vmul.f32 %v3672, %v3713
    %v3729 = vmul.f32 %v3673, %v3720
    %v3730 = vmul.f32 %v3674, %v3721
    %v3731 = vmul.f32 %v3675, %v3722
    %v3732 = vmul.f32 %v3676, %v3719
    %v3733 = vmul.f32 %v3677, %v3713
    %v3734 = vmul.f32 %v3678, %v3720
    %v3735 = vmul.f32 %v3679, %v3721
    %v3736 = vmul.f32 %v3680, %v3722
    %v3737 = vmul.f32 %v3681, %v3719
    %v3738 = vmul.f32 %v3682, %v3713
    %v3739 = vmul.f32 %v3683, %v3720
    %v3740 = vmul.f32 %v3684, %v3721
    %v3741 = vmul.f32 %v3685, %v3722
    %v3742 = vmul.f32 %v3686, %v3719
    %v3743 = vmul.f32 %v3687, %v3713
    %v3744 = vmul.f32 %v3688, %v3720
    %v3745 = vmul.f32 %v3689, %v3721
    %v3746 = vmul.f32 %v3690, %v3722
    %v3747 = vmul.f32 %v3691, %v3719
    %3768 = vrot.lane.b32.xlu0 %v3728, 1
    %v3769 = vpop.permute.xlu0 %3768
    %3770 = vrot.lane.b32.xlu0 %v3729, 1
    %v3771 = vpop.permute.xlu0 %3770
    %3772 = vrot.lane.b32.xlu0 %v3730, 1
    %v3773 = vpop.permute.xlu0 %3772
    %3774 = vrot.lane.b32.xlu0 %v3731, 1
    %v3775 = vpop.permute.xlu0 %3774
    %3776 = vrot.lane.b32.xlu0 %v3732, 1
    %v3777 = vpop.permute.xlu0 %3776
    %3778 = vrot.lane.b32.xlu0 %v3733, 1
    %v3779 = vpop.permute.xlu0 %3778
    %3780 = vrot.lane.b32.xlu0 %v3734, 1
    %v3781 = vpop.permute.xlu0 %3780
    %3782 = vrot.lane.b32.xlu0 %v3735, 1
    %v3783 = vpop.permute.xlu0 %3782
    %3784 = vrot.lane.b32.xlu0 %v3736, 1
    %v3785 = vpop.permute.xlu0 %3784
    %3786 = vrot.lane.b32.xlu0 %v3737, 1
    %v3787 = vpop.permute.xlu0 %3786
    %3788 = vrot.lane.b32.xlu0 %v3738, 1
    %v3789 = vpop.permute.xlu0 %3788
    %3790 = vrot.lane.b32.xlu0 %v3739, 1
    %v3791 = vpop.permute.xlu0 %3790
    %3792 = vrot.lane.b32.xlu0 %v3740, 1
    %v3793 = vpop.permute.xlu0 %3792
    %3794 = vrot.lane.b32.xlu0 %v3741, 1
    %v3795 = vpop.permute.xlu0 %3794
    %3796 = vrot.lane.b32.xlu0 %v3742, 1
    %v3797 = vpop.permute.xlu0 %3796
    %3798 = vrot.lane.b32.xlu0 %v3743, 1
    %v3799 = vpop.permute.xlu0 %3798
    %3800 = vrot.lane.b32.xlu0 %v3744, 1
    %v3801 = vpop.permute.xlu0 %3800
    %3802 = vrot.lane.b32.xlu0 %v3745, 1
    %v3803 = vpop.permute.xlu0 %3802
    %3804 = vrot.lane.b32.xlu0 %v3746, 1
    %v3805 = vpop.permute.xlu0 %3804
    %3806 = vrot.lane.b32.xlu0 %v3747, 1
    %v3807 = vpop.permute.xlu0 %3806
    %v3808 = vsel %vm666, %v3769, %v3771
    %v3809 = vsel %vm666, %v3771, %v3773
    %v3810 = vsel %vm666, %v3773, %v3775
    %v3811 = vsel %vm666, %v3775, %v3777
    %v3812 = vsel %vm666, %v3779, %v3781
    %v3813 = vsel %vm666, %v3781, %v3783
    %v3814 = vsel %vm666, %v3783, %v3785
    %v3815 = vsel %vm666, %v3785, %v3787
    %v3816 = vsel %vm666, %v3789, %v3791
    %v3817 = vsel %vm666, %v3791, %v3793
    %v3818 = vsel %vm666, %v3793, %v3795
    %v3819 = vsel %vm666, %v3795, %v3797
    %v3820 = vsel %vm666, %v3799, %v3801
    %v3821 = vsel %vm666, %v3801, %v3803
    %v3822 = vsel %vm666, %v3803, %v3805
    %v3823 = vsel %vm666, %v3805, %v3807
    %3840 = vst [vmem:[#allocation3 + $0x180] sm:$0xff] %v3808
    %3841 = vst [vmem:[#allocation3 + $0x188] sm:$0xff] %v3809
    %3842 = vst [vmem:[#allocation3 + $0x190] sm:$0xff] %v3810
    %3843 = vst [vmem:[#allocation3 + $0x198] sm:$0xff] %v3811
    %3844 = vst [vmem:[#allocation3 + $0x1a0] sm:$0xff] %v3812
    %3845 = vst [vmem:[#allocation3 + $0x1a8] sm:$0xff] %v3813
    %3846 = vst [vmem:[#allocation3 + $0x1b0] sm:$0xff] %v3814
    %3847 = vst [vmem:[#allocation3 + $0x1b8] sm:$0xff] %v3815
    %3848 = vst [vmem:[#allocation3 + $0x1c0] sm:$0xff] %v3816
    %3849 = vst [vmem:[#allocation3 + $0x1c8] sm:$0xff] %v3817
    %3850 = vst [vmem:[#allocation3 + $0x1d0] sm:$0xff] %v3818
    %3851 = vst [vmem:[#allocation3 + $0x1d8] sm:$0xff] %v3819
    %3852 = vst [vmem:[#allocation3 + $0x1e0] sm:$0xff] %v3820
    %3853 = vst [vmem:[#allocation3 + $0x1e8] sm:$0xff] %v3821
    %3854 = vst [vmem:[#allocation3 + $0x1f0] sm:$0xff] %v3822
    %3855 = vst [vmem:[#allocation3 + $0x1f8] sm:$0xff] %v3823
    %v3856 = vld [vmem:[#allocation2 + $0x8] sm:$0xff]
    %v3857 = vld [vmem:[#allocation2 + $0x10] sm:$0xff]
    %v3858 = vld [vmem:[#allocation2 + $0x18] sm:$0xff]
    %v3859 = vld [vmem:[#allocation2 + $0x20] sm:$0xff]
    %v3860 = vld [vmem:[#allocation2 + $0x38] sm:$0xff]
    %v3861 = vld [vmem:[#allocation2 + $0x40] sm:$0xff]
    %v3862 = vld [vmem:[#allocation2 + $0x48] sm:$0xff]
    %v3863 = vld [vmem:[#allocation2 + $0x50] sm:$0xff]
    %v3864 = vld [vmem:[#allocation2 + $0x68] sm:$0xff]
    %v3865 = vld [vmem:[#allocation2 + $0x70] sm:$0xff]
    %v3866 = vld [vmem:[#allocation2 + $0x78] sm:$0xff]
    %v3867 = vld [vmem:[#allocation2 + $0x80] sm:$0xff]
    %v3868 = vld [vmem:[#allocation2 + $0x98] sm:$0xff]
    %v3869 = vld [vmem:[#allocation2 + $0xa0] sm:$0xff]
    %v3870 = vld [vmem:[#allocation2 + $0xa8] sm:$0xff]
    %v3871 = vld [vmem:[#allocation2 + $0xb0] sm:$0xff]
    %3872 = vst [vmem:[#allocation3 + $0x200] sm:$0xff] %v3856
    %3873 = vst [vmem:[#allocation3 + $0x208] sm:$0xff] %v3857
    %3874 = vst [vmem:[#allocation3 + $0x210] sm:$0xff] %v3858
    %3875 = vst [vmem:[#allocation3 + $0x218] sm:$0xff] %v3859
    %3876 = vst [vmem:[#allocation3 + $0x220] sm:$0xff] %v3860
    %3877 = vst [vmem:[#allocation3 + $0x228] sm:$0xff] %v3861
    %3878 = vst [vmem:[#allocation3 + $0x230] sm:$0xff] %v3862
    %3879 = vst [vmem:[#allocation3 + $0x238] sm:$0xff] %v3863
    %3880 = vst [vmem:[#allocation3 + $0x240] sm:$0xff] %v3864
    %3881 = vst [vmem:[#allocation3 + $0x248] sm:$0xff] %v3865
    %3882 = vst [vmem:[#allocation3 + $0x250] sm:$0xff] %v3866
    %3883 = vst [vmem:[#allocation3 + $0x258] sm:$0xff] %v3867
    %3884 = vst [vmem:[#allocation3 + $0x260] sm:$0xff] %v3868
    %3885 = vst [vmem:[#allocation3 + $0x268] sm:$0xff] %v3869
    %3886 = vst [vmem:[#allocation3 + $0x270] sm:$0xff] %v3870
    %3887 = vst [vmem:[#allocation3 + $0x278] sm:$0xff] %v3871
    %v3888 = vld [vmem:[#allocation2 + $0x8] sm:$0xff]
    %v3889 = vld [vmem:[#allocation2 + $0x10] sm:$0xff]
    %v3890 = vld [vmem:[#allocation2 + $0x18] sm:$0xff]
    %v3891 = vld [vmem:[#allocation2 + $0x20] sm:$0xff]
    %v3892 = vld [vmem:[#allocation2 + $0x28] sm:$0xff]
    %v3893 = vld [vmem:[#allocation2 + $0x38] sm:$0xff]
    %v3894 = vld [vmem:[#allocation2 + $0x40] sm:$0xff]
    %v3895 = vld [vmem:[#allocation2 + $0x48] sm:$0xff]
    %v3896 = vld [vmem:[#allocation2 + $0x50] sm:$0xff]
    %v3897 = vld [vmem:[#allocation2 + $0x58] sm:$0xff]
    %v3898 = vld [vmem:[#allocation2 + $0x68] sm:$0xff]
    %v3899 = vld [vmem:[#allocation2 + $0x70] sm:$0xff]
    %v3900 = vld [vmem:[#allocation2 + $0x78] sm:$0xff]
    %v3901 = vld [vmem:[#allocation2 + $0x80] sm:$0xff]
    %v3902 = vld [vmem:[#allocation2 + $0x88] sm:$0xff]
    %v3903 = vld [vmem:[#allocation2 + $0x98] sm:$0xff]
    %v3904 = vld [vmem:[#allocation2 + $0xa0] sm:$0xff]
    %v3905 = vld [vmem:[#allocation2 + $0xa8] sm:$0xff]
    %v3906 = vld [vmem:[#allocation2 + $0xb0] sm:$0xff]
    %v3907 = vld [vmem:[#allocation2 + $0xb8] sm:$0xff]
    %v3908 = vlaneseq
    %v3909 = vshrl.u32 %v3908, 7
    %v3910 = vsub.s32 5, %v3909
    %v3911 = vrot.slane %v3112, %v3910
    %v3912 = vlaneseq
    %v3913 = vshrl.u32 %v3912, 7
    %v3914 = vsub.s32 5, %v3913
    %v3915 = vrot.slane %v3113, %v3914
    %v3916 = vlaneseq
    %v3917 = vshrl.u32 %v3916, 7
    %v3918 = vsub.s32 5, %v3917
    %v3919 = vrot.slane %v3114, %v3918
    %v3920 = vlaneseq
    %v3921 = vshrl.u32 %v3920, 7
    %v3922 = vsub.s32 5, %v3921
    %v3923 = vrot.slane %v3115, %v3922
    %3928 = vrot.lane.b32.xlu0 %v3911, 1
    %v3929 = vpop.permute.xlu0 %3928
    %3930 = vrot.lane.b32.xlu0 %v3915, 1
    %v3931 = vpop.permute.xlu0 %3930
    %3932 = vrot.lane.b32.xlu0 %v3919, 1
    %v3933 = vpop.permute.xlu0 %3932
    %3934 = vrot.lane.b32.xlu0 %v3923, 1
    %v3935 = vpop.permute.xlu0 %3934
    %v3936 = vsel %vm666, %v3929, %v3931
    %v3937 = vsel %vm666, %v3931, %v3933
    %v3938 = vsel %vm666, %v3933, %v3935
    %v3944 = vmul.f32 %v3888, %v3929
    %v3945 = vmul.f32 %v3889, %v3936
    %v3946 = vmul.f32 %v3890, %v3937
    %v3947 = vmul.f32 %v3891, %v3938
    %v3948 = vmul.f32 %v3892, %v3935
    %v3949 = vmul.f32 %v3893, %v3929
    %v3950 = vmul.f32 %v3894, %v3936
    %v3951 = vmul.f32 %v3895, %v3937
    %v3952 = vmul.f32 %v3896, %v3938
    %v3953 = vmul.f32 %v3897, %v3935
    %v3954 = vmul.f32 %v3898, %v3929
    %v3955 = vmul.f32 %v3899, %v3936
    %v3956 = vmul.f32 %v3900, %v3937
    %v3957 = vmul.f32 %v3901, %v3938
    %v3958 = vmul.f32 %v3902, %v3935
    %v3959 = vmul.f32 %v3903, %v3929
    %v3960 = vmul.f32 %v3904, %v3936
    %v3961 = vmul.f32 %v3905, %v3937
    %v3962 = vmul.f32 %v3906, %v3938
    %v3963 = vmul.f32 %v3907, %v3935
    %3984 = vrot.lane.b32.xlu0 %v3944, 127
    %v3985 = vpop.permute.xlu0 %3984
    %3986 = vrot.lane.b32.xlu0 %v3945, 127
    %v3987 = vpop.permute.xlu0 %3986
    %3988 = vrot.lane.b32.xlu0 %v3946, 127
    %v3989 = vpop.permute.xlu0 %3988
    %3990 = vrot.lane.b32.xlu0 %v3947, 127
    %v3991 = vpop.permute.xlu0 %3990
    %3992 = vrot.lane.b32.xlu0 %v3948, 127
    %v3993 = vpop.permute.xlu0 %3992
    %3994 = vrot.lane.b32.xlu0 %v3949, 127
    %v3995 = vpop.permute.xlu0 %3994
    %3996 = vrot.lane.b32.xlu0 %v3950, 127
    %v3997 = vpop.permute.xlu0 %3996
    %3998 = vrot.lane.b32.xlu0 %v3951, 127
    %v3999 = vpop.permute.xlu0 %3998
    %4000 = vrot.lane.b32.xlu0 %v3952, 127
    %v4001 = vpop.permute.xlu0 %4000
    %4002 = vrot.lane.b32.xlu0 %v3953, 127
    %v4003 = vpop.permute.xlu0 %4002
    %4004 = vrot.lane.b32.xlu0 %v3954, 127
    %v4005 = vpop.permute.xlu0 %4004
    %4006 = vrot.lane.b32.xlu0 %v3955, 127
    %v4007 = vpop.permute.xlu0 %4006
    %4008 = vrot.lane.b32.xlu0 %v3956, 127
    %v4009 = vpop.permute.xlu0 %4008
    %4010 = vrot.lane.b32.xlu0 %v3957, 127
    %v4011 = vpop.permute.xlu0 %4010
    %4012 = vrot.lane.b32.xlu0 %v3958, 127
    %v4013 = vpop.permute.xlu0 %4012
    %4014 = vrot.lane.b32.xlu0 %v3959, 127
    %v4015 = vpop.permute.xlu0 %4014
    %4016 = vrot.lane.b32.xlu0 %v3960, 127
    %v4017 = vpop.permute.xlu0 %4016
    %4018 = vrot.lane.b32.xlu0 %v3961, 127
    %v4019 = vpop.permute.xlu0 %4018
    %4020 = vrot.lane.b32.xlu0 %v3962, 127
    %v4021 = vpop.permute.xlu0 %4020
    %4022 = vrot.lane.b32.xlu0 %v3963, 127
    %v4023 = vpop.permute.xlu0 %4022
    %v4024 = vsel %vm1143, %v3985, %v3987
    %v4025 = vsel %vm1143, %v3987, %v3989
    %v4026 = vsel %vm1143, %v3989, %v3991
    %v4027 = vsel %vm1143, %v3991, %v3993
    %v4028 = vsel %vm1143, %v3995, %v3997
    %v4029 = vsel %vm1143, %v3997, %v3999
    %v4030 = vsel %vm1143, %v3999, %v4001
    %v4031 = vsel %vm1143, %v4001, %v4003
    %v4032 = vsel %vm1143, %v4005, %v4007
    %v4033 = vsel %vm1143, %v4007, %v4009
    %v4034 = vsel %vm1143, %v4009, %v4011
    %v4035 = vsel %vm1143, %v4011, %v4013
    %v4036 = vsel %vm1143, %v4015, %v4017
    %v4037 = vsel %vm1143, %v4017, %v4019
    %v4038 = vsel %vm1143, %v4019, %v4021
    %v4039 = vsel %vm1143, %v4021, %v4023
    %4056 = vst [vmem:[#allocation3 + $0x280] sm:$0xff] %v4024
    %4057 = vst [vmem:[#allocation3 + $0x288] sm:$0xff] %v4025
    %4058 = vst [vmem:[#allocation3 + $0x290] sm:$0xff] %v4026
    %4059 = vst [vmem:[#allocation3 + $0x298] sm:$0xff] %v4027
    %4060 = vst [vmem:[#allocation3 + $0x2a0] sm:$0xff] %v4028
    %4061 = vst [vmem:[#allocation3 + $0x2a8] sm:$0xff] %v4029
    %4062 = vst [vmem:[#allocation3 + $0x2b0] sm:$0xff] %v4030
    %4063 = vst [vmem:[#allocation3 + $0x2b8] sm:$0xff] %v4031
    %4064 = vst [vmem:[#allocation3 + $0x2c0] sm:$0xff] %v4032
    %4065 = vst [vmem:[#allocation3 + $0x2c8] sm:$0xff] %v4033
    %4066 = vst [vmem:[#allocation3 + $0x2d0] sm:$0xff] %v4034
    %4067 = vst [vmem:[#allocation3 + $0x2d8] sm:$0xff] %v4035
    %4068 = vst [vmem:[#allocation3 + $0x2e0] sm:$0xff] %v4036
    %4069 = vst [vmem:[#allocation3 + $0x2e8] sm:$0xff] %v4037
    %4070 = vst [vmem:[#allocation3 + $0x2f0] sm:$0xff] %v4038
    %4071 = vst [vmem:[#allocation3 + $0x2f8] sm:$0xff] %v4039
    %v4072 = vld [vmem:[#allocation2 + $0x8] sm:$0xff]
    %v4073 = vld [vmem:[#allocation2 + $0x10] sm:$0xff]
    %v4074 = vld [vmem:[#allocation2 + $0x18] sm:$0xff]
    %v4075 = vld [vmem:[#allocation2 + $0x20] sm:$0xff]
    %v4076 = vld [vmem:[#allocation2 + $0x28] sm:$0xff]
    %v4077 = vld [vmem:[#allocation2 + $0x38] sm:$0xff]
    %v4078 = vld [vmem:[#allocation2 + $0x40] sm:$0xff]
    %v4079 = vld [vmem:[#allocation2 + $0x48] sm:$0xff]
    %v4080 = vld [vmem:[#allocation2 + $0x50] sm:$0xff]
    %v4081 = vld [vmem:[#allocation2 + $0x58] sm:$0xff]
    %v4082 = vld [vmem:[#allocation2 + $0x68] sm:$0xff]
    %v4083 = vld [vmem:[#allocation2 + $0x70] sm:$0xff]
    %v4084 = vld [vmem:[#allocation2 + $0x78] sm:$0xff]
    %v4085 = vld [vmem:[#allocation2 + $0x80] sm:$0xff]
    %v4086 = vld [vmem:[#allocation2 + $0x88] sm:$0xff]
    %v4087 = vld [vmem:[#allocation2 + $0x98] sm:$0xff]
    %v4088 = vld [vmem:[#allocation2 + $0xa0] sm:$0xff]
    %v4089 = vld [vmem:[#allocation2 + $0xa8] sm:$0xff]
    %v4090 = vld [vmem:[#allocation2 + $0xb0] sm:$0xff]
    %v4091 = vld [vmem:[#allocation2 + $0xb8] sm:$0xff]
    %v4092 = vlaneseq
    %v4093 = vshrl.u32 %v4092, 7
    %v4094 = vsub.s32 6, %v4093
    %v4095 = vrot.slane %v3112, %v4094
    %v4096 = vlaneseq
    %v4097 = vshrl.u32 %v4096, 7
    %v4098 = vsub.s32 6, %v4097
    %v4099 = vrot.slane %v3113, %v4098
    %v4100 = vlaneseq
    %v4101 = vshrl.u32 %v4100, 7
    %v4102 = vsub.s32 6, %v4101
    %v4103 = vrot.slane %v3114, %v4102
    %v4104 = vlaneseq
    %v4105 = vshrl.u32 %v4104, 7
    %v4106 = vsub.s32 6, %v4105
    %v4107 = vrot.slane %v3115, %v4106
    %4112 = vrot.lane.b32.xlu0 %v4095, 15
    %v4113 = vpop.permute.xlu0 %4112
    %4114 = vrot.lane.b32.xlu0 %v4099, 15
    %v4115 = vpop.permute.xlu0 %4114
    %4116 = vrot.lane.b32.xlu0 %v4103, 15
    %v4117 = vpop.permute.xlu0 %4116
    %4118 = vrot.lane.b32.xlu0 %v4107, 15
    %v4119 = vpop.permute.xlu0 %4118
    %v4120 = vsel %vm1968, %v4113, %v4115
    %v4121 = vsel %vm1968, %v4115, %v4117
    %v4122 = vsel %vm1968, %v4117, %v4119
    %v4128 = vmul.f32 %v4072, %v4113
    %v4129 = vmul.f32 %v4073, %v4120
    %v4130 = vmul.f32 %v4074, %v4121
    %v4131 = vmul.f32 %v4075, %v4122
    %v4132 = vmul.f32 %v4076, %v4119
    %v4133 = vmul.f32 %v4077, %v4113
    %v4134 = vmul.f32 %v4078, %v4120
    %v4135 = vmul.f32 %v4079, %v4121
    %v4136 = vmul.f32 %v4080, %v4122
    %v4137 = vmul.f32 %v4081, %v4119
    %v4138 = vmul.f32 %v4082, %v4113
    %v4139 = vmul.f32 %v4083, %v4120
    %v4140 = vmul.f32 %v4084, %v4121
    %v4141 = vmul.f32 %v4085, %v4122
    %v4142 = vmul.f32 %v4086, %v4119
    %v4143 = vmul.f32 %v4087, %v4113
    %v4144 = vmul.f32 %v4088, %v4120
    %v4145 = vmul.f32 %v4089, %v4121
    %v4146 = vmul.f32 %v4090, %v4122
    %v4147 = vmul.f32 %v4091, %v4119
    %4168 = vrot.lane.b32.xlu0 %v4128, 113
    %v4169 = vpop.permute.xlu0 %4168
    %4170 = vrot.lane.b32.xlu0 %v4129, 113
    %v4171 = vpop.permute.xlu0 %4170
    %4172 = vrot.lane.b32.xlu0 %v4130, 113
    %v4173 = vpop.permute.xlu0 %4172
    %4174 = vrot.lane.b32.xlu0 %v4131, 113
    %v4175 = vpop.permute.xlu0 %4174
    %4176 = vrot.lane.b32.xlu0 %v4132, 113
    %v4177 = vpop.permute.xlu0 %4176
    %4178 = vrot.lane.b32.xlu0 %v4133, 113
    %v4179 = vpop.permute.xlu0 %4178
    %4180 = vrot.lane.b32.xlu0 %v4134, 113
    %v4181 = vpop.permute.xlu0 %4180
    %4182 = vrot.lane.b32.xlu0 %v4135, 113
    %v4183 = vpop.permute.xlu0 %4182
    %4184 = vrot.lane.b32.xlu0 %v4136, 113
    %v4185 = vpop.permute.xlu0 %4184
    %4186 = vrot.lane.b32.xlu0 %v4137, 113
    %v4187 = vpop.permute.xlu0 %4186
    %4188 = vrot.lane.b32.xlu0 %v4138, 113
    %v4189 = vpop.permute.xlu0 %4188
    %4190 = vrot.lane.b32.xlu0 %v4139, 113
    %v4191 = vpop.permute.xlu0 %4190
    %4192 = vrot.lane.b32.xlu0 %v4140, 113
    %v4193 = vpop.permute.xlu0 %4192
    %4194 = vrot.lane.b32.xlu0 %v4141, 113
    %v4195 = vpop.permute.xlu0 %4194
    %4196 = vrot.lane.b32.xlu0 %v4142, 113
    %v4197 = vpop.permute.xlu0 %4196
    %4198 = vrot.lane.b32.xlu0 %v4143, 113
    %v4199 = vpop.permute.xlu0 %4198
    %4200 = vrot.lane.b32.xlu0 %v4144, 113
    %v4201 = vpop.permute.xlu0 %4200
    %4202 = vrot.lane.b32.xlu0 %v4145, 113
    %v4203 = vpop.permute.xlu0 %4202
    %4204 = vrot.lane.b32.xlu0 %v4146, 113
    %v4205 = vpop.permute.xlu0 %4204
    %4206 = vrot.lane.b32.xlu0 %v4147, 113
    %v4207 = vpop.permute.xlu0 %4206
    %v4208 = vsel %vm1939, %v4169, %v4171
    %v4209 = vsel %vm1939, %v4171, %v4173
    %v4210 = vsel %vm1939, %v4173, %v4175
    %v4211 = vsel %vm1939, %v4175, %v4177
    %v4212 = vsel %vm1939, %v4179, %v4181
    %v4213 = vsel %vm1939, %v4181, %v4183
    %v4214 = vsel %vm1939, %v4183, %v4185
    %v4215 = vsel %vm1939, %v4185, %v4187
    %v4216 = vsel %vm1939, %v4189, %v4191
    %v4217 = vsel %vm1939, %v4191, %v4193
    %v4218 = vsel %vm1939, %v4193, %v4195
    %v4219 = vsel %vm1939, %v4195, %v4197
    %v4220 = vsel %vm1939, %v4199, %v4201
    %v4221 = vsel %vm1939, %v4201, %v4203
    %v4222 = vsel %vm1939, %v4203, %v4205
    %v4223 = vsel %vm1939, %v4205, %v4207
    %4240 = vst [vmem:[#allocation3 + $0x300] sm:$0xff] %v4208
    %4241 = vst [vmem:[#allocation3 + $0x308] sm:$0xff] %v4209
    %4242 = vst [vmem:[#allocation3 + $0x310] sm:$0xff] %v4210
    %4243 = vst [vmem:[#allocation3 + $0x318] sm:$0xff] %v4211
    %4244 = vst [vmem:[#allocation3 + $0x320] sm:$0xff] %v4212
    %4245 = vst [vmem:[#allocation3 + $0x328] sm:$0xff] %v4213
    %4246 = vst [vmem:[#allocation3 + $0x330] sm:$0xff] %v4214
    %4247 = vst [vmem:[#allocation3 + $0x338] sm:$0xff] %v4215
    %4248 = vst [vmem:[#allocation3 + $0x340] sm:$0xff] %v4216
    %4249 = vst [vmem:[#allocation3 + $0x348] sm:$0xff] %v4217
    %4250 = vst [vmem:[#allocation3 + $0x350] sm:$0xff] %v4218
    %4251 = vst [vmem:[#allocation3 + $0x358] sm:$0xff] %v4219
    %4252 = vst [vmem:[#allocation3 + $0x360] sm:$0xff] %v4220
    %4253 = vst [vmem:[#allocation3 + $0x368] sm:$0xff] %v4221
    %4254 = vst [vmem:[#allocation3 + $0x370] sm:$0xff] %v4222
    %4255 = vst [vmem:[#allocation3 + $0x378] sm:$0xff] %v4223
    %v4256 = vld [vmem:[#allocation2 + $0x8] sm:$0xff]
    %v4257 = vld [vmem:[#allocation2 + $0x10] sm:$0xff]
    %v4258 = vld [vmem:[#allocation2 + $0x18] sm:$0xff]
    %v4259 = vld [vmem:[#allocation2 + $0x20] sm:$0xff]
    %v4260 = vld [vmem:[#allocation2 + $0x28] sm:$0xff]
    %v4261 = vld [vmem:[#allocation2 + $0x38] sm:$0xff]
    %v4262 = vld [vmem:[#allocation2 + $0x40] sm:$0xff]
    %v4263 = vld [vmem:[#allocation2 + $0x48] sm:$0xff]
    %v4264 = vld [vmem:[#allocation2 + $0x50] sm:$0xff]
    %v4265 = vld [vmem:[#allocation2 + $0x58] sm:$0xff]
    %v4266 = vld [vmem:[#allocation2 + $0x68] sm:$0xff]
    %v4267 = vld [vmem:[#allocation2 + $0x70] sm:$0xff]
    %v4268 = vld [vmem:[#allocation2 + $0x78] sm:$0xff]
    %v4269 = vld [vmem:[#allocation2 + $0x80] sm:$0xff]
    %v4270 = vld [vmem:[#allocation2 + $0x88] sm:$0xff]
    %v4271 = vld [vmem:[#allocation2 + $0x98] sm:$0xff]
    %v4272 = vld [vmem:[#allocation2 + $0xa0] sm:$0xff]
    %v4273 = vld [vmem:[#allocation2 + $0xa8] sm:$0xff]
    %v4274 = vld [vmem:[#allocation2 + $0xb0] sm:$0xff]
    %v4275 = vld [vmem:[#allocation2 + $0xb8] sm:$0xff]
    %v4276 = vlaneseq
    %v4277 = vshrl.u32 %v4276, 7
    %v4278 = vsub.s32 7, %v4277
    %v4279 = vrot.slane %v3112, %v4278
    %v4280 = vlaneseq
    %v4281 = vshrl.u32 %v4280, 7
    %v4282 = vsub.s32 7, %v4281
    %v4283 = vrot.slane %v3113, %v4282
    %v4284 = vlaneseq
    %v4285 = vshrl.u32 %v4284, 7
    %v4286 = vsub.s32 7, %v4285
    %v4287 = vrot.slane %v3114, %v4286
    %v4288 = vlaneseq
    %v4289 = vshrl.u32 %v4288, 7
    %v4290 = vsub.s32 7, %v4289
    %v4291 = vrot.slane %v3115, %v4290
    %4296 = vrot.lane.b32.xlu0 %v4279, 16
    %v4297 = vpop.permute.xlu0 %4296
    %4298 = vrot.lane.b32.xlu0 %v4283, 16
    %v4299 = vpop.permute.xlu0 %4298
    %4300 = vrot.lane.b32.xlu0 %v4287, 16
    %v4301 = vpop.permute.xlu0 %4300
    %4302 = vrot.lane.b32.xlu0 %v4291, 16
    %v4303 = vpop.permute.xlu0 %4302
    %v4304 = vsel %vm397, %v4297, %v4299
    %v4305 = vsel %vm397, %v4299, %v4301
    %v4306 = vsel %vm397, %v4301, %v4303
    %v4312 = vmul.f32 %v4256, %v4297
    %v4313 = vmul.f32 %v4257, %v4304
    %v4314 = vmul.f32 %v4258, %v4305
    %v4315 = vmul.f32 %v4259, %v4306
    %v4316 = vmul.f32 %v4260, %v4303
    %v4317 = vmul.f32 %v4261, %v4297
    %v4318 = vmul.f32 %v4262, %v4304
    %v4319 = vmul.f32 %v4263, %v4305
    %v4320 = vmul.f32 %v4264, %v4306
    %v4321 = vmul.f32 %v4265, %v4303
    %v4322 = vmul.f32 %v4266, %v4297
    %v4323 = vmul.f32 %v4267, %v4304
    %v4324 = vmul.f32 %v4268, %v4305
    %v4325 = vmul.f32 %v4269, %v4306
    %v4326 = vmul.f32 %v4270, %v4303
    %v4327 = vmul.f32 %v4271, %v4297
    %v4328 = vmul.f32 %v4272, %v4304
    %v4329 = vmul.f32 %v4273, %v4305
    %v4330 = vmul.f32 %v4274, %v4306
    %v4331 = vmul.f32 %v4275, %v4303
    %4352 = vrot.lane.b32.xlu0 %v4312, 112
    %v4353 = vpop.permute.xlu0 %4352
    %4354 = vrot.lane.b32.xlu0 %v4313, 112
    %v4355 = vpop.permute.xlu0 %4354
    %4356 = vrot.lane.b32.xlu0 %v4314, 112
    %v4357 = vpop.permute.xlu0 %4356
    %4358 = vrot.lane.b32.xlu0 %v4315, 112
    %v4359 = vpop.permute.xlu0 %4358
    %4360 = vrot.lane.b32.xlu0 %v4316, 112
    %v4361 = vpop.permute.xlu0 %4360
    %4362 = vrot.lane.b32.xlu0 %v4317, 112
    %v4363 = vpop.permute.xlu0 %4362
    %4364 = vrot.lane.b32.xlu0 %v4318, 112
    %v4365 = vpop.permute.xlu0 %4364
    %4366 = vrot.lane.b32.xlu0 %v4319, 112
    %v4367 = vpop.permute.xlu0 %4366
    %4368 = vrot.lane.b32.xlu0 %v4320, 112
    %v4369 = vpop.permute.xlu0 %4368
    %4370 = vrot.lane.b32.xlu0 %v4321, 112
    %v4371 = vpop.permute.xlu0 %4370
    %4372 = vrot.lane.b32.xlu0 %v4322, 112
    %v4373 = vpop.permute.xlu0 %4372
    %4374 = vrot.lane.b32.xlu0 %v4323, 112
    %v4375 = vpop.permute.xlu0 %4374
    %4376 = vrot.lane.b32.xlu0 %v4324, 112
    %v4377 = vpop.permute.xlu0 %4376
    %4378 = vrot.lane.b32.xlu0 %v4325, 112
    %v4379 = vpop.permute.xlu0 %4378
    %4380 = vrot.lane.b32.xlu0 %v4326, 112
    %v4381 = vpop.permute.xlu0 %4380
    %4382 = vrot.lane.b32.xlu0 %v4327, 112
    %v4383 = vpop.permute.xlu0 %4382
    %4384 = vrot.lane.b32.xlu0 %v4328, 112
    %v4385 = vpop.permute.xlu0 %4384
    %4386 = vrot.lane.b32.xlu0 %v4329, 112
    %v4387 = vpop.permute.xlu0 %4386
    %4388 = vrot.lane.b32.xlu0 %v4330, 112
    %v4389 = vpop.permute.xlu0 %4388
    %4390 = vrot.lane.b32.xlu0 %v4331, 112
    %v4391 = vpop.permute.xlu0 %4390
    %v4392 = vsel %vm1865, %v4353, %v4355
    %v4393 = vsel %vm1865, %v4355, %v4357
    %v4394 = vsel %vm1865, %v4357, %v4359
    %v4395 = vsel %vm1865, %v4359, %v4361
    %v4396 = vsel %vm1865, %v4363, %v4365
    %v4397 = vsel %vm1865, %v4365, %v4367
    %v4398 = vsel %vm1865, %v4367, %v4369
    %v4399 = vsel %vm1865, %v4369, %v4371
    %v4400 = vsel %vm1865, %v4373, %v4375
    %v4401 = vsel %vm1865, %v4375, %v4377
    %v4402 = vsel %vm1865, %v4377, %v4379
    %v4403 = vsel %vm1865, %v4379, %v4381
    %v4404 = vsel %vm1865, %v4383, %v4385
    %v4405 = vsel %vm1865, %v4385, %v4387
    %v4406 = vsel %vm1865, %v4387, %v4389
    %v4407 = vsel %vm1865, %v4389, %v4391
    %4424 = vst [vmem:[#allocation3 + $0x380] sm:$0xff] %v4392
    %4425 = vst [vmem:[#allocation3 + $0x388] sm:$0xff] %v4393
    %4426 = vst [vmem:[#allocation3 + $0x390] sm:$0xff] %v4394
    %4427 = vst [vmem:[#allocation3 + $0x398] sm:$0xff] %v4395
    %4428 = vst [vmem:[#allocation3 + $0x3a0] sm:$0xff] %v4396
    %4429 = vst [vmem:[#allocation3 + $0x3a8] sm:$0xff] %v4397
    %4430 = vst [vmem:[#allocation3 + $0x3b0] sm:$0xff] %v4398
    %4431 = vst [vmem:[#allocation3 + $0x3b8] sm:$0xff] %v4399
    %4432 = vst [vmem:[#allocation3 + $0x3c0] sm:$0xff] %v4400
    %4433 = vst [vmem:[#allocation3 + $0x3c8] sm:$0xff] %v4401
    %4434 = vst [vmem:[#allocation3 + $0x3d0] sm:$0xff] %v4402
    %4435 = vst [vmem:[#allocation3 + $0x3d8] sm:$0xff] %v4403
    %4436 = vst [vmem:[#allocation3 + $0x3e0] sm:$0xff] %v4404
    %4437 = vst [vmem:[#allocation3 + $0x3e8] sm:$0xff] %v4405
    %4438 = vst [vmem:[#allocation3 + $0x3f0] sm:$0xff] %v4406
    %4439 = vst [vmem:[#allocation3 + $0x3f8] sm:$0xff] %v4407
    %v4440 = vld [vmem:[#allocation2 + $0x8] sm:$0xff]
    %v4441 = vld [vmem:[#allocation2 + $0x10] sm:$0xff]
    %v4442 = vld [vmem:[#allocation2 + $0x18] sm:$0xff]
    %v4443 = vld [vmem:[#allocation2 + $0x20] sm:$0xff]
    %v4444 = vld [vmem:[#allocation2 + $0x28] sm:$0xff]
    %v4445 = vld [vmem:[#allocation2 + $0x38] sm:$0xff]
    %v4446 = vld [vmem:[#allocation2 + $0x40] sm:$0xff]
    %v4447 = vld [vmem:[#allocation2 + $0x48] sm:$0xff]
    %v4448 = vld [vmem:[#allocation2 + $0x50] sm:$0xff]
    %v4449 = vld [vmem:[#allocation2 + $0x58] sm:$0xff]
    %v4450 = vld [vmem:[#allocation2 + $0x68] sm:$0xff]
    %v4451 = vld [vmem:[#allocation2 + $0x70] sm:$0xff]
    %v4452 = vld [vmem:[#allocation2 + $0x78] sm:$0xff]
    %v4453 = vld [vmem:[#allocation2 + $0x80] sm:$0xff]
    %v4454 = vld [vmem:[#allocation2 + $0x88] sm:$0xff]
    %v4455 = vld [vmem:[#allocation2 + $0x98] sm:$0xff]
    %v4456 = vld [vmem:[#allocation2 + $0xa0] sm:$0xff]
    %v4457 = vld [vmem:[#allocation2 + $0xa8] sm:$0xff]
    %v4458 = vld [vmem:[#allocation2 + $0xb0] sm:$0xff]
    %v4459 = vld [vmem:[#allocation2 + $0xb8] sm:$0xff]
    %v4460 = vlaneseq
    %v4461 = vshrl.u32 %v4460, 7
    %v4462 = vsub.s32 0, %v4461
    %v4463 = vrot.slane %v3116, %v4462
    %v4464 = vlaneseq
    %v4465 = vshrl.u32 %v4464, 7
    %v4466 = vsub.s32 0, %v4465
    %v4467 = vrot.slane %v3117, %v4466
    %v4468 = vlaneseq
    %v4469 = vshrl.u32 %v4468, 7
    %v4470 = vsub.s32 0, %v4469
    %v4471 = vrot.slane %v3118, %v4470
    %v4472 = vlaneseq
    %v4473 = vshrl.u32 %v4472, 7
    %v4474 = vsub.s32 0, %v4473
    %v4475 = vrot.slane %v3119, %v4474
    %4480 = vrot.lane.b32.xlu0 %v4463, 17
    %v4481 = vpop.permute.xlu0 %4480
    %4482 = vrot.lane.b32.xlu0 %v4467, 17
    %v4483 = vpop.permute.xlu0 %4482
    %4484 = vrot.lane.b32.xlu0 %v4471, 17
    %v4485 = vpop.permute.xlu0 %4484
    %4486 = vrot.lane.b32.xlu0 %v4475, 17
    %v4487 = vpop.permute.xlu0 %4486
    %v4488 = vsel %vm1819, %v4481, %v4483
    %v4489 = vsel %vm1819, %v4483, %v4485
    %v4490 = vsel %vm1819, %v4485, %v4487
    %v4496 = vmul.f32 %v4440, %v4481
    %v4497 = vmul.f32 %v4441, %v4488
    %v4498 = vmul.f32 %v4442, %v4489
    %v4499 = vmul.f32 %v4443, %v4490
    %v4500 = vmul.f32 %v4444, %v4487
    %v4501 = vmul.f32 %v4445, %v4481
    %v4502 = vmul.f32 %v4446, %v4488
    %v4503 = vmul.f32 %v4447, %v4489
    %v4504 = vmul.f32 %v4448, %v4490
    %v4505 = vmul.f32 %v4449, %v4487
    %v4506 = vmul.f32 %v4450, %v4481
    %v4507 = vmul.f32 %v4451, %v4488
    %v4508 = vmul.f32 %v4452, %v4489
    %v4509 = vmul.f32 %v4453, %v4490
    %v4510 = vmul.f32 %v4454, %v4487
    %v4511 = vmul.f32 %v4455, %v4481
    %v4512 = vmul.f32 %v4456, %v4488
    %v4513 = vmul.f32 %v4457, %v4489
    %v4514 = vmul.f32 %v4458, %v4490
    %v4515 = vmul.f32 %v4459, %v4487
    %4536 = vrot.lane.b32.xlu0 %v4496, 111
    %v4537 = vpop.permute.xlu0 %4536
    %4538 = vrot.lane.b32.xlu0 %v4497, 111
    %v4539 = vpop.permute.xlu0 %4538
    %4540 = vrot.lane.b32.xlu0 %v4498, 111
    %v4541 = vpop.permute.xlu0 %4540
    %4542 = vrot.lane.b32.xlu0 %v4499, 111
    %v4543 = vpop.permute.xlu0 %4542
    %4544 = vrot.lane.b32.xlu0 %v4500, 111
    %v4545 = vpop.permute.xlu0 %4544
    %4546 = vrot.lane.b32.xlu0 %v4501, 111
    %v4547 = vpop.permute.xlu0 %4546
    %4548 = vrot.lane.b32.xlu0 %v4502, 111
    %v4549 = vpop.permute.xlu0 %4548
    %4550 = vrot.lane.b32.xlu0 %v4503, 111
    %v4551 = vpop.permute.xlu0 %4550
    %4552 = vrot.lane.b32.xlu0 %v4504, 111
    %v4553 = vpop.permute.xlu0 %4552
    %4554 = vrot.lane.b32.xlu0 %v4505, 111
    %v4555 = vpop.permute.xlu0 %4554
    %4556 = vrot.lane.b32.xlu0 %v4506, 111
    %v4557 = vpop.permute.xlu0 %4556
    %4558 = vrot.lane.b32.xlu0 %v4507, 111
    %v4559 = vpop.permute.xlu0 %4558
    %4560 = vrot.lane.b32.xlu0 %v4508, 111
    %v4561 = vpop.permute.xlu0 %4560
    %4562 = vrot.lane.b32.xlu0 %v4509, 111
    %v4563 = vpop.permute.xlu0 %4562
    %4564 = vrot.lane.b32.xlu0 %v4510, 111
    %v4565 = vpop.permute.xlu0 %4564
    %4566 = vrot.lane.b32.xlu0 %v4511, 111
    %v4567 = vpop.permute.xlu0 %4566
    %4568 = vrot.lane.b32.xlu0 %v4512, 111
    %v4569 = vpop.permute.xlu0 %4568
    %4570 = vrot.lane.b32.xlu0 %v4513, 111
    %v4571 = vpop.permute.xlu0 %4570
    %4572 = vrot.lane.b32.xlu0 %v4514, 111
    %v4573 = vpop.permute.xlu0 %4572
    %4574 = vrot.lane.b32.xlu0 %v4515, 111
    %v4575 = vpop.permute.xlu0 %4574
    %v4576 = vsel %vm1790, %v4537, %v4539
    %v4577 = vsel %vm1790, %v4539, %v4541
    %v4578 = vsel %vm1790, %v4541, %v4543
    %v4579 = vsel %vm1790, %v4543, %v4545
    %v4580 = vsel %vm1790, %v4547, %v4549
    %v4581 = vsel %vm1790, %v4549, %v4551
    %v4582 = vsel %vm1790, %v4551, %v4553
    %v4583 = vsel %vm1790, %v4553, %v4555
    %v4584 = vsel %vm1790, %v4557, %v4559
    %v4585 = vsel %vm1790, %v4559, %v4561
    %v4586 = vsel %vm1790, %v4561, %v4563
    %v4587 = vsel %vm1790, %v4563, %v4565
    %v4588 = vsel %vm1790, %v4567, %v4569
    %v4589 = vsel %vm1790, %v4569, %v4571
    %v4590 = vsel %vm1790, %v4571, %v4573
    %v4591 = vsel %vm1790, %v4573, %v4575
    %4608 = vst [vmem:[#allocation3 + $0x400] sm:$0xff] %v4576
    %4609 = vst [vmem:[#allocation3 + $0x408] sm:$0xff] %v4577
    %4610 = vst [vmem:[#allocation3 + $0x410] sm:$0xff] %v4578
    %4611 = vst [vmem:[#allocation3 + $0x418] sm:$0xff] %v4579
    %4612 = vst [vmem:[#allocation3 + $0x420] sm:$0xff] %v4580
    %4613 = vst [vmem:[#allocation3 + $0x428] sm:$0xff] %v4581
    %4614 = vst [vmem:[#allocation3 + $0x430] sm:$0xff] %v4582
    %4615 = vst [vmem:[#allocation3 + $0x438] sm:$0xff] %v4583
    %4616 = vst [vmem:[#allocation3 + $0x440] sm:$0xff] %v4584
    %4617 = vst [vmem:[#allocation3 + $0x448] sm:$0xff] %v4585
    %4618 = vst [vmem:[#allocation3 + $0x450] sm:$0xff] %v4586
    %4619 = vst [vmem:[#allocation3 + $0x458] sm:$0xff] %v4587
    %4620 = vst [vmem:[#allocation3 + $0x460] sm:$0xff] %v4588
    %4621 = vst [vmem:[#allocation3 + $0x468] sm:$0xff] %v4589
    %4622 = vst [vmem:[#allocation3 + $0x470] sm:$0xff] %v4590
    %4623 = vst [vmem:[#allocation3 + $0x478] sm:$0xff] %v4591
    %v4624 = vld [vmem:[%s11] sm:$0xff]
    %v4625 = vld [vmem:[%s11 + $0x8] sm:$0xff]
    %v4626 = vld [vmem:[%s11 + $0x10] sm:$0xff]
    %v4627 = vld [vmem:[#allocation3] sm:$0xff]
    %v4628 = vld [vmem:[#allocation3 + $0x8] sm:$0xff]
    %v4629 = vld [vmem:[#allocation3 + $0x10] sm:$0xff]
    %v4630 = vld [vmem:[#allocation3 + $0x18] sm:$0xff]
    %v4631 = vld [vmem:[#allocation3 + $0x20] sm:$0xff]
    %v4632 = vld [vmem:[#allocation3 + $0x28] sm:$0xff]
    %v4633 = vld [vmem:[#allocation3 + $0x30] sm:$0xff]
    %v4634 = vld [vmem:[#allocation3 + $0x38] sm:$0xff]
    %v4635 = vld [vmem:[#allocation3 + $0x40] sm:$0xff]
    %v4636 = vld [vmem:[#allocation3 + $0x48] sm:$0xff]
    %v4637 = vld [vmem:[#allocation3 + $0x50] sm:$0xff]
    %v4638 = vld [vmem:[#allocation3 + $0x58] sm:$0xff]
    %v4639 = vld [vmem:[#allocation3 + $0x60] sm:$0xff]
    %v4640 = vld [vmem:[#allocation3 + $0x68] sm:$0xff]
    %v4641 = vld [vmem:[#allocation3 + $0x70] sm:$0xff]
    %v4642 = vld [vmem:[#allocation3 + $0x78] sm:$0xff]
    %v4643 = vld [vmem:[#allocation3 + $0x80] sm:$0xff]
    %v4644 = vld [vmem:[#allocation3 + $0x88] sm:$0xff]
    %v4645 = vld [vmem:[#allocation3 + $0x90] sm:$0xff]
    %v4646 = vld [vmem:[#allocation3 + $0x98] sm:$0xff]
    %v4647 = vld [vmem:[#allocation3 + $0xa0] sm:$0xff]
    %v4648 = vld [vmem:[#allocation3 + $0xa8] sm:$0xff]
    %v4649 = vld [vmem:[#allocation3 + $0xb0] sm:$0xff]
    %v4650 = vld [vmem:[#allocation3 + $0xb8] sm:$0xff]
    %v4651 = vld [vmem:[#allocation3 + $0xc0] sm:$0xff]
    %v4652 = vld [vmem:[#allocation3 + $0xc8] sm:$0xff]
    %v4653 = vld [vmem:[#allocation3 + $0xd0] sm:$0xff]
    %v4654 = vld [vmem:[#allocation3 + $0xd8] sm:$0xff]
    %v4655 = vld [vmem:[#allocation3 + $0xe0] sm:$0xff]
    %v4656 = vld [vmem:[#allocation3 + $0xe8] sm:$0xff]
    %v4657 = vld [vmem:[#allocation3 + $0xf0] sm:$0xff]
    %v4658 = vld [vmem:[#allocation3 + $0xf8] sm:$0xff]
    %v4659 = vld [vmem:[#allocation3 + $0x100] sm:$0xff]
    %v4660 = vld [vmem:[#allocation3 + $0x108] sm:$0xff]
    %v4661 = vld [vmem:[#allocation3 + $0x110] sm:$0xff]
    %v4662 = vld [vmem:[#allocation3 + $0x118] sm:$0xff]
    %v4663 = vld [vmem:[#allocation3 + $0x120] sm:$0xff]
    %v4664 = vld [vmem:[#allocation3 + $0x128] sm:$0xff]
    %v4665 = vld [vmem:[#allocation3 + $0x130] sm:$0xff]
    %v4666 = vld [vmem:[#allocation3 + $0x138] sm:$0xff]
    %v4667 = vld [vmem:[#allocation3 + $0x140] sm:$0xff]
    %v4668 = vld [vmem:[#allocation3 + $0x148] sm:$0xff]
    %v4669 = vld [vmem:[#allocation3 + $0x150] sm:$0xff]
    %v4670 = vld [vmem:[#allocation3 + $0x158] sm:$0xff]
    %v4671 = vld [vmem:[#allocation3 + $0x160] sm:$0xff]
    %v4672 = vld [vmem:[#allocation3 + $0x168] sm:$0xff]
    %v4673 = vld [vmem:[#allocation3 + $0x170] sm:$0xff]
    %v4674 = vld [vmem:[#allocation3 + $0x178] sm:$0xff]
    %v4675 = vld [vmem:[#allocation3 + $0x180] sm:$0xff]
    %v4676 = vld [vmem:[#allocation3 + $0x188] sm:$0xff]
    %v4677 = vld [vmem:[#allocation3 + $0x190] sm:$0xff]
    %v4678 = vld [vmem:[#allocation3 + $0x198] sm:$0xff]
    %v4679 = vld [vmem:[#allocation3 + $0x1a0] sm:$0xff]
    %v4680 = vld [vmem:[#allocation3 + $0x1a8] sm:$0xff]
    %v4681 = vld [vmem:[#allocation3 + $0x1b0] sm:$0xff]
    %v4682 = vld [vmem:[#allocation3 + $0x1b8] sm:$0xff]
    %v4683 = vld [vmem:[#allocation3 + $0x1c0] sm:$0xff]
    %v4684 = vld [vmem:[#allocation3 + $0x1c8] sm:$0xff]
    %v4685 = vld [vmem:[#allocation3 + $0x1d0] sm:$0xff]
    %v4686 = vld [vmem:[#allocation3 + $0x1d8] sm:$0xff]
    %v4687 = vld [vmem:[#allocation3 + $0x1e0] sm:$0xff]
    %v4688 = vld [vmem:[#allocation3 + $0x1e8] sm:$0xff]
    %v4689 = vld [vmem:[#allocation3 + $0x1f0] sm:$0xff]
    %v4690 = vld [vmem:[#allocation3 + $0x1f8] sm:$0xff]
    %v4691 = vld [vmem:[#allocation3 + $0x200] sm:$0xff]
    %v4692 = vld [vmem:[#allocation3 + $0x208] sm:$0xff]
    %v4693 = vld [vmem:[#allocation3 + $0x210] sm:$0xff]
    %v4694 = vld [vmem:[#allocation3 + $0x218] sm:$0xff]
    %v4695 = vld [vmem:[#allocation3 + $0x220] sm:$0xff]
    %v4696 = vld [vmem:[#allocation3 + $0x228] sm:$0xff]
    %v4697 = vld [vmem:[#allocation3 + $0x230] sm:$0xff]
    %v4698 = vld [vmem:[#allocation3 + $0x238] sm:$0xff]
    %v4699 = vld [vmem:[#allocation3 + $0x240] sm:$0xff]
    %v4700 = vld [vmem:[#allocation3 + $0x248] sm:$0xff]
    %v4701 = vld [vmem:[#allocation3 + $0x250] sm:$0xff]
    %v4702 = vld [vmem:[#allocation3 + $0x258] sm:$0xff]
    %v4703 = vld [vmem:[#allocation3 + $0x260] sm:$0xff]
    %v4704 = vld [vmem:[#allocation3 + $0x268] sm:$0xff]
    %v4705 = vld [vmem:[#allocation3 + $0x270] sm:$0xff]
    %v4706 = vld [vmem:[#allocation3 + $0x278] sm:$0xff]
    %v4707 = vld [vmem:[#allocation3 + $0x280] sm:$0xff]
    %v4708 = vld [vmem:[#allocation3 + $0x288] sm:$0xff]
    %v4709 = vld [vmem:[#allocation3 + $0x290] sm:$0xff]
    %v4710 = vld [vmem:[#allocation3 + $0x298] sm:$0xff]
    %v4711 = vld [vmem:[#allocation3 + $0x2a0] sm:$0xff]
    %v4712 = vld [vmem:[#allocation3 + $0x2a8] sm:$0xff]
    %v4713 = vld [vmem:[#allocation3 + $0x2b0] sm:$0xff]
    %v4714 = vld [vmem:[#allocation3 + $0x2b8] sm:$0xff]
    %v4715 = vld [vmem:[#allocation3 + $0x2c0] sm:$0xff]
    %v4716 = vld [vmem:[#allocation3 + $0x2c8] sm:$0xff]
    %v4717 = vld [vmem:[#allocation3 + $0x2d0] sm:$0xff]
    %v4718 = vld [vmem:[#allocation3 + $0x2d8] sm:$0xff]
    %v4719 = vld [vmem:[#allocation3 + $0x2e0] sm:$0xff]
    %v4720 = vld [vmem:[#allocation3 + $0x2e8] sm:$0xff]
    %v4721 = vld [vmem:[#allocation3 + $0x2f0] sm:$0xff]
    %v4722 = vld [vmem:[#allocation3 + $0x2f8] sm:$0xff]
    %v4723 = vld [vmem:[#allocation3 + $0x300] sm:$0xff]
    %v4724 = vld [vmem:[#allocation3 + $0x308] sm:$0xff]
    %v4725 = vld [vmem:[#allocation3 + $0x310] sm:$0xff]
    %v4726 = vld [vmem:[#allocation3 + $0x318] sm:$0xff]
    %v4727 = vld [vmem:[#allocation3 + $0x320] sm:$0xff]
    %v4728 = vld [vmem:[#allocation3 + $0x328] sm:$0xff]
    %v4729 = vld [vmem:[#allocation3 + $0x330] sm:$0xff]
    %v4730 = vld [vmem:[#allocation3 + $0x338] sm:$0xff]
    %v4731 = vld [vmem:[#allocation3 + $0x340] sm:$0xff]
    %v4732 = vld [vmem:[#allocation3 + $0x348] sm:$0xff]
    %v4733 = vld [vmem:[#allocation3 + $0x350] sm:$0xff]
    %v4734 = vld [vmem:[#allocation3 + $0x358] sm:$0xff]
    %v4735 = vld [vmem:[#allocation3 + $0x360] sm:$0xff]
    %v4736 = vld [vmem:[#allocation3 + $0x368] sm:$0xff]
    %v4737 = vld [vmem:[#allocation3 + $0x370] sm:$0xff]
    %v4738 = vld [vmem:[#allocation3 + $0x378] sm:$0xff]
    %v4739 = vld [vmem:[#allocation3 + $0x380] sm:$0xff]
    %v4740 = vld [vmem:[#allocation3 + $0x388] sm:$0xff]
    %v4741 = vld [vmem:[#allocation3 + $0x390] sm:$0xff]
    %v4742 = vld [vmem:[#allocation3 + $0x398] sm:$0xff]
    %v4743 = vld [vmem:[#allocation3 + $0x3a0] sm:$0xff]
    %v4744 = vld [vmem:[#allocation3 + $0x3a8] sm:$0xff]
    %v4745 = vld [vmem:[#allocation3 + $0x3b0] sm:$0xff]
    %v4746 = vld [vmem:[#allocation3 + $0x3b8] sm:$0xff]
    %v4747 = vld [vmem:[#allocation3 + $0x3c0] sm:$0xff]
    %v4748 = vld [vmem:[#allocation3 + $0x3c8] sm:$0xff]
    %v4749 = vld [vmem:[#allocation3 + $0x3d0] sm:$0xff]
    %v4750 = vld [vmem:[#allocation3 + $0x3d8] sm:$0xff]
    %v4751 = vld [vmem:[#allocation3 + $0x3e0] sm:$0xff]
    %v4752 = vld [vmem:[#allocation3 + $0x3e8] sm:$0xff]
    %v4753 = vld [vmem:[#allocation3 + $0x3f0] sm:$0xff]
    %v4754 = vld [vmem:[#allocation3 + $0x3f8] sm:$0xff]
    %v4755 = vld [vmem:[#allocation3 + $0x400] sm:$0xff]
    %v4756 = vld [vmem:[#allocation3 + $0x408] sm:$0xff]
    %v4757 = vld [vmem:[#allocation3 + $0x410] sm:$0xff]
    %v4758 = vld [vmem:[#allocation3 + $0x418] sm:$0xff]
    %v4759 = vld [vmem:[#allocation3 + $0x420] sm:$0xff]
    %v4760 = vld [vmem:[#allocation3 + $0x428] sm:$0xff]
    %v4761 = vld [vmem:[#allocation3 + $0x430] sm:$0xff]
    %v4762 = vld [vmem:[#allocation3 + $0x438] sm:$0xff]
    %v4763 = vld [vmem:[#allocation3 + $0x440] sm:$0xff]
    %v4764 = vld [vmem:[#allocation3 + $0x448] sm:$0xff]
    %v4765 = vld [vmem:[#allocation3 + $0x450] sm:$0xff]
    %v4766 = vld [vmem:[#allocation3 + $0x458] sm:$0xff]
    %v4767 = vld [vmem:[#allocation3 + $0x460] sm:$0xff]
    %v4768 = vld [vmem:[#allocation3 + $0x468] sm:$0xff]
    %v4769 = vld [vmem:[#allocation3 + $0x470] sm:$0xff]
    %v4770 = vld [vmem:[#allocation3 + $0x478] sm:$0xff]
    %v4771 = vld [vmem:[%s12] sm:$0xff]
    %4773 = vset.pattern.permute.xlu0 0
    %4774 = vperm.xlu0 %4773, %v4771
    %v4775 = vpop.permute.xlu0 %4774
    %v4778 = vsel %vm287, %v4626, 0
    %4780 = vmatprep.subr.mxu0 %v4688
    %4781 = vmatpush1.msra.mxu0 %v4687
    %4782 = vmatprep.subr.mxu0 %v4684
    %4783 = vmatpush1.msra.mxu0 %v4683
    %4784 = vmatprep.subr.mxu0 %v4680
    %4785 = vmatpush1.msra.mxu0 %v4679
    %4786 = vmatprep.subr.mxu0 %v4676
    %4787 = vmatpush1.msra.mxu0 %v4675
    %4788 = vmatprep.subr.mxu0 %v4672
    %4789 = vmatpush1.msra.mxu0 %v4671
    %4790 = vmatprep.subr.mxu0 %v4668
    %4791 = vmatpush1.msra.mxu0 %v4667
    %4792 = vmatprep.subr.mxu0 %v4664
    %4793 = vmatpush1.msra.mxu0 %v4663
    %4794 = vmatprep.subr.mxu0 %v4660
    %4795 = vmatpush1.msra.mxu0 %v4659
    %4796 = vmatprep.subr.mxu0 %v4656
    %4797 = vmatpush1.msra.mxu0 %v4655
    %4798 = vmatprep.subr.mxu0 %v4652
    %4799 = vmatpush1.msra.mxu0 %v4651
    %4800 = vmatprep.subr.mxu0 %v4648
    %4801 = vmatpush1.msra.mxu0 %v4647
    %4802 = vmatprep.subr.mxu0 %v4644
    %4803 = vmatpush1.msra.mxu0 %v4643
    %4804 = vmatprep.subr.mxu0 %v4640
    %4805 = vmatpush1.msra.mxu0 %v4639
    %4806 = vmatprep.subr.mxu0 %v4636
    %4807 = vmatpush1.msra.mxu0 %v4635
    %4808 = vmatprep.subr.mxu0 %v4632
    %4809 = vmatpush1.msra.mxu0 %v4631
    %4810 = vmatprep.subr.mxu0 %v4628
    %4811 = vmatpush1.msra.mxu0 %v4627
    %4812 = vmatprep.subr.mxu0 %v4752
    %4813 = vmatpush2.msra.mxu0 %v4751
    %4814 = vmatprep.subr.mxu0 %v4748
    %4815 = vmatpush2.msra.mxu0 %v4747
    %4816 = vmatprep.subr.mxu0 %v4744
    %4817 = vmatpush2.msra.mxu0 %v4743
    %4818 = vmatprep.subr.mxu0 %v4740
    %4819 = vmatpush2.msra.mxu0 %v4739
    %4820 = vmatprep.subr.mxu0 %v4736
    %4821 = vmatpush2.msra.mxu0 %v4735
    %4822 = vmatprep.subr.mxu0 %v4732
    %4823 = vmatpush2.msra.mxu0 %v4731
    %4824 = vmatprep.subr.mxu0 %v4728
    %4825 = vmatpush2.msra.mxu0 %v4727
    %4826 = vmatprep.subr.mxu0 %v4724
    %4827 = vmatpush2.msra.mxu0 %v4723
    %4828 = vmatprep.subr.mxu0 %v4720
    %4829 = vmatpush2.msra.mxu0 %v4719
    %4830 = vmatprep.subr.mxu0 %v4716
    %4831 = vmatpush2.msra.mxu0 %v4715
    %4832 = vmatprep.subr.mxu0 %v4712
    %4833 = vmatpush2.msra.mxu0 %v4711
    %4834 = vmatprep.subr.mxu0 %v4708
    %4835 = vmatpush2.msra.mxu0 %v4707
    %4836 = vmatprep.subr.mxu0 %v4704
    %4837 = vmatpush2.msra.mxu0 %v4703
    %4838 = vmatprep.subr.mxu0 %v4700
    %4839 = vmatpush2.msra.mxu0 %v4699
    %4840 = vmatprep.subr.mxu0 %v4696
    %4841 = vmatpush2.msra.mxu0 %v4695
    %4842 = vmatprep.subr.mxu0 %v4692
    %4843 = vmatpush2.msra.mxu0 %v4691
    %4844 = vmatprep.mubr.f32.mxu0 %v4625
    %4845 = vmatmul.mubr.f32.gmra.mxu0 %v4624
    %v4846 = vpop.f32.mrf.mxu0
    %v4847 = vadd.f32 %v4775, %v4846
    %v4848 = vpop.f32.mrf.mxu0
    %v4849 = vadd.f32 %v4775, %v4848
    %4850 = vdwg.mxu0
    %4851 = vmatprep.subr.mxu0 0.0
    %4852 = vmatpush1.msra.mxu0 0.0
    %4853 = vmatprep.subr.mxu0 0.0
    %4854 = vmatpush1.msra.mxu0 0.0
    %4855 = vmatprep.subr.mxu0 0.0
    %4856 = vmatpush1.msra.mxu0 0.0
    %4857 = vmatprep.subr.mxu0 0.0
    %4858 = vmatpush1.msra.mxu0 0.0
    %4859 = vmatprep.subr.mxu0 0.0
    %4860 = vmatpush1.msra.mxu0 0.0
    %4861 = vmatprep.subr.mxu0 0.0
    %4862 = vmatpush1.msra.mxu0 0.0
    %4863 = vmatprep.subr.mxu0 0.0
    %4864 = vmatpush1.msra.mxu0 0.0
    %4865 = vmatprep.subr.mxu0 0.0
    %4866 = vmatpush1.msra.mxu0 0.0
    %4867 = vmatprep.subr.mxu0 0.0
    %4868 = vmatpush1.msra.mxu0 0.0
    %4869 = vmatprep.subr.mxu0 0.0
    %4870 = vmatpush1.msra.mxu0 0.0
    %4871 = vmatprep.subr.mxu0 0.0
    %4872 = vmatpush1.msra.mxu0 0.0
    %4873 = vmatprep.subr.mxu0 0.0
    %4874 = vmatpush1.msra.mxu0 0.0
    %4875 = vmatprep.subr.mxu0 %v4768
    %4876 = vmatpush1.msra.mxu0 %v4767
    %4877 = vmatprep.subr.mxu0 %v4764
    %4878 = vmatpush1.msra.mxu0 %v4763
    %4879 = vmatprep.subr.mxu0 %v4760
    %4880 = vmatpush1.msra.mxu0 %v4759
    %4881 = vmatprep.subr.mxu0 %v4756
    %4882 = vmatpush1.msra.mxu0 %v4755
    %4883 = vmatprep.subr.mxu0 0.0
    %4884 = vmatpush2.msra.mxu0 0.0
    %4885 = vmatprep.subr.mxu0 0.0
    %4886 = vmatpush2.msra.mxu0 0.0
    %4887 = vmatprep.subr.mxu0 0.0
    %4888 = vmatpush2.msra.mxu0 0.0
    %4889 = vmatprep.subr.mxu0 0.0
    %4890 = vmatpush2.msra.mxu0 0.0
    %4891 = vmatprep.subr.mxu0 0.0
    %4892 = vmatpush2.msra.mxu0 0.0
    %4893 = vmatprep.subr.mxu0 0.0
    %4894 = vmatpush2.msra.mxu0 0.0
    %4895 = vmatprep.subr.mxu0 0.0
    %4896 = vmatpush2.msra.mxu0 0.0
    %4897 = vmatprep.subr.mxu0 0.0
    %4898 = vmatpush2.msra.mxu0 0.0
    %4899 = vmatprep.subr.mxu0 0.0
    %4900 = vmatpush2.msra.mxu0 0.0
    %4901 = vmatprep.subr.mxu0 0.0
    %4902 = vmatpush2.msra.mxu0 0.0
    %4903 = vmatprep.subr.mxu0 0.0
    %4904 = vmatpush2.msra.mxu0 0.0
    %4905 = vmatprep.subr.mxu0 0.0
    %4906 = vmatpush2.msra.mxu0 0.0
    %4907 = vmatprep.subr.mxu0 0.0
    %4908 = vmatpush2.msra.mxu0 0.0
    %4909 = vmatprep.subr.mxu0 0.0
    %4910 = vmatpush2.msra.mxu0 0.0
    %4911 = vmatprep.subr.mxu0 0.0
    %4912 = vmatpush2.msra.mxu0 0.0
    %4913 = vmatprep.subr.mxu0 0.0
    %4914 = vmatpush2.msra.mxu0 0.0
    %4915 = vmatprep.mubr.f32.mxu0 0.0
    %4916 = vmatmul.mubr.f32.gmra.mxu0 %v4778
    %v4917 = vpop.f32.mrf.mxu0
    %v4918 = vadd.f32 %v4847, %v4917
    %v4919 = vpop.f32.mrf.mxu0
    %v4920 = vadd.f32 %v4849, %v4919
    %4921 = vdwg.mxu0
    %4922 = vmatprep.subr.mxu0 %v4690
    %4923 = vmatpush1.msra.mxu0 %v4689
    %4924 = vmatprep.subr.mxu0 %v4686
    %4925 = vmatpush1.msra.mxu0 %v4685
    %4926 = vmatprep.subr.mxu0 %v4682
    %4927 = vmatpush1.msra.mxu0 %v4681
    %4928 = vmatprep.subr.mxu0 %v4678
    %4929 = vmatpush1.msra.mxu0 %v4677
    %4930 = vmatprep.subr.mxu0 %v4674
    %4931 = vmatpush1.msra.mxu0 %v4673
    %4932 = vmatprep.subr.mxu0 %v4670
    %4933 = vmatpush1.msra.mxu0 %v4669
    %4934 = vmatprep.subr.mxu0 %v4666
    %4935 = vmatpush1.msra.mxu0 %v4665
    %4936 = vmatprep.subr.mxu0 %v4662
    %4937 = vmatpush1.msra.mxu0 %v4661
    %4938 = vmatprep.subr.mxu0 %v4658
    %4939 = vmatpush1.msra.mxu0 %v4657
    %4940 = vmatprep.subr.mxu0 %v4654
    %4941 = vmatpush1.msra.mxu0 %v4653
    %4942 = vmatprep.subr.mxu0 %v4650
    %4943 = vmatpush1.msra.mxu0 %v4649
    %4944 = vmatprep.subr.mxu0 %v4646
    %4945 = vmatpush1.msra.mxu0 %v4645
    %4946 = vmatprep.subr.mxu0 %v4642
    %4947 = vmatpush1.msra.mxu0 %v4641
    %4948 = vmatprep.subr.mxu0 %v4638
    %4949 = vmatpush1.msra.mxu0 %v4637
    %4950 = vmatprep.subr.mxu0 %v4634
    %4951 = vmatpush1.msra.mxu0 %v4633
    %4952 = vmatprep.subr.mxu0 %v4630
    %4953 = vmatpush1.msra.mxu0 %v4629
    %4954 = vmatprep.subr.mxu0 %v4754
    %4955 = vmatpush2.msra.mxu0 %v4753
    %4956 = vmatprep.subr.mxu0 %v4750
    %4957 = vmatpush2.msra.mxu0 %v4749
    %4958 = vmatprep.subr.mxu0 %v4746
    %4959 = vmatpush2.msra.mxu0 %v4745
    %4960 = vmatprep.subr.mxu0 %v4742
    %4961 = vmatpush2.msra.mxu0 %v4741
    %4962 = vmatprep.subr.mxu0 %v4738
    %4963 = vmatpush2.msra.mxu0 %v4737
    %4964 = vmatprep.subr.mxu0 %v4734
    %4965 = vmatpush2.msra.mxu0 %v4733
    %4966 = vmatprep.subr.mxu0 %v4730
    %4967 = vmatpush2.msra.mxu0 %v4729
    %4968 = vmatprep.subr.mxu0 %v4726
    %4969 = vmatpush2.msra.mxu0 %v4725
    %4970 = vmatprep.subr.mxu0 %v4722
    %4971 = vmatpush2.msra.mxu0 %v4721
    %4972 = vmatprep.subr.mxu0 %v4718
    %4973 = vmatpush2.msra.mxu0 %v4717
    %4974 = vmatprep.subr.mxu0 %v4714
    %4975 = vmatpush2.msra.mxu0 %v4713
    %4976 = vmatprep.subr.mxu0 %v4710
    %4977 = vmatpush2.msra.mxu0 %v4709
    %4978 = vmatprep.subr.mxu0 %v4706
    %4979 = vmatpush2.msra.mxu0 %v4705
    %4980 = vmatprep.subr.mxu0 %v4702
    %4981 = vmatpush2.msra.mxu0 %v4701
    %4982 = vmatprep.subr.mxu0 %v4698
    %4983 = vmatpush2.msra.mxu0 %v4697
    %4984 = vmatprep.subr.mxu0 %v4694
    %4985 = vmatpush2.msra.mxu0 %v4693
    %4986 = vmatprep.mubr.f32.mxu0 %v4625
    %4987 = vmatmul.mubr.f32.gmra.mxu0 %v4624
    %v4988 = vpop.f32.mrf.mxu0
    %v4989 = vadd.f32 %v4775, %v4988
    %v4990 = vpop.f32.mrf.mxu0
    %v4991 = vadd.f32 %v4775, %v4990
    %4992 = vdwg.mxu0
    %4993 = vmatprep.subr.mxu0 0.0
    %4994 = vmatpush1.msra.mxu0 0.0
    %4995 = vmatprep.subr.mxu0 0.0
    %4996 = vmatpush1.msra.mxu0 0.0
    %4997 = vmatprep.subr.mxu0 0.0
    %4998 = vmatpush1.msra.mxu0 0.0
    %4999 = vmatprep.subr.mxu0 0.0
    %5000 = vmatpush1.msra.mxu0 0.0
    %5001 = vmatprep.subr.mxu0 0.0
    %5002 = vmatpush1.msra.mxu0 0.0
    %5003 = vmatprep.subr.mxu0 0.0
    %5004 = vmatpush1.msra.mxu0 0.0
    %5005 = vmatprep.subr.mxu0 0.0
    %5006 = vmatpush1.msra.mxu0 0.0
    %5007 = vmatprep.subr.mxu0 0.0
    %5008 = vmatpush1.msra.mxu0 0.0
    %5009 = vmatprep.subr.mxu0 0.0
    %5010 = vmatpush1.msra.mxu0 0.0
    %5011 = vmatprep.subr.mxu0 0.0
    %5012 = vmatpush1.msra.mxu0 0.0
    %5013 = vmatprep.subr.mxu0 0.0
    %5014 = vmatpush1.msra.mxu0 0.0
    %5015 = vmatprep.subr.mxu0 0.0
    %5016 = vmatpush1.msra.mxu0 0.0
    %5017 = vmatprep.subr.mxu0 %v4770
    %5018 = vmatpush1.msra.mxu0 %v4769
    %5019 = vmatprep.subr.mxu0 %v4766
    %5020 = vmatpush1.msra.mxu0 %v4765
    %5021 = vmatprep.subr.mxu0 %v4762
    %5022 = vmatpush1.msra.mxu0 %v4761
    %5023 = vmatprep.subr.mxu0 %v4758
    %5024 = vmatpush1.msra.mxu0 %v4757
    %5025 = vmatprep.subr.mxu0 0.0
    %5026 = vmatpush2.msra.mxu0 0.0
    %5027 = vmatprep.subr.mxu0 0.0
    %5028 = vmatpush2.msra.mxu0 0.0
    %5029 = vmatprep.subr.mxu0 0.0
    %5030 = vmatpush2.msra.mxu0 0.0
    %5031 = vmatprep.subr.mxu0 0.0
    %5032 = vmatpush2.msra.mxu0 0.0
    %5033 = vmatprep.subr.mxu0 0.0
    %5034 = vmatpush2.msra.mxu0 0.0
    %5035 = vmatprep.subr.mxu0 0.0
    %5036 = vmatpush2.msra.mxu0 0.0
    %5037 = vmatprep.subr.mxu0 0.0
    %5038 = vmatpush2.msra.mxu0 0.0
    %5039 = vmatprep.subr.mxu0 0.0
    %5040 = vmatpush2.msra.mxu0 0.0
    %5041 = vmatprep.subr.mxu0 0.0
    %5042 = vmatpush2.msra.mxu0 0.0
    %5043 = vmatprep.subr.mxu0 0.0
    %5044 = vmatpush2.msra.mxu0 0.0
    %5045 = vmatprep.subr.mxu0 0.0
    %5046 = vmatpush2.msra.mxu0 0.0
    %5047 = vmatprep.subr.mxu0 0.0
    %5048 = vmatpush2.msra.mxu0 0.0
    %5049 = vmatprep.subr.mxu0 0.0
    %5050 = vmatpush2.msra.mxu0 0.0
    %5051 = vmatprep.subr.mxu0 0.0
    %5052 = vmatpush2.msra.mxu0 0.0
    %5053 = vmatprep.subr.mxu0 0.0
    %5054 = vmatpush2.msra.mxu0 0.0
    %5055 = vmatprep.subr.mxu0 0.0
    %5056 = vmatpush2.msra.mxu0 0.0
    %5057 = vmatprep.mubr.f32.mxu0 0.0
    %5058 = vmatmul.mubr.f32.gmra.mxu0 %v4778
    %v5059 = vpop.f32.mrf.mxu0
    %v5060 = vadd.f32 %v4989, %v5059
    %v5061 = vpop.f32.mrf.mxu0
    %v5062 = vadd.f32 %v4991, %v5061
    %5063 = vdwg.mxu0
    %5064 = vst [vmem:[#allocation28] sm:$0xff] %v4918
    %5065 = vst [vmem:[#allocation28 + $0x8] sm:$0xff] %v4920
    %5066 = vst [vmem:[#allocation28 + $0x10] sm:$0xff] %v5060
    %5067 = vst [vmem:[#allocation28 + $0x18] sm:$0xff] %v5062
    // Predicated region
    $region154: #{tpu_custom_call.1} parent=1 // pred_check
      _
    $region155: #{tpu_custom_call.1} parent=1 // pred_check_branch
      %5069 = sbr.rel (0) target = $region157
    $region156: #{tpu_custom_call.1} parent=1 // pred_region
      %s5071 = ssub.s32 512, 512
      %5072 = vsyncadd [#allocation6], %s5071
      %s5074 = sshll.u32 [#allocation28], 4
      %s5075 = int_to_ptr.vmem [resolvable:$true] %s5074
      %5077 = dma.vmem_to_hbm [thread:$0]  %s5075, 512, %s23, [#allocation6]
    $region157: #{tpu_custom_call.1} parent=1 // pred_fallthru
      _
    // Predicated region
    $region158: #{tpu_custom_call.1} parent=1 // pred_check
      _
    $region159: #{tpu_custom_call.1} parent=1 // pred_check_branch
      %5079 = sbr.rel (0) target = $region161
    $region160: #{tpu_custom_call.1} parent=1 // pred_region
      %5080 = dma.done [#allocation6], 512
    $region161: #{tpu_custom_call.1} parent=1 // pred_fallthru
      _
    %5081 = vsyncpa [#allocation5], 1
    %5082 = vsyncpa [#allocation8], 1
    %5083 = vsyncpa [#allocation11], 1
    %5084 = vsyncpa [#allocation14], 1
    %5085 = vsyncpa [#allocation17], 1
    %5086 = vsyncpa [#allocation20], 1
    %5087 = vsyncpa [#allocation23], 1
    %5088 = vsyncpa [#allocation26], 1
    %5089 = vsyncpa [#allocation6], 1

</llo_original>
